<compile_context>
chip_gen: v6e
topology: v6e:2x2x1
jax: 0.10.0
libtpu: 0.0.40
codegen_flags: <defaults>
</compile_context>

<pallas_src>
import numpy as np
import jax
import jax.numpy as jnp
from jax import lax
from jax.experimental import pallas as pl
from jax.experimental.pallas import tpu as pltpu

NSUB = 32        # fixed RK4 substeps per output interval
LOG2_NSUB = 5    # NSUB == 2 ** LOG2_NSUB


def _make_eye(N):
    rows = lax.broadcasted_iota(jnp.int32, (N, N), 0)
    cols = lax.broadcasted_iota(jnp.int32, (N, N), 1)
    return (rows == cols).astype(jnp.float32)


def _compose_substeps(P, eye):
    """A = P^NSUB, S = I + P + ... + P^(NSUB-1), via fused repeated squaring."""
    f32 = jnp.float32
    N = P.shape[0]
    S = eye
    A = P
    for _ in range(LOG2_NSUB):
        # one (2N, N) x (N, N) MXU push produces both S@A and A@A
        prod = jnp.dot(jnp.concatenate([S, A], axis=0), A, preferred_element_type=f32)
        S = S + prod[:N]
        A = prod[N:]
    return A, S


def _ssn_uniform_kernel(t_ref, m_ref, c_ref, r0_ref, out_ref):
    # Fast path: constant dt across all intervals -> P/A/S/cq@S are loop-invariant.
    # t_ref  : SMEM (L,)        output timestamps (uniformly spaced)
    # m_ref  : VMEM (N, N)      M = W^T * f_prime - I
    # c_ref  : VMEM (Bp, N)     c = f_prime * h per (padded) batch row
    # r0_ref : VMEM (Bp, N)     initial rates
    # out_ref: VMEM (L, Bp, N)  rates at each timestamp
    N = m_ref.shape[0]
    L = out_ref.shape[0]
    f32 = jnp.float32

    M = m_ref[...]
    c = c_ref[...]
    r0 = r0_ref[...]
    out_ref[0] = r0

    eye = _make_eye(N)

    # dt-independent powers of M and c@M^k (3 dense + 3 skinny matmuls, hoisted)
    M2 = jnp.dot(M, M, preferred_element_type=f32)
    M3 = jnp.dot(M2, M, preferred_element_type=f32)
    M4 = jnp.dot(M2, M2, preferred_element_type=f32)
    cM = jnp.dot(c, M, preferred_element_type=f32)
    cM2 = jnp.dot(c, M2, preferred_element_type=f32)
    cM3 = jnp.dot(c, M3, preferred_element_type=f32)

    # mean spacing == per-interval spacing when t is uniform
    dt = (t_ref[L - 1] - t_ref[0]) / ((L - 1) * NSUB)
    dt2 = dt * dt
    dt3 = dt2 * dt
    dt4 = dt2 * dt2

    # one-substep RK4 propagator; cq = c @ Q built without materializing Q
    P = eye + dt * M + (dt2 / 2.0) * M2 + (dt3 / 6.0) * M3 + (dt4 / 24.0) * M4
    cq = dt * c + (dt2 / 2.0) * cM + (dt3 / 6.0) * cM2 + (dt4 / 24.0) * cM3

    A, S = _compose_substeps(P, eye)
    cqS = jnp.dot(cq, S, preferred_element_type=f32)   # loop-invariant affine term (Bp, N)

    def interval_body(i, r):
        r_new = jnp.dot(r, A, preferred_element_type=f32) + cqS
        out_ref[i + 1] = r_new
        return r_new

    lax.fori_loop(0, L - 1, interval_body, r0, unroll=(L <= 33))


def _ssn_general_kernel(t_ref, m_ref, c_ref, r0_ref, out_ref):
    # General path: arbitrary timestamps; per-interval propagator rebuild.
    N = m_ref.shape[0]
    L = out_ref.shape[0]
    f32 = jnp.float32

    M = m_ref[...]
    c = c_ref[...]
    r0 = r0_ref[...]
    out_ref[0] = r0

    eye = _make_eye(N)

    # dt-independent powers of M and c@M^k, hoisted out of the interval loop
    M2 = jnp.dot(M, M, preferred_element_type=f32)
    M3 = jnp.dot(M2, M, preferred_element_type=f32)
    M4 = jnp.dot(M2, M2, preferred_element_type=f32)
    cM = jnp.dot(c, M, preferred_element_type=f32)
    cM2 = jnp.dot(c, M2, preferred_element_type=f32)
    cM3 = jnp.dot(c, M3, preferred_element_type=f32)

    def interval_body(i, r):
        dt = (t_ref[i + 1] - t_ref[i]) / NSUB
        dt2 = dt * dt
        dt3 = dt2 * dt
        dt4 = dt2 * dt2

        P = eye + dt * M + (dt2 / 2.0) * M2 + (dt3 / 6.0) * M3 + (dt4 / 24.0) * M4
        cq = dt * c + (dt2 / 2.0) * cM + (dt3 / 6.0) * cM2 + (dt4 / 24.0) * cM3

        A, S = _compose_substeps(P, eye)

        # fused K=2N contraction:  [cq | r] @ [S ; A]  ==  cq @ S + r @ A
        r_new = jnp.dot(jnp.concatenate([cq, r], axis=1),
                        jnp.concatenate([S, A], axis=0),
                        preferred_element_type=f32)
        out_ref[i + 1] = r_new
        return r_new

    # consecutive intervals' dense chains are independent of the carried r, so a modest
    # unroll lets the scheduler interleave them
    unroll = True if L <= 5 else 2
    lax.fori_loop(0, L - 1, interval_body, r0, unroll=unroll)


class LinearizedMultiCellSSNModelPallas:
    """JAX/Pallas equivalent of LinearizedMultiCellSSNModel (forward pass only)."""

    def __init__(self, W, r_star, w_dims):
        W = jnp.asarray(W, jnp.float32)
        assert W.ndim % 2 == 0 and W.ndim >= 4
        self.ndim = W.ndim // 2
        self.shape = W.shape[: self.ndim]
        self.F_shape = self.shape[:1]            # F_dim = 1 (MultiCellModel)
        self.B_shape = self.shape[1:]
        self.N = int(np.prod(self.shape))
        self.W = W.reshape(self.N, self.N)
        self.w_dims = list(w_dims)               # topology metadata, unused in forward numerics
        r_star = jnp.asarray(r_star, jnp.float32)
        assert r_star.shape == self.F_shape
        assert bool(jnp.all(r_star >= 0))
        self._r_star = r_star
        # f_prime = 2 * sqrt(r_star) broadcast across the base space, flattened to (1, N)
        r_star_full = jnp.einsum('i,...->i...', r_star, jnp.ones(self.B_shape, jnp.float32))
        self.f_prime_flat = (2.0 * jnp.sqrt(r_star_full)).reshape(1, self.N)
        # fold f_prime and the "-r" term into a single matrix:
        #   drdt(r_row) = r_row @ M + f_prime * h,   M = W^T * f_prime[None,:] - I
        self.M = self.W.T * self.f_prime_flat - jnp.eye(self.N, dtype=jnp.float32)

    @staticmethod
    def _is_uniform(t, L):
        """Host-side check that diff(t) is constant; False if t is traced."""
        if L < 2:
            return False
        if isinstance(t, jax.core.Tracer):
            return False
        try:
            t_np = np.asarray(jax.device_get(t), dtype=np.float64)
        except Exception:
            return False
        diffs = np.diff(t_np)
        return bool(np.allclose(diffs, diffs[0], rtol=1e-6, atol=1e-12))

    def forward(self, delta_h, delta_r0, t):
        delta_h = jnp.asarray(delta_h, jnp.float32)
        delta_r0 = jnp.asarray(delta_r0, jnp.float32)
        t = jnp.asarray(t, jnp.float32)
        assert t.ndim == 1, "this implementation requires a 1-D tensor of timestamps"
        assert delta_h.shape[-self.ndim:] == self.shape

        # broadcast r0 against h (as torch.broadcast_tensors does) and flatten batch dims
        r0_b, h_b = jnp.broadcast_arrays(delta_r0, delta_h)
        batch_shape = r0_b.shape[: -self.ndim]
        B = int(np.prod(batch_shape)) if batch_shape else 1
        h_flat = h_b.reshape(B, self.N)
        r0_flat = r0_b.reshape(B, self.N)
        L = int(t.shape[0])

        # fold f_prime into the constant input; pad batch to a sublane multiple (8)
        c_flat = self.f_prime_flat * h_flat                       # (B, N)
        Bp = max(8, ((B + 7) // 8) * 8)
        pad = Bp - B
        c_p = jnp.pad(c_flat, ((0, pad), (0, 0)))
        r0_p = jnp.pad(r0_flat, ((0, pad), (0, 0)))

        uniform_dt = self._is_uniform(t, L)
        kernel = _ssn_uniform_kernel if uniform_dt else _ssn_general_kernel

        # advisory cost estimate (the kernel looks tiny to XLA but is matmul-heavy)
        if uniform_dt:
            dense_mms = 3 + 2 * LOG2_NSUB
            skinny_mms = 4 + (L - 1)
        else:
            dense_mms = 3 + (L - 1) * 2 * LOG2_NSUB
            skinny_mms = 3 + (L - 1) * 2
        flops = 2 * (self.N ** 3) * dense_mms + 2 * Bp * (self.N ** 2) * skinny_mms
        bytes_accessed = 4 * (self.N * self.N + (L + 2) * Bp * self.N + L)
        cost = pl.CostEstimate(flops=flops, transcendentals=0,
                               bytes_accessed=bytes_accessed)

        # scoped-VMEM limit sized to the live matrix set (M, M2..M4, eye, P, A, S, stacked
        # products, output slab) plus headroom; default scoped limit (16/32 MiB) is hit
        # around N ~ 600-900 otherwise.  NOTE: v7x has only 64 MiB physical VMEM per TC.
        working = 4 * (14 * self.N * self.N + (L + 8) * Bp * self.N) + (4 << 20)
        vmem_limit = int(min(max(working, 32 << 20), 112 << 20))

        out = pl.pallas_call(
            kernel,
            out_shape=jax.ShapeDtypeStruct((L, Bp, self.N), jnp.float32),
            in_specs=[
                pl.BlockSpec(memory_space=pltpu.MemorySpace.SMEM),  # t
                pl.BlockSpec(memory_space=pltpu.MemorySpace.VMEM),  # M
                pl.BlockSpec(memory_space=pltpu.MemorySpace.VMEM),  # c = f_prime * h
                pl.BlockSpec(memory_space=pltpu.MemorySpace.VMEM),  # r0
            ],
            out_specs=pl.BlockSpec(memory_space=pltpu.MemorySpace.VMEM),
            compiler_params=pltpu.CompilerParams(vmem_limit_bytes=vmem_limit),
            cost_estimate=cost,
        )(t, self.M, c_p, r0_p)

        out = out[:, :B]  # strip batch padding before reshaping
        delta_r = out.reshape((L,) + batch_shape + self.shape)
        return delta_r, t

    # pure-JAX reference: the same fixed-step RK4 evaluated substep-by-substep
    # (independent of the in-kernel propagator restructuring) for verification
    def forward_ref(self, delta_h, delta_r0, t):
        delta_h = jnp.asarray(delta_h, jnp.float32)
        delta_r0 = jnp.asarray(delta_r0, jnp.float32)
        t = jnp.asarray(t, jnp.float32)
        r0_b, h_b = jnp.broadcast_arrays(delta_r0, delta_h)
        batch_shape = r0_b.shape[: -self.ndim]
        h = h_b.reshape(batch_shape + (self.N,))
        r0 = r0_b.reshape(batch_shape + (self.N,))
        fp = self.f_prime_flat.reshape(self.N)
        W = self.W

        def drdt(r):
            return fp * (jnp.einsum('ij,...j->...i', W, r) + h) - r

        def interval(r, ti_tf):
            ti, tf = ti_tf
            dt = (tf - ti) / NSUB

            def substep(_, r):
                k1 = drdt(r)
                k2 = drdt(r + 0.5 * dt * k1)
                k3 = drdt(r + 0.5 * dt * k2)
                k4 = drdt(r + dt * k3)
                return r + (dt / 6.0) * (k1 + 2.0 * k2 + 2.0 * k3 + k4)

            r = lax.fori_loop(0, NSUB, substep, r)
            return r, r

        _, rs = lax.scan(interval, r0, (t[:-1], t[1:]))
        out = jnp.concatenate([r0[None], rs], axis=0)
        return out.reshape((t.shape[0],) + batch_shape + self.shape), t


if __name__ == "__main__":
    key = jax.random.PRNGKey(0)
    k_w, k_h = jax.random.split(key)

    # model geometry: F=2 cell types, base space 8x8 -> N = 2*8*8 = 128
    F, B1, B2 = 2, 8, 8
    N = F * B1 * B2
    W = 0.05 * jax.random.normal(k_w, (F, B1, B2, F, B1, B2), dtype=jnp.float32) / np.sqrt(N)
    r_star = jnp.array([1.0, 0.5], dtype=jnp.float32)
    w_dims = [0, 1]

    model = LinearizedMultiCellSSNModelPallas(W, r_star, w_dims)

    # inputs: batch of 4 constant input perturbations, zero initial perturbation, 8 timestamps
    delta_h = 0.1 * jax.random.normal(k_h, (4, F, B1, B2), dtype=jnp.float32)
    delta_r0 = jnp.float32(0.0)

    # --- uniform-timestep fast path (linspace) ---
    t_uni = jnp.linspace(0.0, 1.0, 8, dtype=jnp.float32)
    delta_r, t_out = model.forward(delta_h, delta_r0, t_uni)
    delta_r = jax.block_until_ready(delta_r)
    assert delta_r.shape == (8, 4, F, B1, B2), delta_r.shape
    assert bool(jnp.all(jnp.isfinite(delta_r)))
    ref, _ = model.forward_ref(delta_h, delta_r0, t_uni)
    # tolerance covers f32 re-association between the squared-propagator composition
    # (kernel) and the sequential per-substep RK4 (reference); same algorithm.
    np.testing.assert_allclose(np.asarray(delta_r), np.asarray(ref), rtol=2e-4, atol=1e-5)

    # --- general (non-uniform dt) path ---
    t_gen = jnp.array([0.0, 0.15, 0.35, 0.6, 1.0], dtype=jnp.float32)
    delta_r2, _ = model.forward(delta_h, delta_r0, t_gen)
    delta_r2 = jax.block_until_ready(delta_r2)
    assert delta_r2.shape == (5, 4, F, B1, B2), delta_r2.shape
    ref2, _ = model.forward_ref(delta_h, delta_r0, t_gen)
    np.testing.assert_allclose(np.asarray(delta_r2), np.asarray(ref2), rtol=2e-4, atol=1e-5)

    print("KERNEL_OK")
</pallas_src>

<mosaic_0001>
module attributes {stable_mosaic.version = 11 : i64} {
  func.func @_ssn_uniform_kernel(%arg0: memref<8xf32, #tpu.memory_space<smem>>, %arg1: memref<128x128xf32, #tpu.memory_space<vmem>>, %arg2: memref<8x128xf32, #tpu.memory_space<vmem>>, %arg3: memref<8x128xf32, #tpu.memory_space<vmem>>, %arg4: memref<8x8x128xf32, #tpu.memory_space<vmem>>) attributes {dimension_semantics = [], scalar_prefetch = 0 : i64, scratch_operands = 0 : i64, tpu.core_type = #tpu.core_type<tc>} {
    %c0 = arith.constant 0 : index
    %c0_0 = arith.constant 0 : index
    %0 = vector.load %arg1[%c0, %c0_0] : memref<128x128xf32, #tpu.memory_space<vmem>>, vector<128x128xf32>
    %c0_1 = arith.constant 0 : index
    %c0_2 = arith.constant 0 : index
    %1 = vector.load %arg2[%c0_1, %c0_2] : memref<8x128xf32, #tpu.memory_space<vmem>>, vector<8x128xf32>
    %c0_3 = arith.constant 0 : index
    %c0_4 = arith.constant 0 : index
    %2 = vector.load %arg3[%c0_3, %c0_4] : memref<8x128xf32, #tpu.memory_space<vmem>>, vector<8x128xf32>
    %c0_5 = arith.constant 0 : index
    %c0_6 = arith.constant 0 : index
    %c0_7 = arith.constant 0 : index
    %3 = vector.load %arg4[%c0_5, %c0_6, %c0_7] : memref<8x8x128xf32, #tpu.memory_space<vmem>>, vector<1x8x128xf32>
    %4 = vector.shape_cast %3 : vector<1x8x128xf32> to vector<8x128xf32>
    %5 = vector.shape_cast %2 : vector<8x128xf32> to vector<1x8x128xf32>
    tpu.vector_store %arg4[%c0_5, %c0_6, %c0_7], %5 {strides = array<i32>} : memref<8x8x128xf32, #tpu.memory_space<vmem>>, vector<1x8x128xf32>,
    %6 = tpu.iota {dimensions = array<i32: 0>} : vector<128x128xi32>
    %7 = tpu.iota {dimensions = array<i32: 1>} : vector<128x128xi32>
    %8 = arith.cmpi eq, %6, %7 : vector<128x128xi32>
    %9 = arith.extui %8 : vector<128x128xi1> to vector<128x128xi32>
    %10 = arith.sitofp %9 : vector<128x128xi32> to vector<128x128xf32>
    %cst = arith.constant dense<0.000000e+00> : vector<128x128xf32>
    %11 = tpu.matmul %0, %0, %cst {dimension_numbers = #tpu.dot_dimension_numbers<[1], [0], [0], [1], [0, 0, 1, 1], [], []>} : vector<128x128xf32>, vector<128x128xf32>, vector<128x128xf32> -> vector<128x128xf32>
    %cst_8 = arith.constant dense<0.000000e+00> : vector<128x128xf32>
    %12 = tpu.matmul %11, %0, %cst_8 {dimension_numbers = #tpu.dot_dimension_numbers<[1], [0], [0], [1], [0, 0, 1, 1], [], []>} : vector<128x128xf32>, vector<128x128xf32>, vector<128x128xf32> -> vector<128x128xf32>
    %cst_9 = arith.constant dense<0.000000e+00> : vector<128x128xf32>
    %13 = tpu.matmul %11, %11, %cst_9 {dimension_numbers = #tpu.dot_dimension_numbers<[1], [0], [0], [1], [0, 0, 1, 1], [], []>} : vector<128x128xf32>, vector<128x128xf32>, vector<128x128xf32> -> vector<128x128xf32>
    %cst_10 = arith.constant dense<0.000000e+00> : vector<8x128xf32>
    %14 = tpu.matmul %1, %0, %cst_10 {dimension_numbers = #tpu.dot_dimension_numbers<[1], [0], [0], [1], [0, 0, 1, 1], [], []>} : vector<8x128xf32>, vector<128x128xf32>, vector<8x128xf32> -> vector<8x128xf32>
    %cst_11 = arith.constant dense<0.000000e+00> : vector<8x128xf32>
    %15 = tpu.matmul %1, %11, %cst_11 {dimension_numbers = #tpu.dot_dimension_numbers<[1], [0], [0], [1], [0, 0, 1, 1], [], []>} : vector<8x128xf32>, vector<128x128xf32>, vector<8x128xf32> -> vector<8x128xf32>
    %cst_12 = arith.constant dense<0.000000e+00> : vector<8x128xf32>
    %16 = tpu.matmul %1, %12, %cst_12 {dimension_numbers = #tpu.dot_dimension_numbers<[1], [0], [0], [1], [0, 0, 1, 1], [], []>} : vector<8x128xf32>, vector<128x128xf32>, vector<8x128xf32> -> vector<8x128xf32>
    %c7 = arith.constant 7 : index
    %17 = memref.load %arg0[%c7] : memref<8xf32, #tpu.memory_space<smem>>
    %c0_13 = arith.constant 0 : index
    %18 = memref.load %arg0[%c0_13] : memref<8xf32, #tpu.memory_space<smem>>
    %19 = arith.subf %17, %18 : f32
    %cst_14 = arith.constant 2.240000e+02 : f32
    %20 = arith.divf %19, %cst_14 : f32
    %21 = arith.mulf %20, %20 : f32
    %22 = arith.mulf %21, %20 : f32
    %23 = arith.mulf %21, %21 : f32
    %24 = vector.broadcast %20 : f32 to vector<128x128xf32>
    %25 = arith.mulf %24, %0 : vector<128x128xf32>
    %26 = arith.addf %10, %25 : vector<128x128xf32>
    %cst_15 = arith.constant 2.000000e+00 : f32
    %27 = arith.divf %21, %cst_15 : f32
    %28 = vector.broadcast %27 : f32 to vector<128x128xf32>
    %29 = arith.mulf %28, %11 : vector<128x128xf32>
    %30 = arith.addf %26, %29 : vector<128x128xf32>
    %cst_16 = arith.constant 6.000000e+00 : f32
    %31 = arith.divf %22, %cst_16 : f32
    %32 = vector.broadcast %31 : f32 to vector<128x128xf32>
    %33 = arith.mulf %32, %12 : vector<128x128xf32>
    %34 = arith.addf %30, %33 : vector<128x128xf32>
    %cst_17 = arith.constant 2.400000e+01 : f32
    %35 = arith.divf %23, %cst_17 : f32
    %36 = vector.broadcast %35 : f32 to vector<128x128xf32>
    %37 = arith.mulf %36, %13 : vector<128x128xf32>
    %38 = arith.addf %34, %37 : vector<128x128xf32>
    %39 = vector.broadcast %20 : f32 to vector<8x128xf32>
    %40 = arith.mulf %39, %1 : vector<8x128xf32>
    %cst_18 = arith.constant 2.000000e+00 : f32
    %41 = arith.divf %21, %cst_18 : f32
    %42 = vector.broadcast %41 : f32 to vector<8x128xf32>
    %43 = arith.mulf %42, %14 : vector<8x128xf32>
    %44 = arith.addf %40, %43 : vector<8x128xf32>
    %cst_19 = arith.constant 6.000000e+00 : f32
    %45 = arith.divf %22, %cst_19 : f32
    %46 = vector.broadcast %45 : f32 to vector<8x128xf32>
    %47 = arith.mulf %46, %15 : vector<8x128xf32>
    %48 = arith.addf %44, %47 : vector<8x128xf32>
    %cst_20 = arith.constant 2.400000e+01 : f32
    %49 = arith.divf %23, %cst_20 : f32
    %50 = vector.broadcast %49 : f32 to vector<8x128xf32>
    %51 = arith.mulf %50, %16 : vector<8x128xf32>
    %52 = arith.addf %48, %51 : vector<8x128xf32>
    %53 = tpu.concatenate %10, %38 in 0 : vector<128x128xf32>, vector<128x128xf32> -> vector<256x128xf32>
    %cst_21 = arith.constant dense<0.000000e+00> : vector<256x128xf32>
    %54 = tpu.matmul %53, %38, %cst_21 {dimension_numbers = #tpu.dot_dimension_numbers<[1], [0], [0], [1], [0, 0, 1, 1], [], []>} : vector<256x128xf32>, vector<128x128xf32>, vector<256x128xf32> -> vector<256x128xf32>
    %55 = vector.extract_strided_slice %54 {offsets = [0, 0], sizes = [128, 128], strides = [1, 1]} : vector<256x128xf32> to vector<128x128xf32>
    %56 = arith.addf %10, %55 : vector<128x128xf32>
    %57 = vector.extract_strided_slice %54 {offsets = [128, 0], sizes = [128, 128], strides = [1, 1]} : vector<256x128xf32> to vector<128x128xf32>
    %58 = tpu.concatenate %56, %57 in 0 : vector<128x128xf32>, vector<128x128xf32> -> vector<256x128xf32>
    %cst_22 = arith.constant dense<0.000000e+00> : vector<256x128xf32>
    %59 = tpu.matmul %58, %57, %cst_22 {dimension_numbers = #tpu.dot_dimension_numbers<[1], [0], [0], [1], [0, 0, 1, 1], [], []>} : vector<256x128xf32>, vector<128x128xf32>, vector<256x128xf32> -> vector<256x128xf32>
    %60 = vector.extract_strided_slice %59 {offsets = [0, 0], sizes = [128, 128], strides = [1, 1]} : vector<256x128xf32> to vector<128x128xf32>
    %61 = arith.addf %56, %60 : vector<128x128xf32>
    %62 = vector.extract_strided_slice %59 {offsets = [128, 0], sizes = [128, 128], strides = [1, 1]} : vector<256x128xf32> to vector<128x128xf32>
    %63 = tpu.concatenate %61, %62 in 0 : vector<128x128xf32>, vector<128x128xf32> -> vector<256x128xf32>
    %cst_23 = arith.constant dense<0.000000e+00> : vector<256x128xf32>
    %64 = tpu.matmul %63, %62, %cst_23 {dimension_numbers = #tpu.dot_dimension_numbers<[1], [0], [0], [1], [0, 0, 1, 1], [], []>} : vector<256x128xf32>, vector<128x128xf32>, vector<256x128xf32> -> vector<256x128xf32>
    %65 = vector.extract_strided_slice %64 {offsets = [0, 0], sizes = [128, 128], strides = [1, 1]} : vector<256x128xf32> to vector<128x128xf32>
    %66 = arith.addf %61, %65 : vector<128x128xf32>
    %67 = vector.extract_strided_slice %64 {offsets = [128, 0], sizes = [128, 128], strides = [1, 1]} : vector<256x128xf32> to vector<128x128xf32>
    %68 = tpu.concatenate %66, %67 in 0 : vector<128x128xf32>, vector<128x128xf32> -> vector<256x128xf32>
    %cst_24 = arith.constant dense<0.000000e+00> : vector<256x128xf32>
    %69 = tpu.matmul %68, %67, %cst_24 {dimension_numbers = #tpu.dot_dimension_numbers<[1], [0], [0], [1], [0, 0, 1, 1], [], []>} : vector<256x128xf32>, vector<128x128xf32>, vector<256x128xf32> -> vector<256x128xf32>
    %70 = vector.extract_strided_slice %69 {offsets = [0, 0], sizes = [128, 128], strides = [1, 1]} : vector<256x128xf32> to vector<128x128xf32>
    %71 = arith.addf %66, %70 : vector<128x128xf32>
    %72 = vector.extract_strided_slice %69 {offsets = [128, 0], sizes = [128, 128], strides = [1, 1]} : vector<256x128xf32> to vector<128x128xf32>
    %73 = tpu.concatenate %71, %72 in 0 : vector<128x128xf32>, vector<128x128xf32> -> vector<256x128xf32>
    %cst_25 = arith.constant dense<0.000000e+00> : vector<256x128xf32>
    %74 = tpu.matmul %73, %72, %cst_25 {dimension_numbers = #tpu.dot_dimension_numbers<[1], [0], [0], [1], [0, 0, 1, 1], [], []>} : vector<256x128xf32>, vector<128x128xf32>, vector<256x128xf32> -> vector<256x128xf32>
    %75 = vector.extract_strided_slice %74 {offsets = [0, 0], sizes = [128, 128], strides = [1, 1]} : vector<256x128xf32> to vector<128x128xf32>
    %76 = arith.addf %71, %75 : vector<128x128xf32>
    %77 = vector.extract_strided_slice %74 {offsets = [128, 0], sizes = [128, 128], strides = [1, 1]} : vector<256x128xf32> to vector<128x128xf32>
    %cst_26 = arith.constant dense<0.000000e+00> : vector<8x128xf32>
    %78 = tpu.matmul %52, %76, %cst_26 {dimension_numbers = #tpu.dot_dimension_numbers<[1], [0], [0], [1], [0, 0, 1, 1], [], []>} : vector<8x128xf32>, vector<128x128xf32>, vector<8x128xf32> -> vector<8x128xf32>
    %c0_i32 = arith.constant 0 : i32
    %cst_27 = arith.constant dense<0.000000e+00> : vector<8x128xf32>
    %79 = tpu.matmul %2, %77, %cst_27 {dimension_numbers = #tpu.dot_dimension_numbers<[1], [0], [0], [1], [0, 0, 1, 1], [], []>} : vector<8x128xf32>, vector<128x128xf32>, vector<8x128xf32> -> vector<8x128xf32>
    %80 = arith.addf %79, %78 : vector<8x128xf32>
    %c1_i32 = arith.constant 1 : i32
    %81 = arith.addi %c0_i32, %c1_i32 : i32
    %82 = arith.index_cast %81 : i32 to index
    %c0_28 = arith.constant 0 : index
    %c0_29 = arith.constant 0 : index
    %83 = vector.load %arg4[%82, %c0_28, %c0_29] : memref<8x8x128xf32, #tpu.memory_space<vmem>>, vector<1x8x128xf32>
    %84 = vector.shape_cast %83 : vector<1x8x128xf32> to vector<8x128xf32>
    %85 = vector.shape_cast %80 : vector<8x128xf32> to vector<1x8x128xf32>
    tpu.vector_store %arg4[%82, %c0_28, %c0_29], %85 {strides = array<i32>} : memref<8x8x128xf32, #tpu.memory_space<vmem>>, vector<1x8x128xf32>,
    %c1_i32_30 = arith.constant 1 : i32
    %cst_31 = arith.constant dense<0.000000e+00> : vector<8x128xf32>
    %86 = tpu.matmul %80, %77, %cst_31 {dimension_numbers = #tpu.dot_dimension_numbers<[1], [0], [0], [1], [0, 0, 1, 1], [], []>} : vector<8x128xf32>, vector<128x128xf32>, vector<8x128xf32> -> vector<8x128xf32>
    %87 = arith.addf %86, %78 : vector<8x128xf32>
    %c1_i32_32 = arith.constant 1 : i32
    %88 = arith.addi %c1_i32_30, %c1_i32_32 : i32
    %89 = arith.index_cast %88 : i32 to index
    %c0_33 = arith.constant 0 : index
    %c0_34 = arith.constant 0 : index
    %90 = vector.load %arg4[%89, %c0_33, %c0_34] : memref<8x8x128xf32, #tpu.memory_space<vmem>>, vector<1x8x128xf32>
    %91 = vector.shape_cast %90 : vector<1x8x128xf32> to vector<8x128xf32>
    %92 = vector.shape_cast %87 : vector<8x128xf32> to vector<1x8x128xf32>
    tpu.vector_store %arg4[%89, %c0_33, %c0_34], %92 {strides = array<i32>} : memref<8x8x128xf32, #tpu.memory_space<vmem>>, vector<1x8x128xf32>,
    %c2_i32 = arith.constant 2 : i32
    %cst_35 = arith.constant dense<0.000000e+00> : vector<8x128xf32>
    %93 = tpu.matmul %87, %77, %cst_35 {dimension_numbers = #tpu.dot_dimension_numbers<[1], [0], [0], [1], [0, 0, 1, 1], [], []>} : vector<8x128xf32>, vector<128x128xf32>, vector<8x128xf32> -> vector<8x128xf32>
    %94 = arith.addf %93, %78 : vector<8x128xf32>
    %c1_i32_36 = arith.constant 1 : i32
    %95 = arith.addi %c2_i32, %c1_i32_36 : i32
    %96 = arith.index_cast %95 : i32 to index
    %c0_37 = arith.constant 0 : index
    %c0_38 = arith.constant 0 : index
    %97 = vector.load %arg4[%96, %c0_37, %c0_38] : memref<8x8x128xf32, #tpu.memory_space<vmem>>, vector<1x8x128xf32>
    %98 = vector.shape_cast %97 : vector<1x8x128xf32> to vector<8x128xf32>
    %99 = vector.shape_cast %94 : vector<8x128xf32> to vector<1x8x128xf32>
    tpu.vector_store %arg4[%96, %c0_37, %c0_38], %99 {strides = array<i32>} : memref<8x8x128xf32, #tpu.memory_space<vmem>>, vector<1x8x128xf32>,
    %c3_i32 = arith.constant 3 : i32
    %cst_39 = arith.constant dense<0.000000e+00> : vector<8x128xf32>
    %100 = tpu.matmul %94, %77, %cst_39 {dimension_numbers = #tpu.dot_dimension_numbers<[1], [0], [0], [1], [0, 0, 1, 1], [], []>} : vector<8x128xf32>, vector<128x128xf32>, vector<8x128xf32> -> vector<8x128xf32>
    %101 = arith.addf %100, %78 : vector<8x128xf32>
    %c1_i32_40 = arith.constant 1 : i32
    %102 = arith.addi %c3_i32, %c1_i32_40 : i32
    %103 = arith.index_cast %102 : i32 to index
    %c0_41 = arith.constant 0 : index
    %c0_42 = arith.constant 0 : index
    %104 = vector.load %arg4[%103, %c0_41, %c0_42] : memref<8x8x128xf32, #tpu.memory_space<vmem>>, vector<1x8x128xf32>
    %105 = vector.shape_cast %104 : vector<1x8x128xf32> to vector<8x128xf32>
    %106 = vector.shape_cast %101 : vector<8x128xf32> to vector<1x8x128xf32>
    tpu.vector_store %arg4[%103, %c0_41, %c0_42], %106 {strides = array<i32>} : memref<8x8x128xf32, #tpu.memory_space<vmem>>, vector<1x8x128xf32>,
    %c4_i32 = arith.constant 4 : i32
    %cst_43 = arith.constant dense<0.000000e+00> : vector<8x128xf32>
    %107 = tpu.matmul %101, %77, %cst_43 {dimension_numbers = #tpu.dot_dimension_numbers<[1], [0], [0], [1], [0, 0, 1, 1], [], []>} : vector<8x128xf32>, vector<128x128xf32>, vector<8x128xf32> -> vector<8x128xf32>
    %108 = arith.addf %107, %78 : vector<8x128xf32>
    %c1_i32_44 = arith.constant 1 : i32
    %109 = arith.addi %c4_i32, %c1_i32_44 : i32
    %110 = arith.index_cast %109 : i32 to index
    %c0_45 = arith.constant 0 : index
    %c0_46 = arith.constant 0 : index
    %111 = vector.load %arg4[%110, %c0_45, %c0_46] : memref<8x8x128xf32, #tpu.memory_space<vmem>>, vector<1x8x128xf32>
    %112 = vector.shape_cast %111 : vector<1x8x128xf32> to vector<8x128xf32>
    %113 = vector.shape_cast %108 : vector<8x128xf32> to vector<1x8x128xf32>
    tpu.vector_store %arg4[%110, %c0_45, %c0_46], %113 {strides = array<i32>} : memref<8x8x128xf32, #tpu.memory_space<vmem>>, vector<1x8x128xf32>,
    %c5_i32 = arith.constant 5 : i32
    %cst_47 = arith.constant dense<0.000000e+00> : vector<8x128xf32>
    %114 = tpu.matmul %108, %77, %cst_47 {dimension_numbers = #tpu.dot_dimension_numbers<[1], [0], [0], [1], [0, 0, 1, 1], [], []>} : vector<8x128xf32>, vector<128x128xf32>, vector<8x128xf32> -> vector<8x128xf32>
    %115 = arith.addf %114, %78 : vector<8x128xf32>
    %c1_i32_48 = arith.constant 1 : i32
    %116 = arith.addi %c5_i32, %c1_i32_48 : i32
    %117 = arith.index_cast %116 : i32 to index
    %c0_49 = arith.constant 0 : index
    %c0_50 = arith.constant 0 : index
    %118 = vector.load %arg4[%117, %c0_49, %c0_50] : memref<8x8x128xf32, #tpu.memory_space<vmem>>, vector<1x8x128xf32>
    %119 = vector.shape_cast %118 : vector<1x8x128xf32> to vector<8x128xf32>
    %120 = vector.shape_cast %115 : vector<8x128xf32> to vector<1x8x128xf32>
    tpu.vector_store %arg4[%117, %c0_49, %c0_50], %120 {strides = array<i32>} : memref<8x8x128xf32, #tpu.memory_space<vmem>>, vector<1x8x128xf32>,
    %c6_i32 = arith.constant 6 : i32
    %cst_51 = arith.constant dense<0.000000e+00> : vector<8x128xf32>
    %121 = tpu.matmul %115, %77, %cst_51 {dimension_numbers = #tpu.dot_dimension_numbers<[1], [0], [0], [1], [0, 0, 1, 1], [], []>} : vector<8x128xf32>, vector<128x128xf32>, vector<8x128xf32> -> vector<8x128xf32>
    %122 = arith.addf %121, %78 : vector<8x128xf32>
    %c1_i32_52 = arith.constant 1 : i32
    %123 = arith.addi %c6_i32, %c1_i32_52 : i32
    %124 = arith.index_cast %123 : i32 to index
    %c0_53 = arith.constant 0 : index
    %c0_54 = arith.constant 0 : index
    %125 = vector.load %arg4[%124, %c0_53, %c0_54] : memref<8x8x128xf32, #tpu.memory_space<vmem>>, vector<1x8x128xf32>
    %126 = vector.shape_cast %125 : vector<1x8x128xf32> to vector<8x128xf32>
    %127 = vector.shape_cast %122 : vector<8x128xf32> to vector<1x8x128xf32>
    tpu.vector_store %arg4[%124, %c0_53, %c0_54], %127 {strides = array<i32>} : memref<8x8x128xf32, #tpu.memory_space<vmem>>, vector<1x8x128xf32>,
    %c7_i32 = arith.constant 7 : i32
    return
  }
}

</mosaic_0001>

<llo_original>
// kernel: tpu_custom_call.1
$region0: #{tpu_custom_call.1}
  #allocation0 [shape = 'u32[]', space=smem, size = 0x4, offset = 0x4, fixed_abs, tag = 'smem constant byte address 0x4 - core index']
  #allocation1 [shape = 'u32[144,128]{1,0:T(1,128)}', space=vmem, size = 0x12000, scoped, tag = 'internal scratch']
  %s0 = inlined_call_operand.hbm [shape: f32[8], index: 0, kind: input, shape index: {}]
  %s1 = inlined_call_operand.hbm [shape: f32[128,128], index: 1, kind: input, shape index: {}]
  %s2 = inlined_call_operand.hbm [shape: f32[8,128], index: 2, kind: input, shape index: {}]
  %s3 = inlined_call_operand.hbm [shape: f32[8,128], index: 3, kind: input, shape index: {}]
  %s4 = inlined_call_operand.hbm [shape: f32[8,8,128], index: 4, kind: output, shape index: {}]
  %s5 = sld [smem:[#allocation0]]
  $region42: #{tpu_custom_call.1} parent=0
    _
  %s7 = ssub.s32 1, %s5
  %s8 = scalar_select 0, %s7, %s5
  $region1: #{tpu_custom_call.1} parent=0
    #allocation2 [shape = 'u8[512]{0}', space=smem, size = 0x200, scoped, tag = 'input window, operand 0, single buffered']
    #allocation3 [shape = 's32[1]{0}', space=sflag, size = 0x4, scoped, tag = 'scoped memory for tpu_custom_call.1']
    #allocation4 [shape = 's32[1]{0}', space=sflag, size = 0x4, scoped, tag = 'scoped memory for tpu_custom_call.1']
    #allocation5 [shape = 's32[1]{0}', space=sflag, size = 0x4, scoped, tag = 'scoped memory for tpu_custom_call.1']
    #allocation6 [shape = 'u8[65536]{0}', space=vmem, size = 0x10000, scoped, tag = 'input window, operand 1, single buffered']
    #allocation7 [shape = 'u8[4096]{0}', space=vmem, size = 0x1000, scoped, tag = 'input window, operand 2, single buffered']
    #allocation8 [shape = 's32[1]{0}', space=sflag, size = 0x4, scoped, tag = 'scoped memory for tpu_custom_call.1']
    #allocation9 [shape = 'u8[4096]{0}', space=vmem, size = 0x1000, scoped, tag = 'input window, operand 3, single buffered']
    #allocation10 [shape = 'u8[32768]{0}', space=vmem, size = 0x8000, scoped, tag = 'output window, operand 0, single buffered']
    %9 = vsyncpa [#allocation5], 0
    %10 = vsyncpa [#allocation3], 0
    %11 = vsyncpa [#allocation8], 0
    %12 = vsyncpa [#allocation4], 0
    // Predicated region
    $region2: #{tpu_custom_call.1} parent=1 // pred_check
      _
    $region3: #{tpu_custom_call.1} parent=1 // pred_check_branch
      %14 = sbr.rel (0) target = $region5
    $region4: #{tpu_custom_call.1} parent=1 // pred_region
      %s16 = ssub.s32 16, 16
      %17 = vsyncadd [#allocation5], %s16
      %20 = dma.hbm_to_smem %s0, 16, [#allocation2], [#allocation5]
    $region5: #{tpu_custom_call.1} parent=1 // pred_fallthru
      _
    // Predicated region
    $region6: #{tpu_custom_call.1} parent=1 // pred_check
      _
    $region7: #{tpu_custom_call.1} parent=1 // pred_check_branch
      %22 = sbr.rel (0) target = $region9
    $region8: #{tpu_custom_call.1} parent=1 // pred_region
      %s24 = ssub.s32 2048, 2048
      %25 = vsyncadd [#allocation3], %s24
      %s26 = sshll.u32 [#allocation6], 4
      %s27 = int_to_ptr.vmem [resolvable:$true] %s26
      %32 = dma.hbm_to_vmem [thread:$0]  %s1, 2048, %s27, [#allocation3], 128, 128, 8
    $region9: #{tpu_custom_call.1} parent=1 // pred_fallthru
      _
    // Predicated region
    $region10: #{tpu_custom_call.1} parent=1 // pred_check
      _
    $region11: #{tpu_custom_call.1} parent=1 // pred_check_branch
      %34 = sbr.rel (0) target = $region13
    $region12: #{tpu_custom_call.1} parent=1 // pred_region
      %s36 = ssub.s32 128, 128
      %37 = vsyncadd [#allocation8], %s36
      %s39 = sshll.u32 [#allocation7], 4
      %s40 = int_to_ptr.vmem [resolvable:$true] %s39
      %42 = dma.hbm_to_vmem [thread:$0]  %s2, 128, %s40, [#allocation8]
    $region13: #{tpu_custom_call.1} parent=1 // pred_fallthru
      _
    // Predicated region
    $region14: #{tpu_custom_call.1} parent=1 // pred_check
      _
    $region15: #{tpu_custom_call.1} parent=1 // pred_check_branch
      %44 = sbr.rel (0) target = $region17
    $region16: #{tpu_custom_call.1} parent=1 // pred_region
      %s46 = ssub.s32 128, 128
      %47 = vsyncadd [#allocation8], %s46
      %s49 = sshll.u32 [#allocation9], 4
      %s50 = int_to_ptr.vmem [resolvable:$true] %s49
      %52 = dma.hbm_to_vmem [thread:$0]  %s3, 128, %s50, [#allocation8]
    $region17: #{tpu_custom_call.1} parent=1 // pred_fallthru
      _
    // Predicated region
    $region18: #{tpu_custom_call.1} parent=1 // pred_check
      _
    $region19: #{tpu_custom_call.1} parent=1 // pred_check_branch
      %54 = sbr.rel (0) target = $region21
    $region20: #{tpu_custom_call.1} parent=1 // pred_region
      %55 = dma.done [#allocation5], 16
    $region21: #{tpu_custom_call.1} parent=1 // pred_fallthru
      _
    // Predicated region
    $region22: #{tpu_custom_call.1} parent=1 // pred_check
      _
    $region23: #{tpu_custom_call.1} parent=1 // pred_check_branch
      %57 = sbr.rel (0) target = $region25
    $region24: #{tpu_custom_call.1} parent=1 // pred_region
      %58 = dma.done [#allocation3], 2048
    $region25: #{tpu_custom_call.1} parent=1 // pred_fallthru
      _
    // Predicated region
    $region26: #{tpu_custom_call.1} parent=1 // pred_check
      _
    $region27: #{tpu_custom_call.1} parent=1 // pred_check_branch
      %60 = sbr.rel (0) target = $region29
    $region28: #{tpu_custom_call.1} parent=1 // pred_region
      %61 = dma.done [#allocation8], 128
    $region29: #{tpu_custom_call.1} parent=1 // pred_fallthru
      _
    // Predicated region
    $region30: #{tpu_custom_call.1} parent=1 // pred_check
      _
    $region31: #{tpu_custom_call.1} parent=1 // pred_check_branch
      %63 = sbr.rel (0) target = $region33
    $region32: #{tpu_custom_call.1} parent=1 // pred_region
      %64 = dma.done [#allocation8], 128
    $region33: #{tpu_custom_call.1} parent=1 // pred_fallthru
      _
    %65 = sfence
    %v66 = vld [vmem:[#allocation6] sm:$0xff]
    %v67 = vld [vmem:[#allocation6 + $0x8] sm:$0xff]
    %v68 = vld [vmem:[#allocation6 + $0x10] sm:$0xff]
    %v69 = vld [vmem:[#allocation6 + $0x18] sm:$0xff]
    %v70 = vld [vmem:[#allocation6 + $0x20] sm:$0xff]
    %v71 = vld [vmem:[#allocation6 + $0x28] sm:$0xff]
    %v72 = vld [vmem:[#allocation6 + $0x30] sm:$0xff]
    %v73 = vld [vmem:[#allocation6 + $0x38] sm:$0xff]
    %v74 = vld [vmem:[#allocation6 + $0x40] sm:$0xff]
    %v75 = vld [vmem:[#allocation6 + $0x48] sm:$0xff]
    %v76 = vld [vmem:[#allocation6 + $0x50] sm:$0xff]
    %v77 = vld [vmem:[#allocation6 + $0x58] sm:$0xff]
    %v78 = vld [vmem:[#allocation6 + $0x60] sm:$0xff]
    %v79 = vld [vmem:[#allocation6 + $0x68] sm:$0xff]
    %v80 = vld [vmem:[#allocation6 + $0x70] sm:$0xff]
    %v81 = vld [vmem:[#allocation6 + $0x78] sm:$0xff]
    %v82 = vld [vmem:[#allocation7] sm:$0xff]
    %v83 = vld [vmem:[#allocation9] sm:$0xff]
    %84 = vst [vmem:[#allocation10] sm:$0xff] %v83
    %v85 = vlaneseq
    %v86 = vshrl.u32 %v85, 7
    %v87 = vadd.s32 %v86, 8
    %v88 = vadd.s32 %v86, 16
    %v89 = vadd.s32 %v86, 24
    %v90 = vadd.s32 %v86, 32
    %v91 = vadd.s32 %v86, 40
    %v92 = vadd.s32 %v86, 48
    %v93 = vadd.s32 %v86, 56
    %v94 = vadd.s32 %v86, 64
    %v95 = vadd.s32 %v86, 72
    %v96 = vadd.s32 %v86, 80
    %v97 = vadd.s32 %v86, 88
    %v98 = vadd.s32 %v86, 96
    %v99 = vadd.s32 %v86, 104
    %v100 = vadd.s32 %v86, 112
    %v101 = vadd.s32 %v86, 120
    %v102 = vlaneseq
    %v103 = vand.u32 %v102, 127
    %vm104 = vcmp.eq.s32.totalorder %v86, %v103
    %vm105 = vcmp.eq.s32.totalorder %v87, %v103
    %vm106 = vcmp.eq.s32.totalorder %v88, %v103
    %vm107 = vcmp.eq.s32.totalorder %v89, %v103
    %vm108 = vcmp.eq.s32.totalorder %v90, %v103
    %vm109 = vcmp.eq.s32.totalorder %v91, %v103
    %vm110 = vcmp.eq.s32.totalorder %v92, %v103
    %vm111 = vcmp.eq.s32.totalorder %v93, %v103
    %vm112 = vcmp.eq.s32.totalorder %v94, %v103
    %vm113 = vcmp.eq.s32.totalorder %v95, %v103
    %vm114 = vcmp.eq.s32.totalorder %v96, %v103
    %vm115 = vcmp.eq.s32.totalorder %v97, %v103
    %vm116 = vcmp.eq.s32.totalorder %v98, %v103
    %vm117 = vcmp.eq.s32.totalorder %v99, %v103
    %vm118 = vcmp.eq.s32.totalorder %v100, %v103
    %vm119 = vcmp.eq.s32.totalorder %v101, %v103
    %v120 = vsel %vm104, 1, 0
    %v121 = vsel %vm105, 1, 0
    %v122 = vsel %vm106, 1, 0
    %v123 = vsel %vm107, 1, 0
    %v124 = vsel %vm108, 1, 0
    %v125 = vsel %vm109, 1, 0
    %v126 = vsel %vm110, 1, 0
    %v127 = vsel %vm111, 1, 0
    %v128 = vsel %vm112, 1, 0
    %v129 = vsel %vm113, 1, 0
    %v130 = vsel %vm114, 1, 0
    %v131 = vsel %vm115, 1, 0
    %v132 = vsel %vm116, 1, 0
    %v133 = vsel %vm117, 1, 0
    %v134 = vsel %vm118, 1, 0
    %v135 = vsel %vm119, 1, 0
    %v136 = vcvt.s32.f32 %v120
    %v137 = vcvt.s32.f32 %v121
    %v138 = vcvt.s32.f32 %v122
    %v139 = vcvt.s32.f32 %v123
    %v140 = vcvt.s32.f32 %v124
    %v141 = vcvt.s32.f32 %v125
    %v142 = vcvt.s32.f32 %v126
    %v143 = vcvt.s32.f32 %v127
    %v144 = vcvt.s32.f32 %v128
    %v145 = vcvt.s32.f32 %v129
    %v146 = vcvt.s32.f32 %v130
    %v147 = vcvt.s32.f32 %v131
    %v148 = vcvt.s32.f32 %v132
    %v149 = vcvt.s32.f32 %v133
    %v150 = vcvt.s32.f32 %v134
    %v151 = vcvt.s32.f32 %v135
    %152 = vmatprep.subr.mxu0 0.0
    %153 = vmatpush1.msra.mxu0 %v81
    %154 = vmatprep.subr.mxu0 0.0
    %155 = vmatpush1.msra.mxu0 %v80
    %156 = vmatprep.subr.mxu0 0.0
    %157 = vmatpush1.msra.mxu0 %v79
    %158 = vmatprep.subr.mxu0 0.0
    %159 = vmatpush1.msra.mxu0 %v78
    %160 = vmatprep.subr.mxu0 0.0
    %161 = vmatpush1.msra.mxu0 %v77
    %162 = vmatprep.subr.mxu0 0.0
    %163 = vmatpush1.msra.mxu0 %v76
    %164 = vmatprep.subr.mxu0 0.0
    %165 = vmatpush1.msra.mxu0 %v75
    %166 = vmatprep.subr.mxu0 0.0
    %167 = vmatpush1.msra.mxu0 %v74
    %168 = vmatprep.subr.mxu0 0.0
    %169 = vmatpush1.msra.mxu0 %v73
    %170 = vmatprep.subr.mxu0 0.0
    %171 = vmatpush1.msra.mxu0 %v72
    %172 = vmatprep.subr.mxu0 0.0
    %173 = vmatpush1.msra.mxu0 %v71
    %174 = vmatprep.subr.mxu0 0.0
    %175 = vmatpush1.msra.mxu0 %v70
    %176 = vmatprep.subr.mxu0 0.0
    %177 = vmatpush1.msra.mxu0 %v69
    %178 = vmatprep.subr.mxu0 0.0
    %179 = vmatpush1.msra.mxu0 %v68
    %180 = vmatprep.subr.mxu0 0.0
    %181 = vmatpush1.msra.mxu0 %v67
    %182 = vmatprep.subr.mxu0 0.0
    %183 = vmatpush1.msra.mxu0 %v66
    %184 = vmatprep.subr.mxu0 0.0
    %185 = vmatpush2.msra.mxu0 0.0
    %186 = vmatprep.subr.mxu0 0.0
    %187 = vmatpush2.msra.mxu0 0.0
    %188 = vmatprep.subr.mxu0 0.0
    %189 = vmatpush2.msra.mxu0 0.0
    %190 = vmatprep.subr.mxu0 0.0
    %191 = vmatpush2.msra.mxu0 0.0
    %192 = vmatprep.subr.mxu0 0.0
    %193 = vmatpush2.msra.mxu0 0.0
    %194 = vmatprep.subr.mxu0 0.0
    %195 = vmatpush2.msra.mxu0 0.0
    %196 = vmatprep.subr.mxu0 0.0
    %197 = vmatpush2.msra.mxu0 0.0
    %198 = vmatprep.subr.mxu0 0.0
    %199 = vmatpush2.msra.mxu0 0.0
    %200 = vmatprep.subr.mxu0 0.0
    %201 = vmatpush2.msra.mxu0 0.0
    %202 = vmatprep.subr.mxu0 0.0
    %203 = vmatpush2.msra.mxu0 0.0
    %204 = vmatprep.subr.mxu0 0.0
    %205 = vmatpush2.msra.mxu0 0.0
    %206 = vmatprep.subr.mxu0 0.0
    %207 = vmatpush2.msra.mxu0 0.0
    %208 = vmatprep.subr.mxu0 0.0
    %209 = vmatpush2.msra.mxu0 0.0
    %210 = vmatprep.subr.mxu0 0.0
    %211 = vmatpush2.msra.mxu0 0.0
    %212 = vmatprep.subr.mxu0 0.0
    %213 = vmatpush2.msra.mxu0 0.0
    %214 = vmatprep.subr.mxu0 0.0
    %215 = vmatpush2.msra.mxu0 0.0
    %216 = vmatprep.mubr.f32.mxu0 0.0
    %217 = vmatmul.mubr.f32.gmra.mxu0 %v66
    %v218 = vpop.f32.mrf.mxu0
    %v219 = vadd.f32 0.0, %v218
    %v220 = vpop.f32.mrf.mxu0
    %221 = vmatprep.mubr.f32.mxu0 0.0
    %222 = vmatmul.mubr.f32.gmra.mxu0 %v67
    %v223 = vpop.f32.mrf.mxu0
    %v224 = vadd.f32 0.0, %v223
    %v225 = vpop.f32.mrf.mxu0
    %226 = vmatprep.mubr.f32.mxu0 0.0
    %227 = vmatmul.mubr.f32.gmra.mxu0 %v68
    %v228 = vpop.f32.mrf.mxu0
    %v229 = vadd.f32 0.0, %v228
    %v230 = vpop.f32.mrf.mxu0
    %231 = vmatprep.mubr.f32.mxu0 0.0
    %232 = vmatmul.mubr.f32.gmra.mxu0 %v69
    %v233 = vpop.f32.mrf.mxu0
    %v234 = vadd.f32 0.0, %v233
    %v235 = vpop.f32.mrf.mxu0
    %236 = vmatprep.mubr.f32.mxu0 0.0
    %237 = vmatmul.mubr.f32.gmra.mxu0 %v70
    %v238 = vpop.f32.mrf.mxu0
    %v239 = vadd.f32 0.0, %v238
    %v240 = vpop.f32.mrf.mxu0
    %241 = vmatprep.mubr.f32.mxu0 0.0
    %242 = vmatmul.mubr.f32.gmra.mxu0 %v71
    %v243 = vpop.f32.mrf.mxu0
    %v244 = vadd.f32 0.0, %v243
    %v245 = vpop.f32.mrf.mxu0
    %246 = vmatprep.mubr.f32.mxu0 0.0
    %247 = vmatmul.mubr.f32.gmra.mxu0 %v72
    %v248 = vpop.f32.mrf.mxu0
    %v249 = vadd.f32 0.0, %v248
    %v250 = vpop.f32.mrf.mxu0
    %251 = vmatprep.mubr.f32.mxu0 0.0
    %252 = vmatmul.mubr.f32.gmra.mxu0 %v73
    %v253 = vpop.f32.mrf.mxu0
    %v254 = vadd.f32 0.0, %v253
    %v255 = vpop.f32.mrf.mxu0
    %256 = vmatprep.mubr.f32.mxu0 0.0
    %257 = vmatmul.mubr.f32.gmra.mxu0 %v74
    %v258 = vpop.f32.mrf.mxu0
    %v259 = vadd.f32 0.0, %v258
    %v260 = vpop.f32.mrf.mxu0
    %261 = vmatprep.mubr.f32.mxu0 0.0
    %262 = vmatmul.mubr.f32.gmra.mxu0 %v75
    %v263 = vpop.f32.mrf.mxu0
    %v264 = vadd.f32 0.0, %v263
    %v265 = vpop.f32.mrf.mxu0
    %266 = vmatprep.mubr.f32.mxu0 0.0
    %267 = vmatmul.mubr.f32.gmra.mxu0 %v76
    %v268 = vpop.f32.mrf.mxu0
    %v269 = vadd.f32 0.0, %v268
    %v270 = vpop.f32.mrf.mxu0
    %271 = vmatprep.mubr.f32.mxu0 0.0
    %272 = vmatmul.mubr.f32.gmra.mxu0 %v77
    %v273 = vpop.f32.mrf.mxu0
    %v274 = vadd.f32 0.0, %v273
    %v275 = vpop.f32.mrf.mxu0
    %276 = vmatprep.mubr.f32.mxu0 0.0
    %277 = vmatmul.mubr.f32.gmra.mxu0 %v78
    %v278 = vpop.f32.mrf.mxu0
    %v279 = vadd.f32 0.0, %v278
    %v280 = vpop.f32.mrf.mxu0
    %281 = vmatprep.mubr.f32.mxu0 0.0
    %282 = vmatmul.mubr.f32.gmra.mxu0 %v79
    %v283 = vpop.f32.mrf.mxu0
    %v284 = vadd.f32 0.0, %v283
    %v285 = vpop.f32.mrf.mxu0
    %286 = vmatprep.mubr.f32.mxu0 0.0
    %287 = vmatmul.mubr.f32.gmra.mxu0 %v80
    %v288 = vpop.f32.mrf.mxu0
    %v289 = vadd.f32 0.0, %v288
    %v290 = vpop.f32.mrf.mxu0
    %291 = vmatprep.mubr.f32.mxu0 0.0
    %292 = vmatmul.mubr.f32.gmra.mxu0 %v81
    %v293 = vpop.f32.mrf.mxu0
    %v294 = vadd.f32 0.0, %v293
    %v295 = vpop.f32.mrf.mxu0
    %296 = vdwg.mxu0
    %297 = vmatprep.subr.mxu0 0.0
    %298 = vmatpush1.msra.mxu0 %v81
    %299 = vmatprep.subr.mxu0 0.0
    %300 = vmatpush1.msra.mxu0 %v80
    %301 = vmatprep.subr.mxu0 0.0
    %302 = vmatpush1.msra.mxu0 %v79
    %303 = vmatprep.subr.mxu0 0.0
    %304 = vmatpush1.msra.mxu0 %v78
    %305 = vmatprep.subr.mxu0 0.0
    %306 = vmatpush1.msra.mxu0 %v77
    %307 = vmatprep.subr.mxu0 0.0
    %308 = vmatpush1.msra.mxu0 %v76
    %309 = vmatprep.subr.mxu0 0.0
    %310 = vmatpush1.msra.mxu0 %v75
    %311 = vmatprep.subr.mxu0 0.0
    %312 = vmatpush1.msra.mxu0 %v74
    %313 = vmatprep.subr.mxu0 0.0
    %314 = vmatpush1.msra.mxu0 %v73
    %315 = vmatprep.subr.mxu0 0.0
    %316 = vmatpush1.msra.mxu0 %v72
    %317 = vmatprep.subr.mxu0 0.0
    %318 = vmatpush1.msra.mxu0 %v71
    %319 = vmatprep.subr.mxu0 0.0
    %320 = vmatpush1.msra.mxu0 %v70
    %321 = vmatprep.subr.mxu0 0.0
    %322 = vmatpush1.msra.mxu0 %v69
    %323 = vmatprep.subr.mxu0 0.0
    %324 = vmatpush1.msra.mxu0 %v68
    %325 = vmatprep.subr.mxu0 0.0
    %326 = vmatpush1.msra.mxu0 %v67
    %327 = vmatprep.subr.mxu0 0.0
    %328 = vmatpush1.msra.mxu0 %v66
    %329 = vmatprep.subr.mxu0 0.0
    %330 = vmatpush2.msra.mxu0 0.0
    %331 = vmatprep.subr.mxu0 0.0
    %332 = vmatpush2.msra.mxu0 0.0
    %333 = vmatprep.subr.mxu0 0.0
    %334 = vmatpush2.msra.mxu0 0.0
    %335 = vmatprep.subr.mxu0 0.0
    %336 = vmatpush2.msra.mxu0 0.0
    %337 = vmatprep.subr.mxu0 0.0
    %338 = vmatpush2.msra.mxu0 0.0
    %339 = vmatprep.subr.mxu0 0.0
    %340 = vmatpush2.msra.mxu0 0.0
    %341 = vmatprep.subr.mxu0 0.0
    %342 = vmatpush2.msra.mxu0 0.0
    %343 = vmatprep.subr.mxu0 0.0
    %344 = vmatpush2.msra.mxu0 0.0
    %345 = vmatprep.subr.mxu0 0.0
    %346 = vmatpush2.msra.mxu0 0.0
    %347 = vmatprep.subr.mxu0 0.0
    %348 = vmatpush2.msra.mxu0 0.0
    %349 = vmatprep.subr.mxu0 0.0
    %350 = vmatpush2.msra.mxu0 0.0
    %351 = vmatprep.subr.mxu0 0.0
    %352 = vmatpush2.msra.mxu0 0.0
    %353 = vmatprep.subr.mxu0 0.0
    %354 = vmatpush2.msra.mxu0 0.0
    %355 = vmatprep.subr.mxu0 0.0
    %356 = vmatpush2.msra.mxu0 0.0
    %357 = vmatprep.subr.mxu0 0.0
    %358 = vmatpush2.msra.mxu0 0.0
    %359 = vmatprep.subr.mxu0 0.0
    %360 = vmatpush2.msra.mxu0 0.0
    %361 = vmatprep.mubr.f32.mxu0 0.0
    %362 = vmatmul.mubr.f32.gmra.mxu0 %v219
    %v363 = vpop.f32.mrf.mxu0
    %v364 = vadd.f32 0.0, %v363
    %v365 = vpop.f32.mrf.mxu0
    %366 = vmatprep.mubr.f32.mxu0 0.0
    %367 = vmatmul.mubr.f32.gmra.mxu0 %v224
    %v368 = vpop.f32.mrf.mxu0
    %v369 = vadd.f32 0.0, %v368
    %v370 = vpop.f32.mrf.mxu0
    %371 = vmatprep.mubr.f32.mxu0 0.0
    %372 = vmatmul.mubr.f32.gmra.mxu0 %v229
    %v373 = vpop.f32.mrf.mxu0
    %v374 = vadd.f32 0.0, %v373
    %v375 = vpop.f32.mrf.mxu0
    %376 = vmatprep.mubr.f32.mxu0 0.0
    %377 = vmatmul.mubr.f32.gmra.mxu0 %v234
    %v378 = vpop.f32.mrf.mxu0
    %v379 = vadd.f32 0.0, %v378
    %v380 = vpop.f32.mrf.mxu0
    %381 = vmatprep.mubr.f32.mxu0 0.0
    %382 = vmatmul.mubr.f32.gmra.mxu0 %v239
    %v383 = vpop.f32.mrf.mxu0
    %v384 = vadd.f32 0.0, %v383
    %v385 = vpop.f32.mrf.mxu0
    %386 = vmatprep.mubr.f32.mxu0 0.0
    %387 = vmatmul.mubr.f32.gmra.mxu0 %v244
    %v388 = vpop.f32.mrf.mxu0
    %v389 = vadd.f32 0.0, %v388
    %v390 = vpop.f32.mrf.mxu0
    %391 = vmatprep.mubr.f32.mxu0 0.0
    %392 = vmatmul.mubr.f32.gmra.mxu0 %v249
    %v393 = vpop.f32.mrf.mxu0
    %v394 = vadd.f32 0.0, %v393
    %v395 = vpop.f32.mrf.mxu0
    %396 = vmatprep.mubr.f32.mxu0 0.0
    %397 = vmatmul.mubr.f32.gmra.mxu0 %v254
    %v398 = vpop.f32.mrf.mxu0
    %v399 = vadd.f32 0.0, %v398
    %v400 = vpop.f32.mrf.mxu0
    %401 = vmatprep.mubr.f32.mxu0 0.0
    %402 = vmatmul.mubr.f32.gmra.mxu0 %v259
    %v403 = vpop.f32.mrf.mxu0
    %v404 = vadd.f32 0.0, %v403
    %v405 = vpop.f32.mrf.mxu0
    %406 = vmatprep.mubr.f32.mxu0 0.0
    %407 = vmatmul.mubr.f32.gmra.mxu0 %v264
    %v408 = vpop.f32.mrf.mxu0
    %v409 = vadd.f32 0.0, %v408
    %v410 = vpop.f32.mrf.mxu0
    %411 = vmatprep.mubr.f32.mxu0 0.0
    %412 = vmatmul.mubr.f32.gmra.mxu0 %v269
    %v413 = vpop.f32.mrf.mxu0
    %v414 = vadd.f32 0.0, %v413
    %v415 = vpop.f32.mrf.mxu0
    %416 = vmatprep.mubr.f32.mxu0 0.0
    %417 = vmatmul.mubr.f32.gmra.mxu0 %v274
    %v418 = vpop.f32.mrf.mxu0
    %v419 = vadd.f32 0.0, %v418
    %v420 = vpop.f32.mrf.mxu0
    %421 = vmatprep.mubr.f32.mxu0 0.0
    %422 = vmatmul.mubr.f32.gmra.mxu0 %v279
    %v423 = vpop.f32.mrf.mxu0
    %v424 = vadd.f32 0.0, %v423
    %v425 = vpop.f32.mrf.mxu0
    %426 = vmatprep.mubr.f32.mxu0 0.0
    %427 = vmatmul.mubr.f32.gmra.mxu0 %v284
    %v428 = vpop.f32.mrf.mxu0
    %v429 = vadd.f32 0.0, %v428
    %v430 = vpop.f32.mrf.mxu0
    %431 = vmatprep.mubr.f32.mxu0 0.0
    %432 = vmatmul.mubr.f32.gmra.mxu0 %v289
    %v433 = vpop.f32.mrf.mxu0
    %v434 = vadd.f32 0.0, %v433
    %v435 = vpop.f32.mrf.mxu0
    %436 = vmatprep.mubr.f32.mxu0 0.0
    %437 = vmatmul.mubr.f32.gmra.mxu0 %v294
    %v438 = vpop.f32.mrf.mxu0
    %v439 = vadd.f32 0.0, %v438
    %v440 = vpop.f32.mrf.mxu0
    %441 = vdwg.mxu0
    %442 = vmatprep.subr.mxu0 0.0
    %443 = vmatpush1.msra.mxu0 %v294
    %444 = vmatprep.subr.mxu0 0.0
    %445 = vmatpush1.msra.mxu0 %v289
    %446 = vmatprep.subr.mxu0 0.0
    %447 = vmatpush1.msra.mxu0 %v284
    %448 = vmatprep.subr.mxu0 0.0
    %449 = vmatpush1.msra.mxu0 %v279
    %450 = vmatprep.subr.mxu0 0.0
    %451 = vmatpush1.msra.mxu0 %v274
    %452 = vmatprep.subr.mxu0 0.0
    %453 = vmatpush1.msra.mxu0 %v269
    %454 = vmatprep.subr.mxu0 0.0
    %455 = vmatpush1.msra.mxu0 %v264
    %456 = vmatprep.subr.mxu0 0.0
    %457 = vmatpush1.msra.mxu0 %v259
    %458 = vmatprep.subr.mxu0 0.0
    %459 = vmatpush1.msra.mxu0 %v254
    %460 = vmatprep.subr.mxu0 0.0
    %461 = vmatpush1.msra.mxu0 %v249
    %462 = vmatprep.subr.mxu0 0.0
    %463 = vmatpush1.msra.mxu0 %v244
    %464 = vmatprep.subr.mxu0 0.0
    %465 = vmatpush1.msra.mxu0 %v239
    %466 = vmatprep.subr.mxu0 0.0
    %467 = vmatpush1.msra.mxu0 %v234
    %468 = vmatprep.subr.mxu0 0.0
    %469 = vmatpush1.msra.mxu0 %v229
    %470 = vmatprep.subr.mxu0 0.0
    %471 = vmatpush1.msra.mxu0 %v224
    %472 = vmatprep.subr.mxu0 0.0
    %473 = vmatpush1.msra.mxu0 %v219
    %474 = vmatprep.subr.mxu0 0.0
    %475 = vmatpush2.msra.mxu0 0.0
    %476 = vmatprep.subr.mxu0 0.0
    %477 = vmatpush2.msra.mxu0 0.0
    %478 = vmatprep.subr.mxu0 0.0
    %479 = vmatpush2.msra.mxu0 0.0
    %480 = vmatprep.subr.mxu0 0.0
    %481 = vmatpush2.msra.mxu0 0.0
    %482 = vmatprep.subr.mxu0 0.0
    %483 = vmatpush2.msra.mxu0 0.0
    %484 = vmatprep.subr.mxu0 0.0
    %485 = vmatpush2.msra.mxu0 0.0
    %486 = vmatprep.subr.mxu0 0.0
    %487 = vmatpush2.msra.mxu0 0.0
    %488 = vmatprep.subr.mxu0 0.0
    %489 = vmatpush2.msra.mxu0 0.0
    %490 = vmatprep.subr.mxu0 0.0
    %491 = vmatpush2.msra.mxu0 0.0
    %492 = vmatprep.subr.mxu0 0.0
    %493 = vmatpush2.msra.mxu0 0.0
    %494 = vmatprep.subr.mxu0 0.0
    %495 = vmatpush2.msra.mxu0 0.0
    %496 = vmatprep.subr.mxu0 0.0
    %497 = vmatpush2.msra.mxu0 0.0
    %498 = vmatprep.subr.mxu0 0.0
    %499 = vmatpush2.msra.mxu0 0.0
    %500 = vmatprep.subr.mxu0 0.0
    %501 = vmatpush2.msra.mxu0 0.0
    %502 = vmatprep.subr.mxu0 0.0
    %503 = vmatpush2.msra.mxu0 0.0
    %504 = vmatprep.subr.mxu0 0.0
    %505 = vmatpush2.msra.mxu0 0.0
    %506 = vmatprep.mubr.f32.mxu0 0.0
    %507 = vmatmul.mubr.f32.gmra.mxu0 %v219
    %v508 = vpop.f32.mrf.mxu0
    %v509 = vadd.f32 0.0, %v508
    %v510 = vpop.f32.mrf.mxu0
    %511 = vmatprep.mubr.f32.mxu0 0.0
    %512 = vmatmul.mubr.f32.gmra.mxu0 %v224
    %v513 = vpop.f32.mrf.mxu0
    %v514 = vadd.f32 0.0, %v513
    %v515 = vpop.f32.mrf.mxu0
    %516 = vmatprep.mubr.f32.mxu0 0.0
    %517 = vmatmul.mubr.f32.gmra.mxu0 %v229
    %v518 = vpop.f32.mrf.mxu0
    %v519 = vadd.f32 0.0, %v518
    %v520 = vpop.f32.mrf.mxu0
    %521 = vmatprep.mubr.f32.mxu0 0.0
    %522 = vmatmul.mubr.f32.gmra.mxu0 %v234
    %v523 = vpop.f32.mrf.mxu0
    %v524 = vadd.f32 0.0, %v523
    %v525 = vpop.f32.mrf.mxu0
    %526 = vmatprep.mubr.f32.mxu0 0.0
    %527 = vmatmul.mubr.f32.gmra.mxu0 %v239
    %v528 = vpop.f32.mrf.mxu0
    %v529 = vadd.f32 0.0, %v528
    %v530 = vpop.f32.mrf.mxu0
    %531 = vmatprep.mubr.f32.mxu0 0.0
    %532 = vmatmul.mubr.f32.gmra.mxu0 %v244
    %v533 = vpop.f32.mrf.mxu0
    %v534 = vadd.f32 0.0, %v533
    %v535 = vpop.f32.mrf.mxu0
    %536 = vmatprep.mubr.f32.mxu0 0.0
    %537 = vmatmul.mubr.f32.gmra.mxu0 %v249
    %v538 = vpop.f32.mrf.mxu0
    %v539 = vadd.f32 0.0, %v538
    %v540 = vpop.f32.mrf.mxu0
    %541 = vmatprep.mubr.f32.mxu0 0.0
    %542 = vmatmul.mubr.f32.gmra.mxu0 %v254
    %v543 = vpop.f32.mrf.mxu0
    %v544 = vadd.f32 0.0, %v543
    %v545 = vpop.f32.mrf.mxu0
    %546 = vmatprep.mubr.f32.mxu0 0.0
    %547 = vmatmul.mubr.f32.gmra.mxu0 %v259
    %v548 = vpop.f32.mrf.mxu0
    %v549 = vadd.f32 0.0, %v548
    %v550 = vpop.f32.mrf.mxu0
    %551 = vmatprep.mubr.f32.mxu0 0.0
    %552 = vmatmul.mubr.f32.gmra.mxu0 %v264
    %v553 = vpop.f32.mrf.mxu0
    %v554 = vadd.f32 0.0, %v553
    %v555 = vpop.f32.mrf.mxu0
    %556 = vmatprep.mubr.f32.mxu0 0.0
    %557 = vmatmul.mubr.f32.gmra.mxu0 %v269
    %v558 = vpop.f32.mrf.mxu0
    %v559 = vadd.f32 0.0, %v558
    %v560 = vpop.f32.mrf.mxu0
    %561 = vmatprep.mubr.f32.mxu0 0.0
    %562 = vmatmul.mubr.f32.gmra.mxu0 %v274
    %v563 = vpop.f32.mrf.mxu0
    %v564 = vadd.f32 0.0, %v563
    %v565 = vpop.f32.mrf.mxu0
    %566 = vmatprep.mubr.f32.mxu0 0.0
    %567 = vmatmul.mubr.f32.gmra.mxu0 %v279
    %v568 = vpop.f32.mrf.mxu0
    %v569 = vadd.f32 0.0, %v568
    %v570 = vpop.f32.mrf.mxu0
    %571 = vmatprep.mubr.f32.mxu0 0.0
    %572 = vmatmul.mubr.f32.gmra.mxu0 %v284
    %v573 = vpop.f32.mrf.mxu0
    %v574 = vadd.f32 0.0, %v573
    %v575 = vpop.f32.mrf.mxu0
    %576 = vmatprep.mubr.f32.mxu0 0.0
    %577 = vmatmul.mubr.f32.gmra.mxu0 %v289
    %v578 = vpop.f32.mrf.mxu0
    %v579 = vadd.f32 0.0, %v578
    %v580 = vpop.f32.mrf.mxu0
    %581 = vmatprep.mubr.f32.mxu0 0.0
    %582 = vmatmul.mubr.f32.gmra.mxu0 %v294
    %v583 = vpop.f32.mrf.mxu0
    %v584 = vadd.f32 0.0, %v583
    %v585 = vpop.f32.mrf.mxu0
    %586 = vdwg.mxu0
    %587 = vmatprep.subr.mxu0 0.0
    %588 = vmatpush1.msra.mxu0 %v81
    %589 = vmatprep.subr.mxu0 0.0
    %590 = vmatpush1.msra.mxu0 %v80
    %591 = vmatprep.subr.mxu0 0.0
    %592 = vmatpush1.msra.mxu0 %v79
    %593 = vmatprep.subr.mxu0 0.0
    %594 = vmatpush1.msra.mxu0 %v78
    %595 = vmatprep.subr.mxu0 0.0
    %596 = vmatpush1.msra.mxu0 %v77
    %597 = vmatprep.subr.mxu0 0.0
    %598 = vmatpush1.msra.mxu0 %v76
    %599 = vmatprep.subr.mxu0 0.0
    %600 = vmatpush1.msra.mxu0 %v75
    %601 = vmatprep.subr.mxu0 0.0
    %602 = vmatpush1.msra.mxu0 %v74
    %603 = vmatprep.subr.mxu0 0.0
    %604 = vmatpush1.msra.mxu0 %v73
    %605 = vmatprep.subr.mxu0 0.0
    %606 = vmatpush1.msra.mxu0 %v72
    %607 = vmatprep.subr.mxu0 0.0
    %608 = vmatpush1.msra.mxu0 %v71
    %609 = vmatprep.subr.mxu0 0.0
    %610 = vmatpush1.msra.mxu0 %v70
    %611 = vmatprep.subr.mxu0 0.0
    %612 = vmatpush1.msra.mxu0 %v69
    %613 = vmatprep.subr.mxu0 0.0
    %614 = vmatpush1.msra.mxu0 %v68
    %615 = vmatprep.subr.mxu0 0.0
    %616 = vmatpush1.msra.mxu0 %v67
    %617 = vmatprep.subr.mxu0 0.0
    %618 = vmatpush1.msra.mxu0 %v66
    %619 = vmatprep.subr.mxu0 0.0
    %620 = vmatpush2.msra.mxu0 0.0
    %621 = vmatprep.subr.mxu0 0.0
    %622 = vmatpush2.msra.mxu0 0.0
    %623 = vmatprep.subr.mxu0 0.0
    %624 = vmatpush2.msra.mxu0 0.0
    %625 = vmatprep.subr.mxu0 0.0
    %626 = vmatpush2.msra.mxu0 0.0
    %627 = vmatprep.subr.mxu0 0.0
    %628 = vmatpush2.msra.mxu0 0.0
    %629 = vmatprep.subr.mxu0 0.0
    %630 = vmatpush2.msra.mxu0 0.0
    %631 = vmatprep.subr.mxu0 0.0
    %632 = vmatpush2.msra.mxu0 0.0
    %633 = vmatprep.subr.mxu0 0.0
    %634 = vmatpush2.msra.mxu0 0.0
    %635 = vmatprep.subr.mxu0 0.0
    %636 = vmatpush2.msra.mxu0 0.0
    %637 = vmatprep.subr.mxu0 0.0
    %638 = vmatpush2.msra.mxu0 0.0
    %639 = vmatprep.subr.mxu0 0.0
    %640 = vmatpush2.msra.mxu0 0.0
    %641 = vmatprep.subr.mxu0 0.0
    %642 = vmatpush2.msra.mxu0 0.0
    %643 = vmatprep.subr.mxu0 0.0
    %644 = vmatpush2.msra.mxu0 0.0
    %645 = vmatprep.subr.mxu0 0.0
    %646 = vmatpush2.msra.mxu0 0.0
    %647 = vmatprep.subr.mxu0 0.0
    %648 = vmatpush2.msra.mxu0 0.0
    %649 = vmatprep.subr.mxu0 0.0
    %650 = vmatpush2.msra.mxu0 0.0
    %651 = vmatprep.mubr.f32.mxu0 0.0
    %652 = vmatmul.mubr.f32.gmra.mxu0 %v82
    %v653 = vpop.f32.mrf.mxu0
    %v654 = vadd.f32 0.0, %v653
    %v655 = vpop.f32.mrf.mxu0
    %656 = vdwg.mxu0
    %657 = vmatprep.subr.mxu0 0.0
    %658 = vmatpush1.msra.mxu0 %v294
    %659 = vmatprep.subr.mxu0 0.0
    %660 = vmatpush1.msra.mxu0 %v289
    %661 = vmatprep.subr.mxu0 0.0
    %662 = vmatpush1.msra.mxu0 %v284
    %663 = vmatprep.subr.mxu0 0.0
    %664 = vmatpush1.msra.mxu0 %v279
    %665 = vmatprep.subr.mxu0 0.0
    %666 = vmatpush1.msra.mxu0 %v274
    %667 = vmatprep.subr.mxu0 0.0
    %668 = vmatpush1.msra.mxu0 %v269
    %669 = vmatprep.subr.mxu0 0.0
    %670 = vmatpush1.msra.mxu0 %v264
    %671 = vmatprep.subr.mxu0 0.0
    %672 = vmatpush1.msra.mxu0 %v259
    %673 = vmatprep.subr.mxu0 0.0
    %674 = vmatpush1.msra.mxu0 %v254
    %675 = vmatprep.subr.mxu0 0.0
    %676 = vmatpush1.msra.mxu0 %v249
    %677 = vmatprep.subr.mxu0 0.0
    %678 = vmatpush1.msra.mxu0 %v244
    %679 = vmatprep.subr.mxu0 0.0
    %680 = vmatpush1.msra.mxu0 %v239
    %681 = vmatprep.subr.mxu0 0.0
    %682 = vmatpush1.msra.mxu0 %v234
    %683 = vmatprep.subr.mxu0 0.0
    %684 = vmatpush1.msra.mxu0 %v229
    %685 = vmatprep.subr.mxu0 0.0
    %686 = vmatpush1.msra.mxu0 %v224
    %687 = vmatprep.subr.mxu0 0.0
    %688 = vmatpush1.msra.mxu0 %v219
    %689 = vmatprep.subr.mxu0 0.0
    %690 = vmatpush2.msra.mxu0 0.0
    %691 = vmatprep.subr.mxu0 0.0
    %692 = vmatpush2.msra.mxu0 0.0
    %693 = vmatprep.subr.mxu0 0.0
    %694 = vmatpush2.msra.mxu0 0.0
    %695 = vmatprep.subr.mxu0 0.0
    %696 = vmatpush2.msra.mxu0 0.0
    %697 = vmatprep.subr.mxu0 0.0
    %698 = vmatpush2.msra.mxu0 0.0
    %699 = vmatprep.subr.mxu0 0.0
    %700 = vmatpush2.msra.mxu0 0.0
    %701 = vmatprep.subr.mxu0 0.0
    %702 = vmatpush2.msra.mxu0 0.0
    %703 = vmatprep.subr.mxu0 0.0
    %704 = vmatpush2.msra.mxu0 0.0
    %705 = vmatprep.subr.mxu0 0.0
    %706 = vmatpush2.msra.mxu0 0.0
    %707 = vmatprep.subr.mxu0 0.0
    %708 = vmatpush2.msra.mxu0 0.0
    %709 = vmatprep.subr.mxu0 0.0
    %710 = vmatpush2.msra.mxu0 0.0
    %711 = vmatprep.subr.mxu0 0.0
    %712 = vmatpush2.msra.mxu0 0.0
    %713 = vmatprep.subr.mxu0 0.0
    %714 = vmatpush2.msra.mxu0 0.0
    %715 = vmatprep.subr.mxu0 0.0
    %716 = vmatpush2.msra.mxu0 0.0
    %717 = vmatprep.subr.mxu0 0.0
    %718 = vmatpush2.msra.mxu0 0.0
    %719 = vmatprep.subr.mxu0 0.0
    %720 = vmatpush2.msra.mxu0 0.0
    %721 = vmatprep.mubr.f32.mxu0 0.0
    %722 = vmatmul.mubr.f32.gmra.mxu0 %v82
    %v723 = vpop.f32.mrf.mxu0
    %v724 = vadd.f32 0.0, %v723
    %v725 = vpop.f32.mrf.mxu0
    %726 = vdwg.mxu0
    %727 = vmatprep.subr.mxu0 0.0
    %728 = vmatpush1.msra.mxu0 %v439
    %729 = vmatprep.subr.mxu0 0.0
    %730 = vmatpush1.msra.mxu0 %v434
    %731 = vmatprep.subr.mxu0 0.0
    %732 = vmatpush1.msra.mxu0 %v429
    %733 = vmatprep.subr.mxu0 0.0
    %734 = vmatpush1.msra.mxu0 %v424
    %735 = vmatprep.subr.mxu0 0.0
    %736 = vmatpush1.msra.mxu0 %v419
    %737 = vmatprep.subr.mxu0 0.0
    %738 = vmatpush1.msra.mxu0 %v414
    %739 = vmatprep.subr.mxu0 0.0
    %740 = vmatpush1.msra.mxu0 %v409
    %741 = vmatprep.subr.mxu0 0.0
    %742 = vmatpush1.msra.mxu0 %v404
    %743 = vmatprep.subr.mxu0 0.0
    %744 = vmatpush1.msra.mxu0 %v399
    %745 = vmatprep.subr.mxu0 0.0
    %746 = vmatpush1.msra.mxu0 %v394
    %747 = vmatprep.subr.mxu0 0.0
    %748 = vmatpush1.msra.mxu0 %v389
    %749 = vmatprep.subr.mxu0 0.0
    %750 = vmatpush1.msra.mxu0 %v384
    %751 = vmatprep.subr.mxu0 0.0
    %752 = vmatpush1.msra.mxu0 %v379
    %753 = vmatprep.subr.mxu0 0.0
    %754 = vmatpush1.msra.mxu0 %v374
    %755 = vmatprep.subr.mxu0 0.0
    %756 = vmatpush1.msra.mxu0 %v369
    %757 = vmatprep.subr.mxu0 0.0
    %758 = vmatpush1.msra.mxu0 %v364
    %759 = vmatprep.subr.mxu0 0.0
    %760 = vmatpush2.msra.mxu0 0.0
    %761 = vmatprep.subr.mxu0 0.0
    %762 = vmatpush2.msra.mxu0 0.0
    %763 = vmatprep.subr.mxu0 0.0
    %764 = vmatpush2.msra.mxu0 0.0
    %765 = vmatprep.subr.mxu0 0.0
    %766 = vmatpush2.msra.mxu0 0.0
    %767 = vmatprep.subr.mxu0 0.0
    %768 = vmatpush2.msra.mxu0 0.0
    %769 = vmatprep.subr.mxu0 0.0
    %770 = vmatpush2.msra.mxu0 0.0
    %771 = vmatprep.subr.mxu0 0.0
    %772 = vmatpush2.msra.mxu0 0.0
    %773 = vmatprep.subr.mxu0 0.0
    %774 = vmatpush2.msra.mxu0 0.0
    %775 = vmatprep.subr.mxu0 0.0
    %776 = vmatpush2.msra.mxu0 0.0
    %777 = vmatprep.subr.mxu0 0.0
    %778 = vmatpush2.msra.mxu0 0.0
    %779 = vmatprep.subr.mxu0 0.0
    %780 = vmatpush2.msra.mxu0 0.0
    %781 = vmatprep.subr.mxu0 0.0
    %782 = vmatpush2.msra.mxu0 0.0
    %783 = vmatprep.subr.mxu0 0.0
    %784 = vmatpush2.msra.mxu0 0.0
    %785 = vmatprep.subr.mxu0 0.0
    %786 = vmatpush2.msra.mxu0 0.0
    %787 = vmatprep.subr.mxu0 0.0
    %788 = vmatpush2.msra.mxu0 0.0
    %789 = vmatprep.subr.mxu0 0.0
    %790 = vmatpush2.msra.mxu0 0.0
    %791 = vmatprep.mubr.f32.mxu0 0.0
    %792 = vmatmul.mubr.f32.gmra.mxu0 %v82
    %v793 = vpop.f32.mrf.mxu0
    %v794 = vadd.f32 0.0, %v793
    %v795 = vpop.f32.mrf.mxu0
    %796 = vdwg.mxu0
    %s797 = sld [smem:[#allocation2 + $0x7]]
    %s798 = sld [smem:[#allocation2]]
    %s799 = ssub.f32 %s797, %s798
    %v800 = vrcp.pop 224.0
    %s801 = vtos %v800
    %s802 = smul.f32 %s799, %s801
    %s803 = smul.f32 %s802, %s802
    %s804 = smul.f32 %s803, %s802
    %s805 = smul.f32 %s803, %s803
    %v806 = vstv %s802
    %v807 = vmul.f32 %v806, %v66
    %v808 = vmul.f32 %v806, %v67
    %v809 = vmul.f32 %v806, %v68
    %v810 = vmul.f32 %v806, %v69
    %v811 = vmul.f32 %v806, %v70
    %v812 = vmul.f32 %v806, %v71
    %v813 = vmul.f32 %v806, %v72
    %v814 = vmul.f32 %v806, %v73
    %v815 = vmul.f32 %v806, %v74
    %v816 = vmul.f32 %v806, %v75
    %v817 = vmul.f32 %v806, %v76
    %v818 = vmul.f32 %v806, %v77
    %v819 = vmul.f32 %v806, %v78
    %v820 = vmul.f32 %v806, %v79
    %v821 = vmul.f32 %v806, %v80
    %v822 = vmul.f32 %v806, %v81
    %v823 = vadd.f32 %v136, %v807
    %v824 = vadd.f32 %v137, %v808
    %v825 = vadd.f32 %v138, %v809
    %v826 = vadd.f32 %v139, %v810
    %v827 = vadd.f32 %v140, %v811
    %v828 = vadd.f32 %v141, %v812
    %v829 = vadd.f32 %v142, %v813
    %v830 = vadd.f32 %v143, %v814
    %v831 = vadd.f32 %v144, %v815
    %v832 = vadd.f32 %v145, %v816
    %v833 = vadd.f32 %v146, %v817
    %v834 = vadd.f32 %v147, %v818
    %v835 = vadd.f32 %v148, %v819
    %v836 = vadd.f32 %v149, %v820
    %v837 = vadd.f32 %v150, %v821
    %v838 = vadd.f32 %v151, %v822
    %v839 = vrcp.pop 2.0
    %s840 = vtos %v839
    %s841 = smul.f32 %s803, %s840
    %v842 = vstv %s841
    %v843 = vmul.f32 %v842, %v219
    %v844 = vmul.f32 %v842, %v224
    %v845 = vmul.f32 %v842, %v229
    %v846 = vmul.f32 %v842, %v234
    %v847 = vmul.f32 %v842, %v239
    %v848 = vmul.f32 %v842, %v244
    %v849 = vmul.f32 %v842, %v249
    %v850 = vmul.f32 %v842, %v254
    %v851 = vmul.f32 %v842, %v259
    %v852 = vmul.f32 %v842, %v264
    %v853 = vmul.f32 %v842, %v269
    %v854 = vmul.f32 %v842, %v274
    %v855 = vmul.f32 %v842, %v279
    %v856 = vmul.f32 %v842, %v284
    %v857 = vmul.f32 %v842, %v289
    %v858 = vmul.f32 %v842, %v294
    %v859 = vadd.f32 %v823, %v843
    %v860 = vadd.f32 %v824, %v844
    %v861 = vadd.f32 %v825, %v845
    %v862 = vadd.f32 %v826, %v846
    %v863 = vadd.f32 %v827, %v847
    %v864 = vadd.f32 %v828, %v848
    %v865 = vadd.f32 %v829, %v849
    %v866 = vadd.f32 %v830, %v850
    %v867 = vadd.f32 %v831, %v851
    %v868 = vadd.f32 %v832, %v852
    %v869 = vadd.f32 %v833, %v853
    %v870 = vadd.f32 %v834, %v854
    %v871 = vadd.f32 %v835, %v855
    %v872 = vadd.f32 %v836, %v856
    %v873 = vadd.f32 %v837, %v857
    %v874 = vadd.f32 %v838, %v858
    %v875 = vrcp.pop 6.0
    %s876 = vtos %v875
    %s877 = smul.f32 %s804, %s876
    %v878 = vstv %s877
    %v879 = vmul.f32 %v878, %v364
    %v880 = vmul.f32 %v878, %v369
    %v881 = vmul.f32 %v878, %v374
    %v882 = vmul.f32 %v878, %v379
    %v883 = vmul.f32 %v878, %v384
    %v884 = vmul.f32 %v878, %v389
    %v885 = vmul.f32 %v878, %v394
    %v886 = vmul.f32 %v878, %v399
    %v887 = vmul.f32 %v878, %v404
    %v888 = vmul.f32 %v878, %v409
    %v889 = vmul.f32 %v878, %v414
    %v890 = vmul.f32 %v878, %v419
    %v891 = vmul.f32 %v878, %v424
    %v892 = vmul.f32 %v878, %v429
    %v893 = vmul.f32 %v878, %v434
    %v894 = vmul.f32 %v878, %v439
    %v895 = vadd.f32 %v859, %v879
    %v896 = vadd.f32 %v860, %v880
    %v897 = vadd.f32 %v861, %v881
    %v898 = vadd.f32 %v862, %v882
    %v899 = vadd.f32 %v863, %v883
    %v900 = vadd.f32 %v864, %v884
    %v901 = vadd.f32 %v865, %v885
    %v902 = vadd.f32 %v866, %v886
    %v903 = vadd.f32 %v867, %v887
    %v904 = vadd.f32 %v868, %v888
    %v905 = vadd.f32 %v869, %v889
    %v906 = vadd.f32 %v870, %v890
    %v907 = vadd.f32 %v871, %v891
    %v908 = vadd.f32 %v872, %v892
    %v909 = vadd.f32 %v873, %v893
    %v910 = vadd.f32 %v874, %v894
    %v911 = vrcp.pop 24.0
    %s912 = vtos %v911
    %s913 = smul.f32 %s805, %s912
    %v914 = vstv %s913
    %v915 = vmul.f32 %v914, %v509
    %v916 = vmul.f32 %v914, %v514
    %v917 = vmul.f32 %v914, %v519
    %v918 = vmul.f32 %v914, %v524
    %v919 = vmul.f32 %v914, %v529
    %v920 = vmul.f32 %v914, %v534
    %v921 = vmul.f32 %v914, %v539
    %v922 = vmul.f32 %v914, %v544
    %v923 = vmul.f32 %v914, %v549
    %v924 = vmul.f32 %v914, %v554
    %v925 = vmul.f32 %v914, %v559
    %v926 = vmul.f32 %v914, %v564
    %v927 = vmul.f32 %v914, %v569
    %v928 = vmul.f32 %v914, %v574
    %v929 = vmul.f32 %v914, %v579
    %v930 = vmul.f32 %v914, %v584
    %v931 = vadd.f32 %v895, %v915
    %v932 = vadd.f32 %v896, %v916
    %v933 = vadd.f32 %v897, %v917
    %v934 = vadd.f32 %v898, %v918
    %v935 = vadd.f32 %v899, %v919
    %v936 = vadd.f32 %v900, %v920
    %v937 = vadd.f32 %v901, %v921
    %v938 = vadd.f32 %v902, %v922
    %v939 = vadd.f32 %v903, %v923
    %v940 = vadd.f32 %v904, %v924
    %v941 = vadd.f32 %v905, %v925
    %v942 = vadd.f32 %v906, %v926
    %v943 = vadd.f32 %v907, %v927
    %v944 = vadd.f32 %v908, %v928
    %v945 = vadd.f32 %v909, %v929
    %v946 = vadd.f32 %v910, %v930
    %v947 = vmul.f32 %v806, %v82
    %v948 = vmul.f32 %v842, %v654
    %v949 = vadd.f32 %v947, %v948
    %v950 = vmul.f32 %v878, %v724
    %v951 = vadd.f32 %v949, %v950
    %v952 = vmul.f32 %v914, %v794
    %v953 = vadd.f32 %v951, %v952
    %954 = vmatprep.subr.mxu0 0.0
    %955 = vmatpush1.msra.mxu0 %v946
    %956 = vmatprep.subr.mxu0 0.0
    %957 = vmatpush1.msra.mxu0 %v945
    %958 = vmatprep.subr.mxu0 0.0
    %959 = vmatpush1.msra.mxu0 %v944
    %960 = vmatprep.subr.mxu0 0.0
    %961 = vmatpush1.msra.mxu0 %v943
    %962 = vmatprep.subr.mxu0 0.0
    %963 = vmatpush1.msra.mxu0 %v942
    %964 = vmatprep.subr.mxu0 0.0
    %965 = vmatpush1.msra.mxu0 %v941
    %966 = vmatprep.subr.mxu0 0.0
    %967 = vmatpush1.msra.mxu0 %v940
    %968 = vmatprep.subr.mxu0 0.0
    %969 = vmatpush1.msra.mxu0 %v939
    %970 = vmatprep.subr.mxu0 0.0
    %971 = vmatpush1.msra.mxu0 %v938
    %972 = vmatprep.subr.mxu0 0.0
    %973 = vmatpush1.msra.mxu0 %v937
    %974 = vmatprep.subr.mxu0 0.0
    %975 = vmatpush1.msra.mxu0 %v936
    %976 = vmatprep.subr.mxu0 0.0
    %977 = vmatpush1.msra.mxu0 %v935
    %978 = vmatprep.subr.mxu0 0.0
    %979 = vmatpush1.msra.mxu0 %v934
    %980 = vmatprep.subr.mxu0 0.0
    %981 = vmatpush1.msra.mxu0 %v933
    %982 = vmatprep.subr.mxu0 0.0
    %983 = vmatpush1.msra.mxu0 %v932
    %984 = vmatprep.subr.mxu0 0.0
    %985 = vmatpush1.msra.mxu0 %v931
    %986 = vmatprep.subr.mxu0 0.0
    %987 = vmatpush2.msra.mxu0 0.0
    %988 = vmatprep.subr.mxu0 0.0
    %989 = vmatpush2.msra.mxu0 0.0
    %990 = vmatprep.subr.mxu0 0.0
    %991 = vmatpush2.msra.mxu0 0.0
    %992 = vmatprep.subr.mxu0 0.0
    %993 = vmatpush2.msra.mxu0 0.0
    %994 = vmatprep.subr.mxu0 0.0
    %995 = vmatpush2.msra.mxu0 0.0
    %996 = vmatprep.subr.mxu0 0.0
    %997 = vmatpush2.msra.mxu0 0.0
    %998 = vmatprep.subr.mxu0 0.0
    %999 = vmatpush2.msra.mxu0 0.0
    %1000 = vmatprep.subr.mxu0 0.0
    %1001 = vmatpush2.msra.mxu0 0.0
    %1002 = vmatprep.subr.mxu0 0.0
    %1003 = vmatpush2.msra.mxu0 0.0
    %1004 = vmatprep.subr.mxu0 0.0
    %1005 = vmatpush2.msra.mxu0 0.0
    %1006 = vmatprep.subr.mxu0 0.0
    %1007 = vmatpush2.msra.mxu0 0.0
    %1008 = vmatprep.subr.mxu0 0.0
    %1009 = vmatpush2.msra.mxu0 0.0
    %1010 = vmatprep.subr.mxu0 0.0
    %1011 = vmatpush2.msra.mxu0 0.0
    %1012 = vmatprep.subr.mxu0 0.0
    %1013 = vmatpush2.msra.mxu0 0.0
    %1014 = vmatprep.subr.mxu0 0.0
    %1015 = vmatpush2.msra.mxu0 0.0
    %1016 = vmatprep.subr.mxu0 0.0
    %1017 = vmatpush2.msra.mxu0 0.0
    %1018 = vmatprep.mubr.f32.mxu0 0.0
    %1019 = vmatmul.mubr.f32.gmra.mxu0 %v136
    %v1020 = vpop.f32.mrf.mxu0
    %v1021 = vadd.f32 0.0, %v1020
    %v1022 = vpop.f32.mrf.mxu0
    %1023 = vmatprep.mubr.f32.mxu0 0.0
    %1024 = vmatmul.mubr.f32.gmra.mxu0 %v137
    %v1025 = vpop.f32.mrf.mxu0
    %v1026 = vadd.f32 0.0, %v1025
    %v1027 = vpop.f32.mrf.mxu0
    %1028 = vmatprep.mubr.f32.mxu0 0.0
    %1029 = vmatmul.mubr.f32.gmra.mxu0 %v138
    %v1030 = vpop.f32.mrf.mxu0
    %v1031 = vadd.f32 0.0, %v1030
    %v1032 = vpop.f32.mrf.mxu0
    %1033 = vmatprep.mubr.f32.mxu0 0.0
    %1034 = vmatmul.mubr.f32.gmra.mxu0 %v139
    %v1035 = vpop.f32.mrf.mxu0
    %v1036 = vadd.f32 0.0, %v1035
    %v1037 = vpop.f32.mrf.mxu0
    %1038 = vmatprep.mubr.f32.mxu0 0.0
    %1039 = vmatmul.mubr.f32.gmra.mxu0 %v140
    %v1040 = vpop.f32.mrf.mxu0
    %v1041 = vadd.f32 0.0, %v1040
    %v1042 = vpop.f32.mrf.mxu0
    %1043 = vmatprep.mubr.f32.mxu0 0.0
    %1044 = vmatmul.mubr.f32.gmra.mxu0 %v141
    %v1045 = vpop.f32.mrf.mxu0
    %v1046 = vadd.f32 0.0, %v1045
    %v1047 = vpop.f32.mrf.mxu0
    %1048 = vmatprep.mubr.f32.mxu0 0.0
    %1049 = vmatmul.mubr.f32.gmra.mxu0 %v142
    %v1050 = vpop.f32.mrf.mxu0
    %v1051 = vadd.f32 0.0, %v1050
    %v1052 = vpop.f32.mrf.mxu0
    %1053 = vmatprep.mubr.f32.mxu0 0.0
    %1054 = vmatmul.mubr.f32.gmra.mxu0 %v143
    %v1055 = vpop.f32.mrf.mxu0
    %v1056 = vadd.f32 0.0, %v1055
    %v1057 = vpop.f32.mrf.mxu0
    %1058 = vmatprep.mubr.f32.mxu0 0.0
    %1059 = vmatmul.mubr.f32.gmra.mxu0 %v144
    %v1060 = vpop.f32.mrf.mxu0
    %v1061 = vadd.f32 0.0, %v1060
    %v1062 = vpop.f32.mrf.mxu0
    %1063 = vmatprep.mubr.f32.mxu0 0.0
    %1064 = vmatmul.mubr.f32.gmra.mxu0 %v145
    %v1065 = vpop.f32.mrf.mxu0
    %v1066 = vadd.f32 0.0, %v1065
    %v1067 = vpop.f32.mrf.mxu0
    %1068 = vmatprep.mubr.f32.mxu0 0.0
    %1069 = vmatmul.mubr.f32.gmra.mxu0 %v146
    %v1070 = vpop.f32.mrf.mxu0
    %v1071 = vadd.f32 0.0, %v1070
    %v1072 = vpop.f32.mrf.mxu0
    %1073 = vmatprep.mubr.f32.mxu0 0.0
    %1074 = vmatmul.mubr.f32.gmra.mxu0 %v147
    %v1075 = vpop.f32.mrf.mxu0
    %v1076 = vadd.f32 0.0, %v1075
    %v1077 = vpop.f32.mrf.mxu0
    %1078 = vmatprep.mubr.f32.mxu0 0.0
    %1079 = vmatmul.mubr.f32.gmra.mxu0 %v148
    %v1080 = vpop.f32.mrf.mxu0
    %v1081 = vadd.f32 0.0, %v1080
    %v1082 = vpop.f32.mrf.mxu0
    %1083 = vmatprep.mubr.f32.mxu0 0.0
    %1084 = vmatmul.mubr.f32.gmra.mxu0 %v149
    %v1085 = vpop.f32.mrf.mxu0
    %v1086 = vadd.f32 0.0, %v1085
    %v1087 = vpop.f32.mrf.mxu0
    %1088 = vmatprep.mubr.f32.mxu0 0.0
    %1089 = vmatmul.mubr.f32.gmra.mxu0 %v150
    %v1090 = vpop.f32.mrf.mxu0
    %v1091 = vadd.f32 0.0, %v1090
    %v1092 = vpop.f32.mrf.mxu0
    %1093 = vmatprep.mubr.f32.mxu0 0.0
    %1094 = vmatmul.mubr.f32.gmra.mxu0 %v151
    %v1095 = vpop.f32.mrf.mxu0
    %v1096 = vadd.f32 0.0, %v1095
    %v1097 = vpop.f32.mrf.mxu0
    %1098 = vmatprep.mubr.f32.mxu0 0.0
    %1099 = vmatmul.mubr.f32.gmra.mxu0 %v931
    %v1100 = vpop.f32.mrf.mxu0
    %v1101 = vadd.f32 0.0, %v1100
    %v1102 = vpop.f32.mrf.mxu0
    %1103 = vmatprep.mubr.f32.mxu0 0.0
    %1104 = vmatmul.mubr.f32.gmra.mxu0 %v932
    %v1105 = vpop.f32.mrf.mxu0
    %v1106 = vadd.f32 0.0, %v1105
    %v1107 = vpop.f32.mrf.mxu0
    %1108 = vmatprep.mubr.f32.mxu0 0.0
    %1109 = vmatmul.mubr.f32.gmra.mxu0 %v933
    %v1110 = vpop.f32.mrf.mxu0
    %v1111 = vadd.f32 0.0, %v1110
    %v1112 = vpop.f32.mrf.mxu0
    %1113 = vmatprep.mubr.f32.mxu0 0.0
    %1114 = vmatmul.mubr.f32.gmra.mxu0 %v934
    %v1115 = vpop.f32.mrf.mxu0
    %v1116 = vadd.f32 0.0, %v1115
    %v1117 = vpop.f32.mrf.mxu0
    %1118 = vmatprep.mubr.f32.mxu0 0.0
    %1119 = vmatmul.mubr.f32.gmra.mxu0 %v935
    %v1120 = vpop.f32.mrf.mxu0
    %v1121 = vadd.f32 0.0, %v1120
    %v1122 = vpop.f32.mrf.mxu0
    %1123 = vmatprep.mubr.f32.mxu0 0.0
    %1124 = vmatmul.mubr.f32.gmra.mxu0 %v936
    %v1125 = vpop.f32.mrf.mxu0
    %v1126 = vadd.f32 0.0, %v1125
    %v1127 = vpop.f32.mrf.mxu0
    %1128 = vmatprep.mubr.f32.mxu0 0.0
    %1129 = vmatmul.mubr.f32.gmra.mxu0 %v937
    %v1130 = vpop.f32.mrf.mxu0
    %v1131 = vadd.f32 0.0, %v1130
    %v1132 = vpop.f32.mrf.mxu0
    %1133 = vmatprep.mubr.f32.mxu0 0.0
    %1134 = vmatmul.mubr.f32.gmra.mxu0 %v938
    %v1135 = vpop.f32.mrf.mxu0
    %v1136 = vadd.f32 0.0, %v1135
    %v1137 = vpop.f32.mrf.mxu0
    %1138 = vmatprep.mubr.f32.mxu0 0.0
    %1139 = vmatmul.mubr.f32.gmra.mxu0 %v939
    %v1140 = vpop.f32.mrf.mxu0
    %v1141 = vadd.f32 0.0, %v1140
    %v1142 = vpop.f32.mrf.mxu0
    %1143 = vmatprep.mubr.f32.mxu0 0.0
    %1144 = vmatmul.mubr.f32.gmra.mxu0 %v940
    %v1145 = vpop.f32.mrf.mxu0
    %v1146 = vadd.f32 0.0, %v1145
    %v1147 = vpop.f32.mrf.mxu0
    %1148 = vmatprep.mubr.f32.mxu0 0.0
    %1149 = vmatmul.mubr.f32.gmra.mxu0 %v941
    %v1150 = vpop.f32.mrf.mxu0
    %v1151 = vadd.f32 0.0, %v1150
    %v1152 = vpop.f32.mrf.mxu0
    %1153 = vmatprep.mubr.f32.mxu0 0.0
    %1154 = vmatmul.mubr.f32.gmra.mxu0 %v942
    %v1155 = vpop.f32.mrf.mxu0
    %v1156 = vadd.f32 0.0, %v1155
    %v1157 = vpop.f32.mrf.mxu0
    %1158 = vmatprep.mubr.f32.mxu0 0.0
    %1159 = vmatmul.mubr.f32.gmra.mxu0 %v943
    %v1160 = vpop.f32.mrf.mxu0
    %v1161 = vadd.f32 0.0, %v1160
    %v1162 = vpop.f32.mrf.mxu0
    %1163 = vmatprep.mubr.f32.mxu0 0.0
    %1164 = vmatmul.mubr.f32.gmra.mxu0 %v944
    %v1165 = vpop.f32.mrf.mxu0
    %v1166 = vadd.f32 0.0, %v1165
    %v1167 = vpop.f32.mrf.mxu0
    %1168 = vmatprep.mubr.f32.mxu0 0.0
    %1169 = vmatmul.mubr.f32.gmra.mxu0 %v945
    %v1170 = vpop.f32.mrf.mxu0
    %v1171 = vadd.f32 0.0, %v1170
    %v1172 = vpop.f32.mrf.mxu0
    %1173 = vmatprep.mubr.f32.mxu0 0.0
    %1174 = vmatmul.mubr.f32.gmra.mxu0 %v946
    %v1175 = vpop.f32.mrf.mxu0
    %v1176 = vadd.f32 0.0, %v1175
    %v1177 = vpop.f32.mrf.mxu0
    %1178 = vdwg.mxu0
    %v1179 = vadd.f32 %v136, %v1021
    %v1180 = vadd.f32 %v137, %v1026
    %v1181 = vadd.f32 %v138, %v1031
    %v1182 = vadd.f32 %v139, %v1036
    %v1183 = vadd.f32 %v140, %v1041
    %v1184 = vadd.f32 %v141, %v1046
    %v1185 = vadd.f32 %v142, %v1051
    %v1186 = vadd.f32 %v143, %v1056
    %v1187 = vadd.f32 %v144, %v1061
    %v1188 = vadd.f32 %v145, %v1066
    %v1189 = vadd.f32 %v146, %v1071
    %v1190 = vadd.f32 %v147, %v1076
    %v1191 = vadd.f32 %v148, %v1081
    %v1192 = vadd.f32 %v149, %v1086
    %v1193 = vadd.f32 %v150, %v1091
    %v1194 = vadd.f32 %v151, %v1096
    %1195 = vmatprep.subr.mxu0 0.0
    %1196 = vmatpush1.msra.mxu0 %v1176
    %1197 = vmatprep.subr.mxu0 0.0
    %1198 = vmatpush1.msra.mxu0 %v1171
    %1199 = vmatprep.subr.mxu0 0.0
    %1200 = vmatpush1.msra.mxu0 %v1166
    %1201 = vmatprep.subr.mxu0 0.0
    %1202 = vmatpush1.msra.mxu0 %v1161
    %1203 = vmatprep.subr.mxu0 0.0
    %1204 = vmatpush1.msra.mxu0 %v1156
    %1205 = vmatprep.subr.mxu0 0.0
    %1206 = vmatpush1.msra.mxu0 %v1151
    %1207 = vmatprep.subr.mxu0 0.0
    %1208 = vmatpush1.msra.mxu0 %v1146
    %1209 = vmatprep.subr.mxu0 0.0
    %1210 = vmatpush1.msra.mxu0 %v1141
    %1211 = vmatprep.subr.mxu0 0.0
    %1212 = vmatpush1.msra.mxu0 %v1136
    %1213 = vmatprep.subr.mxu0 0.0
    %1214 = vmatpush1.msra.mxu0 %v1131
    %1215 = vmatprep.subr.mxu0 0.0
    %1216 = vmatpush1.msra.mxu0 %v1126
    %1217 = vmatprep.subr.mxu0 0.0
    %1218 = vmatpush1.msra.mxu0 %v1121
    %1219 = vmatprep.subr.mxu0 0.0
    %1220 = vmatpush1.msra.mxu0 %v1116
    %1221 = vmatprep.subr.mxu0 0.0
    %1222 = vmatpush1.msra.mxu0 %v1111
    %1223 = vmatprep.subr.mxu0 0.0
    %1224 = vmatpush1.msra.mxu0 %v1106
    %1225 = vmatprep.subr.mxu0 0.0
    %1226 = vmatpush1.msra.mxu0 %v1101
    %1227 = vmatprep.subr.mxu0 0.0
    %1228 = vmatpush2.msra.mxu0 0.0
    %1229 = vmatprep.subr.mxu0 0.0
    %1230 = vmatpush2.msra.mxu0 0.0
    %1231 = vmatprep.subr.mxu0 0.0
    %1232 = vmatpush2.msra.mxu0 0.0
    %1233 = vmatprep.subr.mxu0 0.0
    %1234 = vmatpush2.msra.mxu0 0.0
    %1235 = vmatprep.subr.mxu0 0.0
    %1236 = vmatpush2.msra.mxu0 0.0
    %1237 = vmatprep.subr.mxu0 0.0
    %1238 = vmatpush2.msra.mxu0 0.0
    %1239 = vmatprep.subr.mxu0 0.0
    %1240 = vmatpush2.msra.mxu0 0.0
    %1241 = vmatprep.subr.mxu0 0.0
    %1242 = vmatpush2.msra.mxu0 0.0
    %1243 = vmatprep.subr.mxu0 0.0
    %1244 = vmatpush2.msra.mxu0 0.0
    %1245 = vmatprep.subr.mxu0 0.0
    %1246 = vmatpush2.msra.mxu0 0.0
    %1247 = vmatprep.subr.mxu0 0.0
    %1248 = vmatpush2.msra.mxu0 0.0
    %1249 = vmatprep.subr.mxu0 0.0
    %1250 = vmatpush2.msra.mxu0 0.0
    %1251 = vmatprep.subr.mxu0 0.0
    %1252 = vmatpush2.msra.mxu0 0.0
    %1253 = vmatprep.subr.mxu0 0.0
    %1254 = vmatpush2.msra.mxu0 0.0
    %1255 = vmatprep.subr.mxu0 0.0
    %1256 = vmatpush2.msra.mxu0 0.0
    %1257 = vmatprep.subr.mxu0 0.0
    %1258 = vmatpush2.msra.mxu0 0.0
    %1259 = vmatprep.mubr.f32.mxu0 0.0
    %1260 = vmatmul.mubr.f32.gmra.mxu0 %v1179
    %v1261 = vpop.f32.mrf.mxu0
    %v1262 = vadd.f32 0.0, %v1261
    %v1263 = vpop.f32.mrf.mxu0
    %1264 = vmatprep.mubr.f32.mxu0 0.0
    %1265 = vmatmul.mubr.f32.gmra.mxu0 %v1180
    %v1266 = vpop.f32.mrf.mxu0
    %v1267 = vadd.f32 0.0, %v1266
    %v1268 = vpop.f32.mrf.mxu0
    %1269 = vmatprep.mubr.f32.mxu0 0.0
    %1270 = vmatmul.mubr.f32.gmra.mxu0 %v1181
    %v1271 = vpop.f32.mrf.mxu0
    %v1272 = vadd.f32 0.0, %v1271
    %v1273 = vpop.f32.mrf.mxu0
    %1274 = vmatprep.mubr.f32.mxu0 0.0
    %1275 = vmatmul.mubr.f32.gmra.mxu0 %v1182
    %v1276 = vpop.f32.mrf.mxu0
    %v1277 = vadd.f32 0.0, %v1276
    %v1278 = vpop.f32.mrf.mxu0
    %1279 = vmatprep.mubr.f32.mxu0 0.0
    %1280 = vmatmul.mubr.f32.gmra.mxu0 %v1183
    %v1281 = vpop.f32.mrf.mxu0
    %v1282 = vadd.f32 0.0, %v1281
    %v1283 = vpop.f32.mrf.mxu0
    %1284 = vmatprep.mubr.f32.mxu0 0.0
    %1285 = vmatmul.mubr.f32.gmra.mxu0 %v1184
    %v1286 = vpop.f32.mrf.mxu0
    %v1287 = vadd.f32 0.0, %v1286
    %v1288 = vpop.f32.mrf.mxu0
    %1289 = vmatprep.mubr.f32.mxu0 0.0
    %1290 = vmatmul.mubr.f32.gmra.mxu0 %v1185
    %v1291 = vpop.f32.mrf.mxu0
    %v1292 = vadd.f32 0.0, %v1291
    %v1293 = vpop.f32.mrf.mxu0
    %1294 = vmatprep.mubr.f32.mxu0 0.0
    %1295 = vmatmul.mubr.f32.gmra.mxu0 %v1186
    %v1296 = vpop.f32.mrf.mxu0
    %v1297 = vadd.f32 0.0, %v1296
    %v1298 = vpop.f32.mrf.mxu0
    %1299 = vmatprep.mubr.f32.mxu0 0.0
    %1300 = vmatmul.mubr.f32.gmra.mxu0 %v1187
    %v1301 = vpop.f32.mrf.mxu0
    %v1302 = vadd.f32 0.0, %v1301
    %v1303 = vpop.f32.mrf.mxu0
    %1304 = vmatprep.mubr.f32.mxu0 0.0
    %1305 = vmatmul.mubr.f32.gmra.mxu0 %v1188
    %v1306 = vpop.f32.mrf.mxu0
    %v1307 = vadd.f32 0.0, %v1306
    %v1308 = vpop.f32.mrf.mxu0
    %1309 = vmatprep.mubr.f32.mxu0 0.0
    %1310 = vmatmul.mubr.f32.gmra.mxu0 %v1189
    %v1311 = vpop.f32.mrf.mxu0
    %v1312 = vadd.f32 0.0, %v1311
    %v1313 = vpop.f32.mrf.mxu0
    %1314 = vmatprep.mubr.f32.mxu0 0.0
    %1315 = vmatmul.mubr.f32.gmra.mxu0 %v1190
    %v1316 = vpop.f32.mrf.mxu0
    %v1317 = vadd.f32 0.0, %v1316
    %v1318 = vpop.f32.mrf.mxu0
    %1319 = vmatprep.mubr.f32.mxu0 0.0
    %1320 = vmatmul.mubr.f32.gmra.mxu0 %v1191
    %v1321 = vpop.f32.mrf.mxu0
    %v1322 = vadd.f32 0.0, %v1321
    %v1323 = vpop.f32.mrf.mxu0
    %1324 = vmatprep.mubr.f32.mxu0 0.0
    %1325 = vmatmul.mubr.f32.gmra.mxu0 %v1192
    %v1326 = vpop.f32.mrf.mxu0
    %v1327 = vadd.f32 0.0, %v1326
    %v1328 = vpop.f32.mrf.mxu0
    %1329 = vmatprep.mubr.f32.mxu0 0.0
    %1330 = vmatmul.mubr.f32.gmra.mxu0 %v1193
    %v1331 = vpop.f32.mrf.mxu0
    %v1332 = vadd.f32 0.0, %v1331
    %v1333 = vpop.f32.mrf.mxu0
    %1334 = vmatprep.mubr.f32.mxu0 0.0
    %1335 = vmatmul.mubr.f32.gmra.mxu0 %v1194
    %v1336 = vpop.f32.mrf.mxu0
    %v1337 = vadd.f32 0.0, %v1336
    %v1338 = vpop.f32.mrf.mxu0
    %1339 = vmatprep.mubr.f32.mxu0 0.0
    %1340 = vmatmul.mubr.f32.gmra.mxu0 %v1101
    %v1341 = vpop.f32.mrf.mxu0
    %v1342 = vadd.f32 0.0, %v1341
    %v1343 = vpop.f32.mrf.mxu0
    %1344 = vmatprep.mubr.f32.mxu0 0.0
    %1345 = vmatmul.mubr.f32.gmra.mxu0 %v1106
    %v1346 = vpop.f32.mrf.mxu0
    %v1347 = vadd.f32 0.0, %v1346
    %v1348 = vpop.f32.mrf.mxu0
    %1349 = vmatprep.mubr.f32.mxu0 0.0
    %1350 = vmatmul.mubr.f32.gmra.mxu0 %v1111
    %v1351 = vpop.f32.mrf.mxu0
    %v1352 = vadd.f32 0.0, %v1351
    %v1353 = vpop.f32.mrf.mxu0
    %1354 = vmatprep.mubr.f32.mxu0 0.0
    %1355 = vmatmul.mubr.f32.gmra.mxu0 %v1116
    %v1356 = vpop.f32.mrf.mxu0
    %v1357 = vadd.f32 0.0, %v1356
    %v1358 = vpop.f32.mrf.mxu0
    %1359 = vmatprep.mubr.f32.mxu0 0.0
    %1360 = vmatmul.mubr.f32.gmra.mxu0 %v1121
    %v1361 = vpop.f32.mrf.mxu0
    %v1362 = vadd.f32 0.0, %v1361
    %v1363 = vpop.f32.mrf.mxu0
    %1364 = vmatprep.mubr.f32.mxu0 0.0
    %1365 = vmatmul.mubr.f32.gmra.mxu0 %v1126
    %v1366 = vpop.f32.mrf.mxu0
    %v1367 = vadd.f32 0.0, %v1366
    %v1368 = vpop.f32.mrf.mxu0
    %1369 = vmatprep.mubr.f32.mxu0 0.0
    %1370 = vmatmul.mubr.f32.gmra.mxu0 %v1131
    %v1371 = vpop.f32.mrf.mxu0
    %v1372 = vadd.f32 0.0, %v1371
    %v1373 = vpop.f32.mrf.mxu0
    %1374 = vmatprep.mubr.f32.mxu0 0.0
    %1375 = vmatmul.mubr.f32.gmra.mxu0 %v1136
    %v1376 = vpop.f32.mrf.mxu0
    %v1377 = vadd.f32 0.0, %v1376
    %v1378 = vpop.f32.mrf.mxu0
    %1379 = vmatprep.mubr.f32.mxu0 0.0
    %1380 = vmatmul.mubr.f32.gmra.mxu0 %v1141
    %v1381 = vpop.f32.mrf.mxu0
    %v1382 = vadd.f32 0.0, %v1381
    %v1383 = vpop.f32.mrf.mxu0
    %1384 = vmatprep.mubr.f32.mxu0 0.0
    %1385 = vmatmul.mubr.f32.gmra.mxu0 %v1146
    %v1386 = vpop.f32.mrf.mxu0
    %v1387 = vadd.f32 0.0, %v1386
    %v1388 = vpop.f32.mrf.mxu0
    %1389 = vmatprep.mubr.f32.mxu0 0.0
    %1390 = vmatmul.mubr.f32.gmra.mxu0 %v1151
    %v1391 = vpop.f32.mrf.mxu0
    %v1392 = vadd.f32 0.0, %v1391
    %v1393 = vpop.f32.mrf.mxu0
    %1394 = vmatprep.mubr.f32.mxu0 0.0
    %1395 = vmatmul.mubr.f32.gmra.mxu0 %v1156
    %v1396 = vpop.f32.mrf.mxu0
    %v1397 = vadd.f32 0.0, %v1396
    %v1398 = vpop.f32.mrf.mxu0
    %1399 = vmatprep.mubr.f32.mxu0 0.0
    %1400 = vmatmul.mubr.f32.gmra.mxu0 %v1161
    %v1401 = vpop.f32.mrf.mxu0
    %v1402 = vadd.f32 0.0, %v1401
    %v1403 = vpop.f32.mrf.mxu0
    %1404 = vmatprep.mubr.f32.mxu0 0.0
    %1405 = vmatmul.mubr.f32.gmra.mxu0 %v1166
    %v1406 = vpop.f32.mrf.mxu0
    %v1407 = vadd.f32 0.0, %v1406
    %v1408 = vpop.f32.mrf.mxu0
    %1409 = vmatprep.mubr.f32.mxu0 0.0
    %1410 = vmatmul.mubr.f32.gmra.mxu0 %v1171
    %v1411 = vpop.f32.mrf.mxu0
    %v1412 = vadd.f32 0.0, %v1411
    %v1413 = vpop.f32.mrf.mxu0
    %1414 = vmatprep.mubr.f32.mxu0 0.0
    %1415 = vmatmul.mubr.f32.gmra.mxu0 %v1176
    %v1416 = vpop.f32.mrf.mxu0
    %v1417 = vadd.f32 0.0, %v1416
    %v1418 = vpop.f32.mrf.mxu0
    %1419 = vdwg.mxu0
    %v1420 = vadd.f32 %v1179, %v1262
    %v1421 = vadd.f32 %v1180, %v1267
    %v1422 = vadd.f32 %v1181, %v1272
    %v1423 = vadd.f32 %v1182, %v1277
    %v1424 = vadd.f32 %v1183, %v1282
    %v1425 = vadd.f32 %v1184, %v1287
    %v1426 = vadd.f32 %v1185, %v1292
    %v1427 = vadd.f32 %v1186, %v1297
    %v1428 = vadd.f32 %v1187, %v1302
    %v1429 = vadd.f32 %v1188, %v1307
    %v1430 = vadd.f32 %v1189, %v1312
    %v1431 = vadd.f32 %v1190, %v1317
    %v1432 = vadd.f32 %v1191, %v1322
    %v1433 = vadd.f32 %v1192, %v1327
    %v1434 = vadd.f32 %v1193, %v1332
    %v1435 = vadd.f32 %v1194, %v1337
    %1436 = vmatprep.subr.mxu0 0.0
    %1437 = vmatpush1.msra.mxu0 %v1417
    %1438 = vmatprep.subr.mxu0 0.0
    %1439 = vmatpush1.msra.mxu0 %v1412
    %1440 = vmatprep.subr.mxu0 0.0
    %1441 = vmatpush1.msra.mxu0 %v1407
    %1442 = vmatprep.subr.mxu0 0.0
    %1443 = vmatpush1.msra.mxu0 %v1402
    %1444 = vmatprep.subr.mxu0 0.0
    %1445 = vmatpush1.msra.mxu0 %v1397
    %1446 = vmatprep.subr.mxu0 0.0
    %1447 = vmatpush1.msra.mxu0 %v1392
    %1448 = vmatprep.subr.mxu0 0.0
    %1449 = vmatpush1.msra.mxu0 %v1387
    %1450 = vmatprep.subr.mxu0 0.0
    %1451 = vmatpush1.msra.mxu0 %v1382
    %1452 = vmatprep.subr.mxu0 0.0
    %1453 = vmatpush1.msra.mxu0 %v1377
    %1454 = vmatprep.subr.mxu0 0.0
    %1455 = vmatpush1.msra.mxu0 %v1372
    %1456 = vmatprep.subr.mxu0 0.0
    %1457 = vmatpush1.msra.mxu0 %v1367
    %1458 = vmatprep.subr.mxu0 0.0
    %1459 = vmatpush1.msra.mxu0 %v1362
    %1460 = vmatprep.subr.mxu0 0.0
    %1461 = vmatpush1.msra.mxu0 %v1357
    %1462 = vmatprep.subr.mxu0 0.0
    %1463 = vmatpush1.msra.mxu0 %v1352
    %1464 = vmatprep.subr.mxu0 0.0
    %1465 = vmatpush1.msra.mxu0 %v1347
    %1466 = vmatprep.subr.mxu0 0.0
    %1467 = vmatpush1.msra.mxu0 %v1342
    %1468 = vmatprep.subr.mxu0 0.0
    %1469 = vmatpush2.msra.mxu0 0.0
    %1470 = vmatprep.subr.mxu0 0.0
    %1471 = vmatpush2.msra.mxu0 0.0
    %1472 = vmatprep.subr.mxu0 0.0
    %1473 = vmatpush2.msra.mxu0 0.0
    %1474 = vmatprep.subr.mxu0 0.0
    %1475 = vmatpush2.msra.mxu0 0.0
    %1476 = vmatprep.subr.mxu0 0.0
    %1477 = vmatpush2.msra.mxu0 0.0
    %1478 = vmatprep.subr.mxu0 0.0
    %1479 = vmatpush2.msra.mxu0 0.0
    %1480 = vmatprep.subr.mxu0 0.0
    %1481 = vmatpush2.msra.mxu0 0.0
    %1482 = vmatprep.subr.mxu0 0.0
    %1483 = vmatpush2.msra.mxu0 0.0
    %1484 = vmatprep.subr.mxu0 0.0
    %1485 = vmatpush2.msra.mxu0 0.0
    %1486 = vmatprep.subr.mxu0 0.0
    %1487 = vmatpush2.msra.mxu0 0.0
    %1488 = vmatprep.subr.mxu0 0.0
    %1489 = vmatpush2.msra.mxu0 0.0
    %1490 = vmatprep.subr.mxu0 0.0
    %1491 = vmatpush2.msra.mxu0 0.0
    %1492 = vmatprep.subr.mxu0 0.0
    %1493 = vmatpush2.msra.mxu0 0.0
    %1494 = vmatprep.subr.mxu0 0.0
    %1495 = vmatpush2.msra.mxu0 0.0
    %1496 = vmatprep.subr.mxu0 0.0
    %1497 = vmatpush2.msra.mxu0 0.0
    %1498 = vmatprep.subr.mxu0 0.0
    %1499 = vmatpush2.msra.mxu0 0.0
    %1500 = vmatprep.mubr.f32.mxu0 0.0
    %1501 = vmatmul.mubr.f32.gmra.mxu0 %v1420
    %v1502 = vpop.f32.mrf.mxu0
    %v1503 = vadd.f32 0.0, %v1502
    %v1504 = vpop.f32.mrf.mxu0
    %1505 = vmatprep.mubr.f32.mxu0 0.0
    %1506 = vmatmul.mubr.f32.gmra.mxu0 %v1421
    %v1507 = vpop.f32.mrf.mxu0
    %v1508 = vadd.f32 0.0, %v1507
    %v1509 = vpop.f32.mrf.mxu0
    %1510 = vmatprep.mubr.f32.mxu0 0.0
    %1511 = vmatmul.mubr.f32.gmra.mxu0 %v1422
    %v1512 = vpop.f32.mrf.mxu0
    %v1513 = vadd.f32 0.0, %v1512
    %v1514 = vpop.f32.mrf.mxu0
    %1515 = vmatprep.mubr.f32.mxu0 0.0
    %1516 = vmatmul.mubr.f32.gmra.mxu0 %v1423
    %v1517 = vpop.f32.mrf.mxu0
    %v1518 = vadd.f32 0.0, %v1517
    %v1519 = vpop.f32.mrf.mxu0
    %1520 = vmatprep.mubr.f32.mxu0 0.0
    %1521 = vmatmul.mubr.f32.gmra.mxu0 %v1424
    %v1522 = vpop.f32.mrf.mxu0
    %v1523 = vadd.f32 0.0, %v1522
    %v1524 = vpop.f32.mrf.mxu0
    %1525 = vmatprep.mubr.f32.mxu0 0.0
    %1526 = vmatmul.mubr.f32.gmra.mxu0 %v1425
    %v1527 = vpop.f32.mrf.mxu0
    %v1528 = vadd.f32 0.0, %v1527
    %v1529 = vpop.f32.mrf.mxu0
    %1530 = vmatprep.mubr.f32.mxu0 0.0
    %1531 = vmatmul.mubr.f32.gmra.mxu0 %v1426
    %v1532 = vpop.f32.mrf.mxu0
    %v1533 = vadd.f32 0.0, %v1532
    %v1534 = vpop.f32.mrf.mxu0
    %1535 = vmatprep.mubr.f32.mxu0 0.0
    %1536 = vmatmul.mubr.f32.gmra.mxu0 %v1427
    %v1537 = vpop.f32.mrf.mxu0
    %v1538 = vadd.f32 0.0, %v1537
    %v1539 = vpop.f32.mrf.mxu0
    %1540 = vmatprep.mubr.f32.mxu0 0.0
    %1541 = vmatmul.mubr.f32.gmra.mxu0 %v1428
    %v1542 = vpop.f32.mrf.mxu0
    %v1543 = vadd.f32 0.0, %v1542
    %v1544 = vpop.f32.mrf.mxu0
    %1545 = vmatprep.mubr.f32.mxu0 0.0
    %1546 = vmatmul.mubr.f32.gmra.mxu0 %v1429
    %v1547 = vpop.f32.mrf.mxu0
    %v1548 = vadd.f32 0.0, %v1547
    %v1549 = vpop.f32.mrf.mxu0
    %1550 = vmatprep.mubr.f32.mxu0 0.0
    %1551 = vmatmul.mubr.f32.gmra.mxu0 %v1430
    %v1552 = vpop.f32.mrf.mxu0
    %v1553 = vadd.f32 0.0, %v1552
    %v1554 = vpop.f32.mrf.mxu0
    %1555 = vmatprep.mubr.f32.mxu0 0.0
    %1556 = vmatmul.mubr.f32.gmra.mxu0 %v1431
    %v1557 = vpop.f32.mrf.mxu0
    %v1558 = vadd.f32 0.0, %v1557
    %v1559 = vpop.f32.mrf.mxu0
    %1560 = vmatprep.mubr.f32.mxu0 0.0
    %1561 = vmatmul.mubr.f32.gmra.mxu0 %v1432
    %v1562 = vpop.f32.mrf.mxu0
    %v1563 = vadd.f32 0.0, %v1562
    %v1564 = vpop.f32.mrf.mxu0
    %1565 = vmatprep.mubr.f32.mxu0 0.0
    %1566 = vmatmul.mubr.f32.gmra.mxu0 %v1433
    %v1567 = vpop.f32.mrf.mxu0
    %v1568 = vadd.f32 0.0, %v1567
    %v1569 = vpop.f32.mrf.mxu0
    %1570 = vmatprep.mubr.f32.mxu0 0.0
    %1571 = vmatmul.mubr.f32.gmra.mxu0 %v1434
    %v1572 = vpop.f32.mrf.mxu0
    %v1573 = vadd.f32 0.0, %v1572
    %v1574 = vpop.f32.mrf.mxu0
    %1575 = vmatprep.mubr.f32.mxu0 0.0
    %1576 = vmatmul.mubr.f32.gmra.mxu0 %v1435
    %v1577 = vpop.f32.mrf.mxu0
    %v1578 = vadd.f32 0.0, %v1577
    %v1579 = vpop.f32.mrf.mxu0
    %1580 = vmatprep.mubr.f32.mxu0 0.0
    %1581 = vmatmul.mubr.f32.gmra.mxu0 %v1342
    %v1582 = vpop.f32.mrf.mxu0
    %v1583 = vadd.f32 0.0, %v1582
    %v1584 = vpop.f32.mrf.mxu0
    %1585 = vmatprep.mubr.f32.mxu0 0.0
    %1586 = vmatmul.mubr.f32.gmra.mxu0 %v1347
    %v1587 = vpop.f32.mrf.mxu0
    %v1588 = vadd.f32 0.0, %v1587
    %v1589 = vpop.f32.mrf.mxu0
    %1590 = vmatprep.mubr.f32.mxu0 0.0
    %1591 = vmatmul.mubr.f32.gmra.mxu0 %v1352
    %v1592 = vpop.f32.mrf.mxu0
    %v1593 = vadd.f32 0.0, %v1592
    %v1594 = vpop.f32.mrf.mxu0
    %1595 = vmatprep.mubr.f32.mxu0 0.0
    %1596 = vmatmul.mubr.f32.gmra.mxu0 %v1357
    %v1597 = vpop.f32.mrf.mxu0
    %v1598 = vadd.f32 0.0, %v1597
    %v1599 = vpop.f32.mrf.mxu0
    %1600 = vmatprep.mubr.f32.mxu0 0.0
    %1601 = vmatmul.mubr.f32.gmra.mxu0 %v1362
    %v1602 = vpop.f32.mrf.mxu0
    %v1603 = vadd.f32 0.0, %v1602
    %v1604 = vpop.f32.mrf.mxu0
    %1605 = vmatprep.mubr.f32.mxu0 0.0
    %1606 = vmatmul.mubr.f32.gmra.mxu0 %v1367
    %v1607 = vpop.f32.mrf.mxu0
    %v1608 = vadd.f32 0.0, %v1607
    %v1609 = vpop.f32.mrf.mxu0
    %1610 = vmatprep.mubr.f32.mxu0 0.0
    %1611 = vmatmul.mubr.f32.gmra.mxu0 %v1372
    %v1612 = vpop.f32.mrf.mxu0
    %v1613 = vadd.f32 0.0, %v1612
    %v1614 = vpop.f32.mrf.mxu0
    %1615 = vmatprep.mubr.f32.mxu0 0.0
    %1616 = vmatmul.mubr.f32.gmra.mxu0 %v1377
    %v1617 = vpop.f32.mrf.mxu0
    %v1618 = vadd.f32 0.0, %v1617
    %v1619 = vpop.f32.mrf.mxu0
    %1620 = vmatprep.mubr.f32.mxu0 0.0
    %1621 = vmatmul.mubr.f32.gmra.mxu0 %v1382
    %v1622 = vpop.f32.mrf.mxu0
    %v1623 = vadd.f32 0.0, %v1622
    %v1624 = vpop.f32.mrf.mxu0
    %1625 = vmatprep.mubr.f32.mxu0 0.0
    %1626 = vmatmul.mubr.f32.gmra.mxu0 %v1387
    %v1627 = vpop.f32.mrf.mxu0
    %v1628 = vadd.f32 0.0, %v1627
    %v1629 = vpop.f32.mrf.mxu0
    %1630 = vmatprep.mubr.f32.mxu0 0.0
    %1631 = vmatmul.mubr.f32.gmra.mxu0 %v1392
    %v1632 = vpop.f32.mrf.mxu0
    %v1633 = vadd.f32 0.0, %v1632
    %v1634 = vpop.f32.mrf.mxu0
    %1635 = vmatprep.mubr.f32.mxu0 0.0
    %1636 = vmatmul.mubr.f32.gmra.mxu0 %v1397
    %v1637 = vpop.f32.mrf.mxu0
    %v1638 = vadd.f32 0.0, %v1637
    %v1639 = vpop.f32.mrf.mxu0
    %1640 = vmatprep.mubr.f32.mxu0 0.0
    %1641 = vmatmul.mubr.f32.gmra.mxu0 %v1402
    %v1642 = vpop.f32.mrf.mxu0
    %v1643 = vadd.f32 0.0, %v1642
    %v1644 = vpop.f32.mrf.mxu0
    %1645 = vmatprep.mubr.f32.mxu0 0.0
    %1646 = vmatmul.mubr.f32.gmra.mxu0 %v1407
    %v1647 = vpop.f32.mrf.mxu0
    %v1648 = vadd.f32 0.0, %v1647
    %v1649 = vpop.f32.mrf.mxu0
    %1650 = vmatprep.mubr.f32.mxu0 0.0
    %1651 = vmatmul.mubr.f32.gmra.mxu0 %v1412
    %v1652 = vpop.f32.mrf.mxu0
    %v1653 = vadd.f32 0.0, %v1652
    %v1654 = vpop.f32.mrf.mxu0
    %1655 = vmatprep.mubr.f32.mxu0 0.0
    %1656 = vmatmul.mubr.f32.gmra.mxu0 %v1417
    %v1657 = vpop.f32.mrf.mxu0
    %v1658 = vadd.f32 0.0, %v1657
    %v1659 = vpop.f32.mrf.mxu0
    %1660 = vdwg.mxu0
    %v1661 = vadd.f32 %v1420, %v1503
    %v1662 = vadd.f32 %v1421, %v1508
    %v1663 = vadd.f32 %v1422, %v1513
    %v1664 = vadd.f32 %v1423, %v1518
    %v1665 = vadd.f32 %v1424, %v1523
    %v1666 = vadd.f32 %v1425, %v1528
    %v1667 = vadd.f32 %v1426, %v1533
    %v1668 = vadd.f32 %v1427, %v1538
    %v1669 = vadd.f32 %v1428, %v1543
    %v1670 = vadd.f32 %v1429, %v1548
    %v1671 = vadd.f32 %v1430, %v1553
    %v1672 = vadd.f32 %v1431, %v1558
    %v1673 = vadd.f32 %v1432, %v1563
    %v1674 = vadd.f32 %v1433, %v1568
    %v1675 = vadd.f32 %v1434, %v1573
    %v1676 = vadd.f32 %v1435, %v1578
    %1677 = vmatprep.subr.mxu0 0.0
    %1678 = vmatpush1.msra.mxu0 %v1658
    %1679 = vmatprep.subr.mxu0 0.0
    %1680 = vmatpush1.msra.mxu0 %v1653
    %1681 = vmatprep.subr.mxu0 0.0
    %1682 = vmatpush1.msra.mxu0 %v1648
    %1683 = vmatprep.subr.mxu0 0.0
    %1684 = vmatpush1.msra.mxu0 %v1643
    %1685 = vmatprep.subr.mxu0 0.0
    %1686 = vmatpush1.msra.mxu0 %v1638
    %1687 = vmatprep.subr.mxu0 0.0
    %1688 = vmatpush1.msra.mxu0 %v1633
    %1689 = vmatprep.subr.mxu0 0.0
    %1690 = vmatpush1.msra.mxu0 %v1628
    %1691 = vmatprep.subr.mxu0 0.0
    %1692 = vmatpush1.msra.mxu0 %v1623
    %1693 = vmatprep.subr.mxu0 0.0
    %1694 = vmatpush1.msra.mxu0 %v1618
    %1695 = vmatprep.subr.mxu0 0.0
    %1696 = vmatpush1.msra.mxu0 %v1613
    %1697 = vmatprep.subr.mxu0 0.0
    %1698 = vmatpush1.msra.mxu0 %v1608
    %1699 = vmatprep.subr.mxu0 0.0
    %1700 = vmatpush1.msra.mxu0 %v1603
    %1701 = vmatprep.subr.mxu0 0.0
    %1702 = vmatpush1.msra.mxu0 %v1598
    %1703 = vmatprep.subr.mxu0 0.0
    %1704 = vmatpush1.msra.mxu0 %v1593
    %1705 = vmatprep.subr.mxu0 0.0
    %1706 = vmatpush1.msra.mxu0 %v1588
    %1707 = vmatprep.subr.mxu0 0.0
    %1708 = vmatpush1.msra.mxu0 %v1583
    %1709 = vmatprep.subr.mxu0 0.0
    %1710 = vmatpush2.msra.mxu0 0.0
    %1711 = vmatprep.subr.mxu0 0.0
    %1712 = vmatpush2.msra.mxu0 0.0
    %1713 = vmatprep.subr.mxu0 0.0
    %1714 = vmatpush2.msra.mxu0 0.0
    %1715 = vmatprep.subr.mxu0 0.0
    %1716 = vmatpush2.msra.mxu0 0.0
    %1717 = vmatprep.subr.mxu0 0.0
    %1718 = vmatpush2.msra.mxu0 0.0
    %1719 = vmatprep.subr.mxu0 0.0
    %1720 = vmatpush2.msra.mxu0 0.0
    %1721 = vmatprep.subr.mxu0 0.0
    %1722 = vmatpush2.msra.mxu0 0.0
    %1723 = vmatprep.subr.mxu0 0.0
    %1724 = vmatpush2.msra.mxu0 0.0
    %1725 = vmatprep.subr.mxu0 0.0
    %1726 = vmatpush2.msra.mxu0 0.0
    %1727 = vmatprep.subr.mxu0 0.0
    %1728 = vmatpush2.msra.mxu0 0.0
    %1729 = vmatprep.subr.mxu0 0.0
    %1730 = vmatpush2.msra.mxu0 0.0
    %1731 = vmatprep.subr.mxu0 0.0
    %1732 = vmatpush2.msra.mxu0 0.0
    %1733 = vmatprep.subr.mxu0 0.0
    %1734 = vmatpush2.msra.mxu0 0.0
    %1735 = vmatprep.subr.mxu0 0.0
    %1736 = vmatpush2.msra.mxu0 0.0
    %1737 = vmatprep.subr.mxu0 0.0
    %1738 = vmatpush2.msra.mxu0 0.0
    %1739 = vmatprep.subr.mxu0 0.0
    %1740 = vmatpush2.msra.mxu0 0.0
    %1741 = vmatprep.mubr.f32.mxu0 0.0
    %1742 = vmatmul.mubr.f32.gmra.mxu0 %v1661
    %v1743 = vpop.f32.mrf.mxu0
    %v1744 = vadd.f32 0.0, %v1743
    %v1745 = vpop.f32.mrf.mxu0
    %1746 = vmatprep.mubr.f32.mxu0 0.0
    %1747 = vmatmul.mubr.f32.gmra.mxu0 %v1662
    %v1748 = vpop.f32.mrf.mxu0
    %v1749 = vadd.f32 0.0, %v1748
    %v1750 = vpop.f32.mrf.mxu0
    %1751 = vmatprep.mubr.f32.mxu0 0.0
    %1752 = vmatmul.mubr.f32.gmra.mxu0 %v1663
    %v1753 = vpop.f32.mrf.mxu0
    %v1754 = vadd.f32 0.0, %v1753
    %v1755 = vpop.f32.mrf.mxu0
    %1756 = vmatprep.mubr.f32.mxu0 0.0
    %1757 = vmatmul.mubr.f32.gmra.mxu0 %v1664
    %v1758 = vpop.f32.mrf.mxu0
    %v1759 = vadd.f32 0.0, %v1758
    %v1760 = vpop.f32.mrf.mxu0
    %1761 = vmatprep.mubr.f32.mxu0 0.0
    %1762 = vmatmul.mubr.f32.gmra.mxu0 %v1665
    %v1763 = vpop.f32.mrf.mxu0
    %v1764 = vadd.f32 0.0, %v1763
    %v1765 = vpop.f32.mrf.mxu0
    %1766 = vmatprep.mubr.f32.mxu0 0.0
    %1767 = vmatmul.mubr.f32.gmra.mxu0 %v1666
    %v1768 = vpop.f32.mrf.mxu0
    %v1769 = vadd.f32 0.0, %v1768
    %v1770 = vpop.f32.mrf.mxu0
    %1771 = vmatprep.mubr.f32.mxu0 0.0
    %1772 = vmatmul.mubr.f32.gmra.mxu0 %v1667
    %v1773 = vpop.f32.mrf.mxu0
    %v1774 = vadd.f32 0.0, %v1773
    %v1775 = vpop.f32.mrf.mxu0
    %1776 = vmatprep.mubr.f32.mxu0 0.0
    %1777 = vmatmul.mubr.f32.gmra.mxu0 %v1668
    %v1778 = vpop.f32.mrf.mxu0
    %v1779 = vadd.f32 0.0, %v1778
    %v1780 = vpop.f32.mrf.mxu0
    %1781 = vmatprep.mubr.f32.mxu0 0.0
    %1782 = vmatmul.mubr.f32.gmra.mxu0 %v1669
    %v1783 = vpop.f32.mrf.mxu0
    %v1784 = vadd.f32 0.0, %v1783
    %v1785 = vpop.f32.mrf.mxu0
    %1786 = vmatprep.mubr.f32.mxu0 0.0
    %1787 = vmatmul.mubr.f32.gmra.mxu0 %v1670
    %v1788 = vpop.f32.mrf.mxu0
    %v1789 = vadd.f32 0.0, %v1788
    %v1790 = vpop.f32.mrf.mxu0
    %1791 = vmatprep.mubr.f32.mxu0 0.0
    %1792 = vmatmul.mubr.f32.gmra.mxu0 %v1671
    %v1793 = vpop.f32.mrf.mxu0
    %v1794 = vadd.f32 0.0, %v1793
    %v1795 = vpop.f32.mrf.mxu0
    %1796 = vmatprep.mubr.f32.mxu0 0.0
    %1797 = vmatmul.mubr.f32.gmra.mxu0 %v1672
    %v1798 = vpop.f32.mrf.mxu0
    %v1799 = vadd.f32 0.0, %v1798
    %v1800 = vpop.f32.mrf.mxu0
    %1801 = vmatprep.mubr.f32.mxu0 0.0
    %1802 = vmatmul.mubr.f32.gmra.mxu0 %v1673
    %v1803 = vpop.f32.mrf.mxu0
    %v1804 = vadd.f32 0.0, %v1803
    %v1805 = vpop.f32.mrf.mxu0
    %1806 = vmatprep.mubr.f32.mxu0 0.0
    %1807 = vmatmul.mubr.f32.gmra.mxu0 %v1674
    %v1808 = vpop.f32.mrf.mxu0
    %v1809 = vadd.f32 0.0, %v1808
    %v1810 = vpop.f32.mrf.mxu0
    %1811 = vmatprep.mubr.f32.mxu0 0.0
    %1812 = vmatmul.mubr.f32.gmra.mxu0 %v1675
    %v1813 = vpop.f32.mrf.mxu0
    %v1814 = vadd.f32 0.0, %v1813
    %v1815 = vpop.f32.mrf.mxu0
    %1816 = vmatprep.mubr.f32.mxu0 0.0
    %1817 = vmatmul.mubr.f32.gmra.mxu0 %v1676
    %v1818 = vpop.f32.mrf.mxu0
    %v1819 = vadd.f32 0.0, %v1818
    %v1820 = vpop.f32.mrf.mxu0
    %1821 = vmatprep.mubr.f32.mxu0 0.0
    %1822 = vmatmul.mubr.f32.gmra.mxu0 %v1583
    %v1823 = vpop.f32.mrf.mxu0
    %v1824 = vadd.f32 0.0, %v1823
    %v1825 = vpop.f32.mrf.mxu0
    %1826 = vmatprep.mubr.f32.mxu0 0.0
    %1827 = vmatmul.mubr.f32.gmra.mxu0 %v1588
    %v1828 = vpop.f32.mrf.mxu0
    %v1829 = vadd.f32 0.0, %v1828
    %v1830 = vpop.f32.mrf.mxu0
    %1831 = vmatprep.mubr.f32.mxu0 0.0
    %1832 = vmatmul.mubr.f32.gmra.mxu0 %v1593
    %v1833 = vpop.f32.mrf.mxu0
    %v1834 = vadd.f32 0.0, %v1833
    %v1835 = vpop.f32.mrf.mxu0
    %1836 = vmatprep.mubr.f32.mxu0 0.0
    %1837 = vmatmul.mubr.f32.gmra.mxu0 %v1598
    %v1838 = vpop.f32.mrf.mxu0
    %v1839 = vadd.f32 0.0, %v1838
    %v1840 = vpop.f32.mrf.mxu0
    %1841 = vmatprep.mubr.f32.mxu0 0.0
    %1842 = vmatmul.mubr.f32.gmra.mxu0 %v1603
    %v1843 = vpop.f32.mrf.mxu0
    %v1844 = vadd.f32 0.0, %v1843
    %v1845 = vpop.f32.mrf.mxu0
    %1846 = vmatprep.mubr.f32.mxu0 0.0
    %1847 = vmatmul.mubr.f32.gmra.mxu0 %v1608
    %v1848 = vpop.f32.mrf.mxu0
    %v1849 = vadd.f32 0.0, %v1848
    %v1850 = vpop.f32.mrf.mxu0
    %1851 = vmatprep.mubr.f32.mxu0 0.0
    %1852 = vmatmul.mubr.f32.gmra.mxu0 %v1613
    %v1853 = vpop.f32.mrf.mxu0
    %v1854 = vadd.f32 0.0, %v1853
    %v1855 = vpop.f32.mrf.mxu0
    %1856 = vmatprep.mubr.f32.mxu0 0.0
    %1857 = vmatmul.mubr.f32.gmra.mxu0 %v1618
    %v1858 = vpop.f32.mrf.mxu0
    %v1859 = vadd.f32 0.0, %v1858
    %v1860 = vpop.f32.mrf.mxu0
    %1861 = vmatprep.mubr.f32.mxu0 0.0
    %1862 = vmatmul.mubr.f32.gmra.mxu0 %v1623
    %v1863 = vpop.f32.mrf.mxu0
    %v1864 = vadd.f32 0.0, %v1863
    %v1865 = vpop.f32.mrf.mxu0
    %1866 = vmatprep.mubr.f32.mxu0 0.0
    %1867 = vmatmul.mubr.f32.gmra.mxu0 %v1628
    %v1868 = vpop.f32.mrf.mxu0
    %v1869 = vadd.f32 0.0, %v1868
    %v1870 = vpop.f32.mrf.mxu0
    %1871 = vmatprep.mubr.f32.mxu0 0.0
    %1872 = vmatmul.mubr.f32.gmra.mxu0 %v1633
    %v1873 = vpop.f32.mrf.mxu0
    %v1874 = vadd.f32 0.0, %v1873
    %v1875 = vpop.f32.mrf.mxu0
    %1876 = vmatprep.mubr.f32.mxu0 0.0
    %1877 = vmatmul.mubr.f32.gmra.mxu0 %v1638
    %v1878 = vpop.f32.mrf.mxu0
    %v1879 = vadd.f32 0.0, %v1878
    %v1880 = vpop.f32.mrf.mxu0
    %1881 = vmatprep.mubr.f32.mxu0 0.0
    %1882 = vmatmul.mubr.f32.gmra.mxu0 %v1643
    %v1883 = vpop.f32.mrf.mxu0
    %v1884 = vadd.f32 0.0, %v1883
    %v1885 = vpop.f32.mrf.mxu0
    %1886 = vmatprep.mubr.f32.mxu0 0.0
    %1887 = vmatmul.mubr.f32.gmra.mxu0 %v1648
    %v1888 = vpop.f32.mrf.mxu0
    %v1889 = vadd.f32 0.0, %v1888
    %v1890 = vpop.f32.mrf.mxu0
    %1891 = vmatprep.mubr.f32.mxu0 0.0
    %1892 = vmatmul.mubr.f32.gmra.mxu0 %v1653
    %v1893 = vpop.f32.mrf.mxu0
    %v1894 = vadd.f32 0.0, %v1893
    %v1895 = vpop.f32.mrf.mxu0
    %1896 = vmatprep.mubr.f32.mxu0 0.0
    %1897 = vmatmul.mubr.f32.gmra.mxu0 %v1658
    %v1898 = vpop.f32.mrf.mxu0
    %v1899 = vadd.f32 0.0, %v1898
    %v1900 = vpop.f32.mrf.mxu0
    %1901 = vdwg.mxu0
    %v1902 = vadd.f32 %v1661, %v1744
    %v1903 = vadd.f32 %v1662, %v1749
    %v1904 = vadd.f32 %v1663, %v1754
    %v1905 = vadd.f32 %v1664, %v1759
    %v1906 = vadd.f32 %v1665, %v1764
    %v1907 = vadd.f32 %v1666, %v1769
    %v1908 = vadd.f32 %v1667, %v1774
    %v1909 = vadd.f32 %v1668, %v1779
    %v1910 = vadd.f32 %v1669, %v1784
    %v1911 = vadd.f32 %v1670, %v1789
    %v1912 = vadd.f32 %v1671, %v1794
    %v1913 = vadd.f32 %v1672, %v1799
    %v1914 = vadd.f32 %v1673, %v1804
    %v1915 = vadd.f32 %v1674, %v1809
    %v1916 = vadd.f32 %v1675, %v1814
    %v1917 = vadd.f32 %v1676, %v1819
    %1918 = vmatprep.subr.mxu0 0.0
    %1919 = vmatpush1.msra.mxu0 %v1899
    %1920 = vmatprep.subr.mxu0 0.0
    %1921 = vmatpush1.msra.mxu0 %v1894
    %1922 = vmatprep.subr.mxu0 0.0
    %1923 = vmatpush1.msra.mxu0 %v1889
    %1924 = vmatprep.subr.mxu0 0.0
    %1925 = vmatpush1.msra.mxu0 %v1884
    %1926 = vmatprep.subr.mxu0 0.0
    %1927 = vmatpush1.msra.mxu0 %v1879
    %1928 = vmatprep.subr.mxu0 0.0
    %1929 = vmatpush1.msra.mxu0 %v1874
    %1930 = vmatprep.subr.mxu0 0.0
    %1931 = vmatpush1.msra.mxu0 %v1869
    %1932 = vmatprep.subr.mxu0 0.0
    %1933 = vmatpush1.msra.mxu0 %v1864
    %1934 = vmatprep.subr.mxu0 0.0
    %1935 = vmatpush1.msra.mxu0 %v1859
    %1936 = vmatprep.subr.mxu0 0.0
    %1937 = vmatpush1.msra.mxu0 %v1854
    %1938 = vmatprep.subr.mxu0 0.0
    %1939 = vmatpush1.msra.mxu0 %v1849
    %1940 = vmatprep.subr.mxu0 0.0
    %1941 = vmatpush1.msra.mxu0 %v1844
    %1942 = vmatprep.subr.mxu0 0.0
    %1943 = vmatpush1.msra.mxu0 %v1839
    %1944 = vmatprep.subr.mxu0 0.0
    %1945 = vmatpush1.msra.mxu0 %v1834
    %1946 = vmatprep.subr.mxu0 0.0
    %1947 = vmatpush1.msra.mxu0 %v1829
    %1948 = vmatprep.subr.mxu0 0.0
    %1949 = vmatpush1.msra.mxu0 %v1824
    %1950 = vmatprep.subr.mxu0 0.0
    %1951 = vmatpush2.msra.mxu0 0.0
    %1952 = vmatprep.subr.mxu0 0.0
    %1953 = vmatpush2.msra.mxu0 0.0
    %1954 = vmatprep.subr.mxu0 0.0
    %1955 = vmatpush2.msra.mxu0 0.0
    %1956 = vmatprep.subr.mxu0 0.0
    %1957 = vmatpush2.msra.mxu0 0.0
    %1958 = vmatprep.subr.mxu0 0.0
    %1959 = vmatpush2.msra.mxu0 0.0
    %1960 = vmatprep.subr.mxu0 0.0
    %1961 = vmatpush2.msra.mxu0 0.0
    %1962 = vmatprep.subr.mxu0 0.0
    %1963 = vmatpush2.msra.mxu0 0.0
    %1964 = vmatprep.subr.mxu0 0.0
    %1965 = vmatpush2.msra.mxu0 0.0
    %1966 = vmatprep.subr.mxu0 0.0
    %1967 = vmatpush2.msra.mxu0 0.0
    %1968 = vmatprep.subr.mxu0 0.0
    %1969 = vmatpush2.msra.mxu0 0.0
    %1970 = vmatprep.subr.mxu0 0.0
    %1971 = vmatpush2.msra.mxu0 0.0
    %1972 = vmatprep.subr.mxu0 0.0
    %1973 = vmatpush2.msra.mxu0 0.0
    %1974 = vmatprep.subr.mxu0 0.0
    %1975 = vmatpush2.msra.mxu0 0.0
    %1976 = vmatprep.subr.mxu0 0.0
    %1977 = vmatpush2.msra.mxu0 0.0
    %1978 = vmatprep.subr.mxu0 0.0
    %1979 = vmatpush2.msra.mxu0 0.0
    %1980 = vmatprep.subr.mxu0 0.0
    %1981 = vmatpush2.msra.mxu0 0.0
    %1982 = vmatprep.mubr.f32.mxu0 0.0
    %1983 = vmatmul.mubr.f32.gmra.mxu0 %v1902
    %v1984 = vpop.f32.mrf.mxu0
    %v1985 = vadd.f32 0.0, %v1984
    %v1986 = vpop.f32.mrf.mxu0
    %1987 = vmatprep.mubr.f32.mxu0 0.0
    %1988 = vmatmul.mubr.f32.gmra.mxu0 %v1903
    %v1989 = vpop.f32.mrf.mxu0
    %v1990 = vadd.f32 0.0, %v1989
    %v1991 = vpop.f32.mrf.mxu0
    %1992 = vmatprep.mubr.f32.mxu0 0.0
    %1993 = vmatmul.mubr.f32.gmra.mxu0 %v1904
    %v1994 = vpop.f32.mrf.mxu0
    %v1995 = vadd.f32 0.0, %v1994
    %v1996 = vpop.f32.mrf.mxu0
    %1997 = vmatprep.mubr.f32.mxu0 0.0
    %1998 = vmatmul.mubr.f32.gmra.mxu0 %v1905
    %v1999 = vpop.f32.mrf.mxu0
    %v2000 = vadd.f32 0.0, %v1999
    %v2001 = vpop.f32.mrf.mxu0
    %2002 = vmatprep.mubr.f32.mxu0 0.0
    %2003 = vmatmul.mubr.f32.gmra.mxu0 %v1906
    %v2004 = vpop.f32.mrf.mxu0
    %v2005 = vadd.f32 0.0, %v2004
    %v2006 = vpop.f32.mrf.mxu0
    %2007 = vmatprep.mubr.f32.mxu0 0.0
    %2008 = vmatmul.mubr.f32.gmra.mxu0 %v1907
    %v2009 = vpop.f32.mrf.mxu0
    %v2010 = vadd.f32 0.0, %v2009
    %v2011 = vpop.f32.mrf.mxu0
    %2012 = vmatprep.mubr.f32.mxu0 0.0
    %2013 = vmatmul.mubr.f32.gmra.mxu0 %v1908
    %v2014 = vpop.f32.mrf.mxu0
    %v2015 = vadd.f32 0.0, %v2014
    %v2016 = vpop.f32.mrf.mxu0
    %2017 = vmatprep.mubr.f32.mxu0 0.0
    %2018 = vmatmul.mubr.f32.gmra.mxu0 %v1909
    %v2019 = vpop.f32.mrf.mxu0
    %v2020 = vadd.f32 0.0, %v2019
    %v2021 = vpop.f32.mrf.mxu0
    %2022 = vmatprep.mubr.f32.mxu0 0.0
    %2023 = vmatmul.mubr.f32.gmra.mxu0 %v1910
    %v2024 = vpop.f32.mrf.mxu0
    %v2025 = vadd.f32 0.0, %v2024
    %v2026 = vpop.f32.mrf.mxu0
    %2027 = vmatprep.mubr.f32.mxu0 0.0
    %2028 = vmatmul.mubr.f32.gmra.mxu0 %v1911
    %v2029 = vpop.f32.mrf.mxu0
    %v2030 = vadd.f32 0.0, %v2029
    %v2031 = vpop.f32.mrf.mxu0
    %2032 = vmatprep.mubr.f32.mxu0 0.0
    %2033 = vmatmul.mubr.f32.gmra.mxu0 %v1912
    %v2034 = vpop.f32.mrf.mxu0
    %v2035 = vadd.f32 0.0, %v2034
    %v2036 = vpop.f32.mrf.mxu0
    %2037 = vmatprep.mubr.f32.mxu0 0.0
    %2038 = vmatmul.mubr.f32.gmra.mxu0 %v1913
    %v2039 = vpop.f32.mrf.mxu0
    %v2040 = vadd.f32 0.0, %v2039
    %v2041 = vpop.f32.mrf.mxu0
    %2042 = vmatprep.mubr.f32.mxu0 0.0
    %2043 = vmatmul.mubr.f32.gmra.mxu0 %v1914
    %v2044 = vpop.f32.mrf.mxu0
    %v2045 = vadd.f32 0.0, %v2044
    %v2046 = vpop.f32.mrf.mxu0
    %2047 = vmatprep.mubr.f32.mxu0 0.0
    %2048 = vmatmul.mubr.f32.gmra.mxu0 %v1915
    %v2049 = vpop.f32.mrf.mxu0
    %v2050 = vadd.f32 0.0, %v2049
    %v2051 = vpop.f32.mrf.mxu0
    %2052 = vmatprep.mubr.f32.mxu0 0.0
    %2053 = vmatmul.mubr.f32.gmra.mxu0 %v1916
    %v2054 = vpop.f32.mrf.mxu0
    %v2055 = vadd.f32 0.0, %v2054
    %v2056 = vpop.f32.mrf.mxu0
    %2057 = vmatprep.mubr.f32.mxu0 0.0
    %2058 = vmatmul.mubr.f32.gmra.mxu0 %v1917
    %v2059 = vpop.f32.mrf.mxu0
    %v2060 = vadd.f32 0.0, %v2059
    %v2061 = vpop.f32.mrf.mxu0
    %2062 = vmatprep.mubr.f32.mxu0 0.0
    %2063 = vmatmul.mubr.f32.gmra.mxu0 %v1824
    %v2064 = vpop.f32.mrf.mxu0
    %v2065 = vadd.f32 0.0, %v2064
    %v2066 = vpop.f32.mrf.mxu0
    %2067 = vmatprep.mubr.f32.mxu0 0.0
    %2068 = vmatmul.mubr.f32.gmra.mxu0 %v1829
    %v2069 = vpop.f32.mrf.mxu0
    %v2070 = vadd.f32 0.0, %v2069
    %v2071 = vpop.f32.mrf.mxu0
    %2072 = vmatprep.mubr.f32.mxu0 0.0
    %2073 = vmatmul.mubr.f32.gmra.mxu0 %v1834
    %v2074 = vpop.f32.mrf.mxu0
    %v2075 = vadd.f32 0.0, %v2074
    %v2076 = vpop.f32.mrf.mxu0
    %2077 = vmatprep.mubr.f32.mxu0 0.0
    %2078 = vmatmul.mubr.f32.gmra.mxu0 %v1839
    %v2079 = vpop.f32.mrf.mxu0
    %v2080 = vadd.f32 0.0, %v2079
    %v2081 = vpop.f32.mrf.mxu0
    %2082 = vmatprep.mubr.f32.mxu0 0.0
    %2083 = vmatmul.mubr.f32.gmra.mxu0 %v1844
    %v2084 = vpop.f32.mrf.mxu0
    %v2085 = vadd.f32 0.0, %v2084
    %v2086 = vpop.f32.mrf.mxu0
    %2087 = vmatprep.mubr.f32.mxu0 0.0
    %2088 = vmatmul.mubr.f32.gmra.mxu0 %v1849
    %v2089 = vpop.f32.mrf.mxu0
    %v2090 = vadd.f32 0.0, %v2089
    %v2091 = vpop.f32.mrf.mxu0
    %2092 = vmatprep.mubr.f32.mxu0 0.0
    %2093 = vmatmul.mubr.f32.gmra.mxu0 %v1854
    %v2094 = vpop.f32.mrf.mxu0
    %v2095 = vadd.f32 0.0, %v2094
    %v2096 = vpop.f32.mrf.mxu0
    %2097 = vmatprep.mubr.f32.mxu0 0.0
    %2098 = vmatmul.mubr.f32.gmra.mxu0 %v1859
    %v2099 = vpop.f32.mrf.mxu0
    %v2100 = vadd.f32 0.0, %v2099
    %v2101 = vpop.f32.mrf.mxu0
    %2102 = vmatprep.mubr.f32.mxu0 0.0
    %2103 = vmatmul.mubr.f32.gmra.mxu0 %v1864
    %v2104 = vpop.f32.mrf.mxu0
    %v2105 = vadd.f32 0.0, %v2104
    %v2106 = vpop.f32.mrf.mxu0
    %2107 = vmatprep.mubr.f32.mxu0 0.0
    %2108 = vmatmul.mubr.f32.gmra.mxu0 %v1869
    %v2109 = vpop.f32.mrf.mxu0
    %v2110 = vadd.f32 0.0, %v2109
    %v2111 = vpop.f32.mrf.mxu0
    %2112 = vmatprep.mubr.f32.mxu0 0.0
    %2113 = vmatmul.mubr.f32.gmra.mxu0 %v1874
    %v2114 = vpop.f32.mrf.mxu0
    %v2115 = vadd.f32 0.0, %v2114
    %v2116 = vpop.f32.mrf.mxu0
    %2117 = vmatprep.mubr.f32.mxu0 0.0
    %2118 = vmatmul.mubr.f32.gmra.mxu0 %v1879
    %v2119 = vpop.f32.mrf.mxu0
    %v2120 = vadd.f32 0.0, %v2119
    %v2121 = vpop.f32.mrf.mxu0
    %2122 = vmatprep.mubr.f32.mxu0 0.0
    %2123 = vmatmul.mubr.f32.gmra.mxu0 %v1884
    %v2124 = vpop.f32.mrf.mxu0
    %v2125 = vadd.f32 0.0, %v2124
    %v2126 = vpop.f32.mrf.mxu0
    %2127 = vmatprep.mubr.f32.mxu0 0.0
    %2128 = vmatmul.mubr.f32.gmra.mxu0 %v1889
    %v2129 = vpop.f32.mrf.mxu0
    %v2130 = vadd.f32 0.0, %v2129
    %v2131 = vpop.f32.mrf.mxu0
    %2132 = vmatprep.mubr.f32.mxu0 0.0
    %2133 = vmatmul.mubr.f32.gmra.mxu0 %v1894
    %v2134 = vpop.f32.mrf.mxu0
    %v2135 = vadd.f32 0.0, %v2134
    %v2136 = vpop.f32.mrf.mxu0
    %2137 = vmatprep.mubr.f32.mxu0 0.0
    %2138 = vmatmul.mubr.f32.gmra.mxu0 %v1899
    %v2139 = vpop.f32.mrf.mxu0
    %v2140 = vadd.f32 0.0, %v2139
    %v2141 = vpop.f32.mrf.mxu0
    %2142 = vdwg.mxu0
    %v2143 = vadd.f32 %v1902, %v1985
    %v2144 = vadd.f32 %v1903, %v1990
    %v2145 = vadd.f32 %v1904, %v1995
    %v2146 = vadd.f32 %v1905, %v2000
    %v2147 = vadd.f32 %v1906, %v2005
    %v2148 = vadd.f32 %v1907, %v2010
    %v2149 = vadd.f32 %v1908, %v2015
    %v2150 = vadd.f32 %v1909, %v2020
    %v2151 = vadd.f32 %v1910, %v2025
    %v2152 = vadd.f32 %v1911, %v2030
    %v2153 = vadd.f32 %v1912, %v2035
    %v2154 = vadd.f32 %v1913, %v2040
    %v2155 = vadd.f32 %v1914, %v2045
    %v2156 = vadd.f32 %v1915, %v2050
    %v2157 = vadd.f32 %v1916, %v2055
    %v2158 = vadd.f32 %v1917, %v2060
    %2159 = vmatprep.subr.mxu0 0.0
    %2160 = vmatpush1.msra.mxu0 %v2158
    %2161 = vmatprep.subr.mxu0 0.0
    %2162 = vmatpush1.msra.mxu0 %v2157
    %2163 = vmatprep.subr.mxu0 0.0
    %2164 = vmatpush1.msra.mxu0 %v2156
    %2165 = vmatprep.subr.mxu0 0.0
    %2166 = vmatpush1.msra.mxu0 %v2155
    %2167 = vmatprep.subr.mxu0 0.0
    %2168 = vmatpush1.msra.mxu0 %v2154
    %2169 = vmatprep.subr.mxu0 0.0
    %2170 = vmatpush1.msra.mxu0 %v2153
    %2171 = vmatprep.subr.mxu0 0.0
    %2172 = vmatpush1.msra.mxu0 %v2152
    %2173 = vmatprep.subr.mxu0 0.0
    %2174 = vmatpush1.msra.mxu0 %v2151
    %2175 = vmatprep.subr.mxu0 0.0
    %2176 = vmatpush1.msra.mxu0 %v2150
    %2177 = vmatprep.subr.mxu0 0.0
    %2178 = vmatpush1.msra.mxu0 %v2149
    %2179 = vmatprep.subr.mxu0 0.0
    %2180 = vmatpush1.msra.mxu0 %v2148
    %2181 = vmatprep.subr.mxu0 0.0
    %2182 = vmatpush1.msra.mxu0 %v2147
    %2183 = vmatprep.subr.mxu0 0.0
    %2184 = vmatpush1.msra.mxu0 %v2146
    %2185 = vmatprep.subr.mxu0 0.0
    %2186 = vmatpush1.msra.mxu0 %v2145
    %2187 = vmatprep.subr.mxu0 0.0
    %2188 = vmatpush1.msra.mxu0 %v2144
    %2189 = vmatprep.subr.mxu0 0.0
    %2190 = vmatpush1.msra.mxu0 %v2143
    %2191 = vmatprep.subr.mxu0 0.0
    %2192 = vmatpush2.msra.mxu0 0.0
    %2193 = vmatprep.subr.mxu0 0.0
    %2194 = vmatpush2.msra.mxu0 0.0
    %2195 = vmatprep.subr.mxu0 0.0
    %2196 = vmatpush2.msra.mxu0 0.0
    %2197 = vmatprep.subr.mxu0 0.0
    %2198 = vmatpush2.msra.mxu0 0.0
    %2199 = vmatprep.subr.mxu0 0.0
    %2200 = vmatpush2.msra.mxu0 0.0
    %2201 = vmatprep.subr.mxu0 0.0
    %2202 = vmatpush2.msra.mxu0 0.0
    %2203 = vmatprep.subr.mxu0 0.0
    %2204 = vmatpush2.msra.mxu0 0.0
    %2205 = vmatprep.subr.mxu0 0.0
    %2206 = vmatpush2.msra.mxu0 0.0
    %2207 = vmatprep.subr.mxu0 0.0
    %2208 = vmatpush2.msra.mxu0 0.0
    %2209 = vmatprep.subr.mxu0 0.0
    %2210 = vmatpush2.msra.mxu0 0.0
    %2211 = vmatprep.subr.mxu0 0.0
    %2212 = vmatpush2.msra.mxu0 0.0
    %2213 = vmatprep.subr.mxu0 0.0
    %2214 = vmatpush2.msra.mxu0 0.0
    %2215 = vmatprep.subr.mxu0 0.0
    %2216 = vmatpush2.msra.mxu0 0.0
    %2217 = vmatprep.subr.mxu0 0.0
    %2218 = vmatpush2.msra.mxu0 0.0
    %2219 = vmatprep.subr.mxu0 0.0
    %2220 = vmatpush2.msra.mxu0 0.0
    %2221 = vmatprep.subr.mxu0 0.0
    %2222 = vmatpush2.msra.mxu0 0.0
    %2223 = vmatprep.mubr.f32.mxu0 0.0
    %2224 = vmatmul.mubr.f32.gmra.mxu0 %v953
    %v2225 = vpop.f32.mrf.mxu0
    %v2226 = vadd.f32 0.0, %v2225
    %v2227 = vpop.f32.mrf.mxu0
    %2228 = vdwg.mxu0
    %2229 = vmatprep.subr.mxu0 0.0
    %2230 = vmatpush1.msra.mxu0 %v2140
    %2231 = vmatprep.subr.mxu0 0.0
    %2232 = vmatpush1.msra.mxu0 %v2135
    %2233 = vmatprep.subr.mxu0 0.0
    %2234 = vmatpush1.msra.mxu0 %v2130
    %2235 = vmatprep.subr.mxu0 0.0
    %2236 = vmatpush1.msra.mxu0 %v2125
    %2237 = vmatprep.subr.mxu0 0.0
    %2238 = vmatpush1.msra.mxu0 %v2120
    %2239 = vmatprep.subr.mxu0 0.0
    %2240 = vmatpush1.msra.mxu0 %v2115
    %2241 = vmatprep.subr.mxu0 0.0
    %2242 = vmatpush1.msra.mxu0 %v2110
    %2243 = vmatprep.subr.mxu0 0.0
    %2244 = vmatpush1.msra.mxu0 %v2105
    %2245 = vmatprep.subr.mxu0 0.0
    %2246 = vmatpush1.msra.mxu0 %v2100
    %2247 = vmatprep.subr.mxu0 0.0
    %2248 = vmatpush1.msra.mxu0 %v2095
    %2249 = vmatprep.subr.mxu0 0.0
    %2250 = vmatpush1.msra.mxu0 %v2090
    %2251 = vmatprep.subr.mxu0 0.0
    %2252 = vmatpush1.msra.mxu0 %v2085
    %2253 = vmatprep.subr.mxu0 0.0
    %2254 = vmatpush1.msra.mxu0 %v2080
    %2255 = vmatprep.subr.mxu0 0.0
    %2256 = vmatpush1.msra.mxu0 %v2075
    %2257 = vmatprep.subr.mxu0 0.0
    %2258 = vmatpush1.msra.mxu0 %v2070
    %2259 = vmatprep.subr.mxu0 0.0
    %2260 = vmatpush1.msra.mxu0 %v2065
    %2261 = vmatprep.subr.mxu0 0.0
    %2262 = vmatpush2.msra.mxu0 0.0
    %2263 = vmatprep.subr.mxu0 0.0
    %2264 = vmatpush2.msra.mxu0 0.0
    %2265 = vmatprep.subr.mxu0 0.0
    %2266 = vmatpush2.msra.mxu0 0.0
    %2267 = vmatprep.subr.mxu0 0.0
    %2268 = vmatpush2.msra.mxu0 0.0
    %2269 = vmatprep.subr.mxu0 0.0
    %2270 = vmatpush2.msra.mxu0 0.0
    %2271 = vmatprep.subr.mxu0 0.0
    %2272 = vmatpush2.msra.mxu0 0.0
    %2273 = vmatprep.subr.mxu0 0.0
    %2274 = vmatpush2.msra.mxu0 0.0
    %2275 = vmatprep.subr.mxu0 0.0
    %2276 = vmatpush2.msra.mxu0 0.0
    %2277 = vmatprep.subr.mxu0 0.0
    %2278 = vmatpush2.msra.mxu0 0.0
    %2279 = vmatprep.subr.mxu0 0.0
    %2280 = vmatpush2.msra.mxu0 0.0
    %2281 = vmatprep.subr.mxu0 0.0
    %2282 = vmatpush2.msra.mxu0 0.0
    %2283 = vmatprep.subr.mxu0 0.0
    %2284 = vmatpush2.msra.mxu0 0.0
    %2285 = vmatprep.subr.mxu0 0.0
    %2286 = vmatpush2.msra.mxu0 0.0
    %2287 = vmatprep.subr.mxu0 0.0
    %2288 = vmatpush2.msra.mxu0 0.0
    %2289 = vmatprep.subr.mxu0 0.0
    %2290 = vmatpush2.msra.mxu0 0.0
    %2291 = vmatprep.subr.mxu0 0.0
    %2292 = vmatpush2.msra.mxu0 0.0
    %2293 = vmatprep.mubr.f32.mxu0 0.0
    %2294 = vmatmul.mubr.f32.gmra.mxu0 %v83
    %v2295 = vpop.f32.mrf.mxu0
    %v2296 = vadd.f32 %v2226, %v2295
    %v2297 = vpop.f32.mrf.mxu0
    %2298 = vdwg.mxu0
    %s2299 = scalar_lea.vmem [#allocation10], 8
    %2300 = vst [vmem:[%s2299] sm:$0xff] %v2296
    %2301 = vmatprep.subr.mxu0 0.0
    %2302 = vmatpush1.msra.mxu0 %v2140
    %2303 = vmatprep.subr.mxu0 0.0
    %2304 = vmatpush1.msra.mxu0 %v2135
    %2305 = vmatprep.subr.mxu0 0.0
    %2306 = vmatpush1.msra.mxu0 %v2130
    %2307 = vmatprep.subr.mxu0 0.0
    %2308 = vmatpush1.msra.mxu0 %v2125
    %2309 = vmatprep.subr.mxu0 0.0
    %2310 = vmatpush1.msra.mxu0 %v2120
    %2311 = vmatprep.subr.mxu0 0.0
    %2312 = vmatpush1.msra.mxu0 %v2115
    %2313 = vmatprep.subr.mxu0 0.0
    %2314 = vmatpush1.msra.mxu0 %v2110
    %2315 = vmatprep.subr.mxu0 0.0
    %2316 = vmatpush1.msra.mxu0 %v2105
    %2317 = vmatprep.subr.mxu0 0.0
    %2318 = vmatpush1.msra.mxu0 %v2100
    %2319 = vmatprep.subr.mxu0 0.0
    %2320 = vmatpush1.msra.mxu0 %v2095
    %2321 = vmatprep.subr.mxu0 0.0
    %2322 = vmatpush1.msra.mxu0 %v2090
    %2323 = vmatprep.subr.mxu0 0.0
    %2324 = vmatpush1.msra.mxu0 %v2085
    %2325 = vmatprep.subr.mxu0 0.0
    %2326 = vmatpush1.msra.mxu0 %v2080
    %2327 = vmatprep.subr.mxu0 0.0
    %2328 = vmatpush1.msra.mxu0 %v2075
    %2329 = vmatprep.subr.mxu0 0.0
    %2330 = vmatpush1.msra.mxu0 %v2070
    %2331 = vmatprep.subr.mxu0 0.0
    %2332 = vmatpush1.msra.mxu0 %v2065
    %2333 = vmatprep.subr.mxu0 0.0
    %2334 = vmatpush2.msra.mxu0 0.0
    %2335 = vmatprep.subr.mxu0 0.0
    %2336 = vmatpush2.msra.mxu0 0.0
    %2337 = vmatprep.subr.mxu0 0.0
    %2338 = vmatpush2.msra.mxu0 0.0
    %2339 = vmatprep.subr.mxu0 0.0
    %2340 = vmatpush2.msra.mxu0 0.0
    %2341 = vmatprep.subr.mxu0 0.0
    %2342 = vmatpush2.msra.mxu0 0.0
    %2343 = vmatprep.subr.mxu0 0.0
    %2344 = vmatpush2.msra.mxu0 0.0
    %2345 = vmatprep.subr.mxu0 0.0
    %2346 = vmatpush2.msra.mxu0 0.0
    %2347 = vmatprep.subr.mxu0 0.0
    %2348 = vmatpush2.msra.mxu0 0.0
    %2349 = vmatprep.subr.mxu0 0.0
    %2350 = vmatpush2.msra.mxu0 0.0
    %2351 = vmatprep.subr.mxu0 0.0
    %2352 = vmatpush2.msra.mxu0 0.0
    %2353 = vmatprep.subr.mxu0 0.0
    %2354 = vmatpush2.msra.mxu0 0.0
    %2355 = vmatprep.subr.mxu0 0.0
    %2356 = vmatpush2.msra.mxu0 0.0
    %2357 = vmatprep.subr.mxu0 0.0
    %2358 = vmatpush2.msra.mxu0 0.0
    %2359 = vmatprep.subr.mxu0 0.0
    %2360 = vmatpush2.msra.mxu0 0.0
    %2361 = vmatprep.subr.mxu0 0.0
    %2362 = vmatpush2.msra.mxu0 0.0
    %2363 = vmatprep.subr.mxu0 0.0
    %2364 = vmatpush2.msra.mxu0 0.0
    %2365 = vmatprep.mubr.f32.mxu0 0.0
    %2366 = vmatmul.mubr.f32.gmra.mxu0 %v2296
    %v2367 = vpop.f32.mrf.mxu0
    %v2368 = vadd.f32 %v2226, %v2367
    %v2369 = vpop.f32.mrf.mxu0
    %2370 = vdwg.mxu0
    %s2371 = scalar_lea.vmem [#allocation10], 16
    %2372 = vst [vmem:[%s2371] sm:$0xff] %v2368
    %2373 = vmatprep.subr.mxu0 0.0
    %2374 = vmatpush1.msra.mxu0 %v2140
    %2375 = vmatprep.subr.mxu0 0.0
    %2376 = vmatpush1.msra.mxu0 %v2135
    %2377 = vmatprep.subr.mxu0 0.0
    %2378 = vmatpush1.msra.mxu0 %v2130
    %2379 = vmatprep.subr.mxu0 0.0
    %2380 = vmatpush1.msra.mxu0 %v2125
    %2381 = vmatprep.subr.mxu0 0.0
    %2382 = vmatpush1.msra.mxu0 %v2120
    %2383 = vmatprep.subr.mxu0 0.0
    %2384 = vmatpush1.msra.mxu0 %v2115
    %2385 = vmatprep.subr.mxu0 0.0
    %2386 = vmatpush1.msra.mxu0 %v2110
    %2387 = vmatprep.subr.mxu0 0.0
    %2388 = vmatpush1.msra.mxu0 %v2105
    %2389 = vmatprep.subr.mxu0 0.0
    %2390 = vmatpush1.msra.mxu0 %v2100
    %2391 = vmatprep.subr.mxu0 0.0
    %2392 = vmatpush1.msra.mxu0 %v2095
    %2393 = vmatprep.subr.mxu0 0.0
    %2394 = vmatpush1.msra.mxu0 %v2090
    %2395 = vmatprep.subr.mxu0 0.0
    %2396 = vmatpush1.msra.mxu0 %v2085
    %2397 = vmatprep.subr.mxu0 0.0
    %2398 = vmatpush1.msra.mxu0 %v2080
    %2399 = vmatprep.subr.mxu0 0.0
    %2400 = vmatpush1.msra.mxu0 %v2075
    %2401 = vmatprep.subr.mxu0 0.0
    %2402 = vmatpush1.msra.mxu0 %v2070
    %2403 = vmatprep.subr.mxu0 0.0
    %2404 = vmatpush1.msra.mxu0 %v2065
    %2405 = vmatprep.subr.mxu0 0.0
    %2406 = vmatpush2.msra.mxu0 0.0
    %2407 = vmatprep.subr.mxu0 0.0
    %2408 = vmatpush2.msra.mxu0 0.0
    %2409 = vmatprep.subr.mxu0 0.0
    %2410 = vmatpush2.msra.mxu0 0.0
    %2411 = vmatprep.subr.mxu0 0.0
    %2412 = vmatpush2.msra.mxu0 0.0
    %2413 = vmatprep.subr.mxu0 0.0
    %2414 = vmatpush2.msra.mxu0 0.0
    %2415 = vmatprep.subr.mxu0 0.0
    %2416 = vmatpush2.msra.mxu0 0.0
    %2417 = vmatprep.subr.mxu0 0.0
    %2418 = vmatpush2.msra.mxu0 0.0
    %2419 = vmatprep.subr.mxu0 0.0
    %2420 = vmatpush2.msra.mxu0 0.0
    %2421 = vmatprep.subr.mxu0 0.0
    %2422 = vmatpush2.msra.mxu0 0.0
    %2423 = vmatprep.subr.mxu0 0.0
    %2424 = vmatpush2.msra.mxu0 0.0
    %2425 = vmatprep.subr.mxu0 0.0
    %2426 = vmatpush2.msra.mxu0 0.0
    %2427 = vmatprep.subr.mxu0 0.0
    %2428 = vmatpush2.msra.mxu0 0.0
    %2429 = vmatprep.subr.mxu0 0.0
    %2430 = vmatpush2.msra.mxu0 0.0
    %2431 = vmatprep.subr.mxu0 0.0
    %2432 = vmatpush2.msra.mxu0 0.0
    %2433 = vmatprep.subr.mxu0 0.0
    %2434 = vmatpush2.msra.mxu0 0.0
    %2435 = vmatprep.subr.mxu0 0.0
    %2436 = vmatpush2.msra.mxu0 0.0
    %2437 = vmatprep.mubr.f32.mxu0 0.0
    %2438 = vmatmul.mubr.f32.gmra.mxu0 %v2368
    %v2439 = vpop.f32.mrf.mxu0
    %v2440 = vadd.f32 %v2226, %v2439
    %v2441 = vpop.f32.mrf.mxu0
    %2442 = vdwg.mxu0
    %s2443 = scalar_lea.vmem [#allocation10], 24
    %2444 = vst [vmem:[%s2443] sm:$0xff] %v2440
    %2445 = vmatprep.subr.mxu0 0.0
    %2446 = vmatpush1.msra.mxu0 %v2140
    %2447 = vmatprep.subr.mxu0 0.0
    %2448 = vmatpush1.msra.mxu0 %v2135
    %2449 = vmatprep.subr.mxu0 0.0
    %2450 = vmatpush1.msra.mxu0 %v2130
    %2451 = vmatprep.subr.mxu0 0.0
    %2452 = vmatpush1.msra.mxu0 %v2125
    %2453 = vmatprep.subr.mxu0 0.0
    %2454 = vmatpush1.msra.mxu0 %v2120
    %2455 = vmatprep.subr.mxu0 0.0
    %2456 = vmatpush1.msra.mxu0 %v2115
    %2457 = vmatprep.subr.mxu0 0.0
    %2458 = vmatpush1.msra.mxu0 %v2110
    %2459 = vmatprep.subr.mxu0 0.0
    %2460 = vmatpush1.msra.mxu0 %v2105
    %2461 = vmatprep.subr.mxu0 0.0
    %2462 = vmatpush1.msra.mxu0 %v2100
    %2463 = vmatprep.subr.mxu0 0.0
    %2464 = vmatpush1.msra.mxu0 %v2095
    %2465 = vmatprep.subr.mxu0 0.0
    %2466 = vmatpush1.msra.mxu0 %v2090
    %2467 = vmatprep.subr.mxu0 0.0
    %2468 = vmatpush1.msra.mxu0 %v2085
    %2469 = vmatprep.subr.mxu0 0.0
    %2470 = vmatpush1.msra.mxu0 %v2080
    %2471 = vmatprep.subr.mxu0 0.0
    %2472 = vmatpush1.msra.mxu0 %v2075
    %2473 = vmatprep.subr.mxu0 0.0
    %2474 = vmatpush1.msra.mxu0 %v2070
    %2475 = vmatprep.subr.mxu0 0.0
    %2476 = vmatpush1.msra.mxu0 %v2065
    %2477 = vmatprep.subr.mxu0 0.0
    %2478 = vmatpush2.msra.mxu0 0.0
    %2479 = vmatprep.subr.mxu0 0.0
    %2480 = vmatpush2.msra.mxu0 0.0
    %2481 = vmatprep.subr.mxu0 0.0
    %2482 = vmatpush2.msra.mxu0 0.0
    %2483 = vmatprep.subr.mxu0 0.0
    %2484 = vmatpush2.msra.mxu0 0.0
    %2485 = vmatprep.subr.mxu0 0.0
    %2486 = vmatpush2.msra.mxu0 0.0
    %2487 = vmatprep.subr.mxu0 0.0
    %2488 = vmatpush2.msra.mxu0 0.0
    %2489 = vmatprep.subr.mxu0 0.0
    %2490 = vmatpush2.msra.mxu0 0.0
    %2491 = vmatprep.subr.mxu0 0.0
    %2492 = vmatpush2.msra.mxu0 0.0
    %2493 = vmatprep.subr.mxu0 0.0
    %2494 = vmatpush2.msra.mxu0 0.0
    %2495 = vmatprep.subr.mxu0 0.0
    %2496 = vmatpush2.msra.mxu0 0.0
    %2497 = vmatprep.subr.mxu0 0.0
    %2498 = vmatpush2.msra.mxu0 0.0
    %2499 = vmatprep.subr.mxu0 0.0
    %2500 = vmatpush2.msra.mxu0 0.0
    %2501 = vmatprep.subr.mxu0 0.0
    %2502 = vmatpush2.msra.mxu0 0.0
    %2503 = vmatprep.subr.mxu0 0.0
    %2504 = vmatpush2.msra.mxu0 0.0
    %2505 = vmatprep.subr.mxu0 0.0
    %2506 = vmatpush2.msra.mxu0 0.0
    %2507 = vmatprep.subr.mxu0 0.0
    %2508 = vmatpush2.msra.mxu0 0.0
    %2509 = vmatprep.mubr.f32.mxu0 0.0
    %2510 = vmatmul.mubr.f32.gmra.mxu0 %v2440
    %v2511 = vpop.f32.mrf.mxu0
    %v2512 = vadd.f32 %v2226, %v2511
    %v2513 = vpop.f32.mrf.mxu0
    %2514 = vdwg.mxu0
    %s2515 = scalar_lea.vmem [#allocation10], 32
    %2516 = vst [vmem:[%s2515] sm:$0xff] %v2512
    %2517 = vmatprep.subr.mxu0 0.0
    %2518 = vmatpush1.msra.mxu0 %v2140
    %2519 = vmatprep.subr.mxu0 0.0
    %2520 = vmatpush1.msra.mxu0 %v2135
    %2521 = vmatprep.subr.mxu0 0.0
    %2522 = vmatpush1.msra.mxu0 %v2130
    %2523 = vmatprep.subr.mxu0 0.0
    %2524 = vmatpush1.msra.mxu0 %v2125
    %2525 = vmatprep.subr.mxu0 0.0
    %2526 = vmatpush1.msra.mxu0 %v2120
    %2527 = vmatprep.subr.mxu0 0.0
    %2528 = vmatpush1.msra.mxu0 %v2115
    %2529 = vmatprep.subr.mxu0 0.0
    %2530 = vmatpush1.msra.mxu0 %v2110
    %2531 = vmatprep.subr.mxu0 0.0
    %2532 = vmatpush1.msra.mxu0 %v2105
    %2533 = vmatprep.subr.mxu0 0.0
    %2534 = vmatpush1.msra.mxu0 %v2100
    %2535 = vmatprep.subr.mxu0 0.0
    %2536 = vmatpush1.msra.mxu0 %v2095
    %2537 = vmatprep.subr.mxu0 0.0
    %2538 = vmatpush1.msra.mxu0 %v2090
    %2539 = vmatprep.subr.mxu0 0.0
    %2540 = vmatpush1.msra.mxu0 %v2085
    %2541 = vmatprep.subr.mxu0 0.0
    %2542 = vmatpush1.msra.mxu0 %v2080
    %2543 = vmatprep.subr.mxu0 0.0
    %2544 = vmatpush1.msra.mxu0 %v2075
    %2545 = vmatprep.subr.mxu0 0.0
    %2546 = vmatpush1.msra.mxu0 %v2070
    %2547 = vmatprep.subr.mxu0 0.0
    %2548 = vmatpush1.msra.mxu0 %v2065
    %2549 = vmatprep.subr.mxu0 0.0
    %2550 = vmatpush2.msra.mxu0 0.0
    %2551 = vmatprep.subr.mxu0 0.0
    %2552 = vmatpush2.msra.mxu0 0.0
    %2553 = vmatprep.subr.mxu0 0.0
    %2554 = vmatpush2.msra.mxu0 0.0
    %2555 = vmatprep.subr.mxu0 0.0
    %2556 = vmatpush2.msra.mxu0 0.0
    %2557 = vmatprep.subr.mxu0 0.0
    %2558 = vmatpush2.msra.mxu0 0.0
    %2559 = vmatprep.subr.mxu0 0.0
    %2560 = vmatpush2.msra.mxu0 0.0
    %2561 = vmatprep.subr.mxu0 0.0
    %2562 = vmatpush2.msra.mxu0 0.0
    %2563 = vmatprep.subr.mxu0 0.0
    %2564 = vmatpush2.msra.mxu0 0.0
    %2565 = vmatprep.subr.mxu0 0.0
    %2566 = vmatpush2.msra.mxu0 0.0
    %2567 = vmatprep.subr.mxu0 0.0
    %2568 = vmatpush2.msra.mxu0 0.0
    %2569 = vmatprep.subr.mxu0 0.0
    %2570 = vmatpush2.msra.mxu0 0.0
    %2571 = vmatprep.subr.mxu0 0.0
    %2572 = vmatpush2.msra.mxu0 0.0
    %2573 = vmatprep.subr.mxu0 0.0
    %2574 = vmatpush2.msra.mxu0 0.0
    %2575 = vmatprep.subr.mxu0 0.0
    %2576 = vmatpush2.msra.mxu0 0.0
    %2577 = vmatprep.subr.mxu0 0.0
    %2578 = vmatpush2.msra.mxu0 0.0
    %2579 = vmatprep.subr.mxu0 0.0
    %2580 = vmatpush2.msra.mxu0 0.0
    %2581 = vmatprep.mubr.f32.mxu0 0.0
    %2582 = vmatmul.mubr.f32.gmra.mxu0 %v2512
    %v2583 = vpop.f32.mrf.mxu0
    %v2584 = vadd.f32 %v2226, %v2583
    %v2585 = vpop.f32.mrf.mxu0
    %2586 = vdwg.mxu0
    %s2587 = scalar_lea.vmem [#allocation10], 40
    %2588 = vst [vmem:[%s2587] sm:$0xff] %v2584
    %2589 = vmatprep.subr.mxu0 0.0
    %2590 = vmatpush1.msra.mxu0 %v2140
    %2591 = vmatprep.subr.mxu0 0.0
    %2592 = vmatpush1.msra.mxu0 %v2135
    %2593 = vmatprep.subr.mxu0 0.0
    %2594 = vmatpush1.msra.mxu0 %v2130
    %2595 = vmatprep.subr.mxu0 0.0
    %2596 = vmatpush1.msra.mxu0 %v2125
    %2597 = vmatprep.subr.mxu0 0.0
    %2598 = vmatpush1.msra.mxu0 %v2120
    %2599 = vmatprep.subr.mxu0 0.0
    %2600 = vmatpush1.msra.mxu0 %v2115
    %2601 = vmatprep.subr.mxu0 0.0
    %2602 = vmatpush1.msra.mxu0 %v2110
    %2603 = vmatprep.subr.mxu0 0.0
    %2604 = vmatpush1.msra.mxu0 %v2105
    %2605 = vmatprep.subr.mxu0 0.0
    %2606 = vmatpush1.msra.mxu0 %v2100
    %2607 = vmatprep.subr.mxu0 0.0
    %2608 = vmatpush1.msra.mxu0 %v2095
    %2609 = vmatprep.subr.mxu0 0.0
    %2610 = vmatpush1.msra.mxu0 %v2090
    %2611 = vmatprep.subr.mxu0 0.0
    %2612 = vmatpush1.msra.mxu0 %v2085
    %2613 = vmatprep.subr.mxu0 0.0
    %2614 = vmatpush1.msra.mxu0 %v2080
    %2615 = vmatprep.subr.mxu0 0.0
    %2616 = vmatpush1.msra.mxu0 %v2075
    %2617 = vmatprep.subr.mxu0 0.0
    %2618 = vmatpush1.msra.mxu0 %v2070
    %2619 = vmatprep.subr.mxu0 0.0
    %2620 = vmatpush1.msra.mxu0 %v2065
    %2621 = vmatprep.subr.mxu0 0.0
    %2622 = vmatpush2.msra.mxu0 0.0
    %2623 = vmatprep.subr.mxu0 0.0
    %2624 = vmatpush2.msra.mxu0 0.0
    %2625 = vmatprep.subr.mxu0 0.0
    %2626 = vmatpush2.msra.mxu0 0.0
    %2627 = vmatprep.subr.mxu0 0.0
    %2628 = vmatpush2.msra.mxu0 0.0
    %2629 = vmatprep.subr.mxu0 0.0
    %2630 = vmatpush2.msra.mxu0 0.0
    %2631 = vmatprep.subr.mxu0 0.0
    %2632 = vmatpush2.msra.mxu0 0.0
    %2633 = vmatprep.subr.mxu0 0.0
    %2634 = vmatpush2.msra.mxu0 0.0
    %2635 = vmatprep.subr.mxu0 0.0
    %2636 = vmatpush2.msra.mxu0 0.0
    %2637 = vmatprep.subr.mxu0 0.0
    %2638 = vmatpush2.msra.mxu0 0.0
    %2639 = vmatprep.subr.mxu0 0.0
    %2640 = vmatpush2.msra.mxu0 0.0
    %2641 = vmatprep.subr.mxu0 0.0
    %2642 = vmatpush2.msra.mxu0 0.0
    %2643 = vmatprep.subr.mxu0 0.0
    %2644 = vmatpush2.msra.mxu0 0.0
    %2645 = vmatprep.subr.mxu0 0.0
    %2646 = vmatpush2.msra.mxu0 0.0
    %2647 = vmatprep.subr.mxu0 0.0
    %2648 = vmatpush2.msra.mxu0 0.0
    %2649 = vmatprep.subr.mxu0 0.0
    %2650 = vmatpush2.msra.mxu0 0.0
    %2651 = vmatprep.subr.mxu0 0.0
    %2652 = vmatpush2.msra.mxu0 0.0
    %2653 = vmatprep.mubr.f32.mxu0 0.0
    %2654 = vmatmul.mubr.f32.gmra.mxu0 %v2584
    %v2655 = vpop.f32.mrf.mxu0
    %v2656 = vadd.f32 %v2226, %v2655
    %v2657 = vpop.f32.mrf.mxu0
    %2658 = vdwg.mxu0
    %s2659 = scalar_lea.vmem [#allocation10], 48
    %2660 = vst [vmem:[%s2659] sm:$0xff] %v2656
    %2661 = vmatprep.subr.mxu0 0.0
    %2662 = vmatpush1.msra.mxu0 %v2140
    %2663 = vmatprep.subr.mxu0 0.0
    %2664 = vmatpush1.msra.mxu0 %v2135
    %2665 = vmatprep.subr.mxu0 0.0
    %2666 = vmatpush1.msra.mxu0 %v2130
    %2667 = vmatprep.subr.mxu0 0.0
    %2668 = vmatpush1.msra.mxu0 %v2125
    %2669 = vmatprep.subr.mxu0 0.0
    %2670 = vmatpush1.msra.mxu0 %v2120
    %2671 = vmatprep.subr.mxu0 0.0
    %2672 = vmatpush1.msra.mxu0 %v2115
    %2673 = vmatprep.subr.mxu0 0.0
    %2674 = vmatpush1.msra.mxu0 %v2110
    %2675 = vmatprep.subr.mxu0 0.0
    %2676 = vmatpush1.msra.mxu0 %v2105
    %2677 = vmatprep.subr.mxu0 0.0
    %2678 = vmatpush1.msra.mxu0 %v2100
    %2679 = vmatprep.subr.mxu0 0.0
    %2680 = vmatpush1.msra.mxu0 %v2095
    %2681 = vmatprep.subr.mxu0 0.0
    %2682 = vmatpush1.msra.mxu0 %v2090
    %2683 = vmatprep.subr.mxu0 0.0
    %2684 = vmatpush1.msra.mxu0 %v2085
    %2685 = vmatprep.subr.mxu0 0.0
    %2686 = vmatpush1.msra.mxu0 %v2080
    %2687 = vmatprep.subr.mxu0 0.0
    %2688 = vmatpush1.msra.mxu0 %v2075
    %2689 = vmatprep.subr.mxu0 0.0
    %2690 = vmatpush1.msra.mxu0 %v2070
    %2691 = vmatprep.subr.mxu0 0.0
    %2692 = vmatpush1.msra.mxu0 %v2065
    %2693 = vmatprep.subr.mxu0 0.0
    %2694 = vmatpush2.msra.mxu0 0.0
    %2695 = vmatprep.subr.mxu0 0.0
    %2696 = vmatpush2.msra.mxu0 0.0
    %2697 = vmatprep.subr.mxu0 0.0
    %2698 = vmatpush2.msra.mxu0 0.0
    %2699 = vmatprep.subr.mxu0 0.0
    %2700 = vmatpush2.msra.mxu0 0.0
    %2701 = vmatprep.subr.mxu0 0.0
    %2702 = vmatpush2.msra.mxu0 0.0
    %2703 = vmatprep.subr.mxu0 0.0
    %2704 = vmatpush2.msra.mxu0 0.0
    %2705 = vmatprep.subr.mxu0 0.0
    %2706 = vmatpush2.msra.mxu0 0.0
    %2707 = vmatprep.subr.mxu0 0.0
    %2708 = vmatpush2.msra.mxu0 0.0
    %2709 = vmatprep.subr.mxu0 0.0
    %2710 = vmatpush2.msra.mxu0 0.0
    %2711 = vmatprep.subr.mxu0 0.0
    %2712 = vmatpush2.msra.mxu0 0.0
    %2713 = vmatprep.subr.mxu0 0.0
    %2714 = vmatpush2.msra.mxu0 0.0
    %2715 = vmatprep.subr.mxu0 0.0
    %2716 = vmatpush2.msra.mxu0 0.0
    %2717 = vmatprep.subr.mxu0 0.0
    %2718 = vmatpush2.msra.mxu0 0.0
    %2719 = vmatprep.subr.mxu0 0.0
    %2720 = vmatpush2.msra.mxu0 0.0
    %2721 = vmatprep.subr.mxu0 0.0
    %2722 = vmatpush2.msra.mxu0 0.0
    %2723 = vmatprep.subr.mxu0 0.0
    %2724 = vmatpush2.msra.mxu0 0.0
    %2725 = vmatprep.mubr.f32.mxu0 0.0
    %2726 = vmatmul.mubr.f32.gmra.mxu0 %v2656
    %v2727 = vpop.f32.mrf.mxu0
    %v2728 = vadd.f32 %v2226, %v2727
    %v2729 = vpop.f32.mrf.mxu0
    %2730 = vdwg.mxu0
    %s2731 = scalar_lea.vmem [#allocation10], 56
    %2732 = vst [vmem:[%s2731] sm:$0xff] %v2728
    // Predicated region
    $region34: #{tpu_custom_call.1} parent=1 // pred_check
      _
    $region35: #{tpu_custom_call.1} parent=1 // pred_check_branch
      %2734 = sbr.rel (0) target = $region37
    $region36: #{tpu_custom_call.1} parent=1 // pred_region
      %s2736 = ssub.s32 1024, 1024
      %2737 = vsyncadd [#allocation4], %s2736
      %s2738 = sshll.u32 [#allocation10], 4
      %s2739 = int_to_ptr.vmem [resolvable:$true] %s2738
      %2744 = dma.vmem_to_hbm [thread:$0]  %s2739, 1024, %s4, [#allocation4], 128, 128, 8
    $region37: #{tpu_custom_call.1} parent=1 // pred_fallthru
      _
    // Predicated region
    $region38: #{tpu_custom_call.1} parent=1 // pred_check
      _
    $region39: #{tpu_custom_call.1} parent=1 // pred_check_branch
      %2746 = sbr.rel (0) target = $region41
    $region40: #{tpu_custom_call.1} parent=1 // pred_region
      %2747 = dma.done [#allocation4], 1024
    $region41: #{tpu_custom_call.1} parent=1 // pred_fallthru
      _
    %2748 = vsyncpa [#allocation3], 1
    %2749 = vsyncpa [#allocation8], 1
    %2750 = vsyncpa [#allocation4], 1
    %2751 = vsyncpa [#allocation5], 1

</llo_original>
